<compile_context>
chip_gen: v7x
topology: tpu7x:2x2x1
jax: 0.10.0
libtpu: 0.0.40
codegen_flags: <defaults>
</compile_context>

<pallas_src>
import functools

import jax
import jax.numpy as jnp
from jax.experimental import pallas as pl
from jax.experimental.pallas import tpu as pltpu

BN_EPS = 1e-3  # ultralytics Conv() uses BatchNorm2d(eps=1e-3)


def _maxpool2d_same(cur, pad_ref, *, k, pad_w, w_valid, col_mask):
    """k x k max pool, stride 1, padding k//2 (-inf), on cur: (H, Wb, C).

    pad_ref: VMEM scratch (H + 2*(k//2), Wb + 2*pad_w, C) whose border strips
    are -inf; only the interior (valid columns) is overwritten here.
    """
    H, Wb, _ = cur.shape
    pad = k // 2
    # Interior store: major-dim offset `pad` (free) + sublane offset `pad_w`
    # (multiple of 8 -> aligned store).
    if w_valid == Wb:
        pad_ref[pad:pad + H, pad_w:pad_w + Wb, :] = cur
    else:
        pad_ref[pad:pad + H, pad_w:pad_w + w_valid, :] = cur[:, :w_valid, :]
    # W pass: max over k sublane-shifted window loads from the padded scratch.
    base = pad_w - pad
    pw = pad_ref[:, base:base + Wb, :]
    for d in range(1, k):
        pw = jnp.maximum(pw, pad_ref[:, base + d:base + d + Wb, :])
    # H pass: max over k major-dim slices of the (H + 2*pad, Wb, C) value.
    out = pw[0:H]
    for d in range(1, k):
        out = jnp.maximum(out, pw[d:d + H])
    if col_mask is not None:
        # Keep -inf (from the padded columns) out of the downstream matmul.
        out = jnp.where(col_mask, out, 0.0)
    return out


def _sppf_kernel(x_ref, w1_ref, s1_ref, b1_ref, w2_ref, s2_ref, b2_ref,
                 out_ref, pad_ref, *, k, pad_w, w_valid):
    H, Wb, c1 = x_ref.shape
    cm = w1_ref.shape[1]
    c2 = out_ref.shape[-1]
    Hp, Wp, _ = pad_ref.shape
    pad = k // 2
    HW = H * Wb
    f32 = jnp.float32
    bf16 = jnp.bfloat16

    # ---- border-only -inf init of the pooling scratch --------------------
    # (The interior is overwritten by every pool, so it is never filled.
    #  All strip stores below are sublane-aligned.)
    pad_ref[0:pad, :, :] = jnp.full((pad, Wp, cm), -jnp.inf, f32)
    pad_ref[pad + H:, :, :] = jnp.full((pad, Wp, cm), -jnp.inf, f32)
    pad_ref[:, 0:pad_w, :] = jnp.full((Hp, pad_w, cm), -jnp.inf, f32)
    r0 = pad_w + (w_valid // 8) * 8  # aligned start; any valid-data columns
    pad_ref[:, r0:, :] = jnp.full((Hp, Wp - r0, cm), -jnp.inf, f32)
    # (columns in [r0, pad_w + w_valid) are rewritten by the interior store
    #  before any window read, so touching them here is harmless.)

    col_mask = None
    if w_valid != Wb:
        col_mask = jax.lax.broadcasted_iota(jnp.int32, (1, Wb, 1), 1) < w_valid

    # ---- cv1: 1x1 conv (bf16 MXU matmul, f32 accum) + folded BN + SiLU ----
    x = x_ref[...].reshape(HW, c1).astype(bf16)
    t = jnp.dot(x, w1_ref[...], preferred_element_type=f32)
    t = t * s1_ref[...] + b1_ref[...]
    t = t * jax.nn.sigmoid(t)                                  # SiLU (f32)

    # ---- cv2 over cat([t, y1, y2, y3]): four partial matmuls interleaved
    #      with the pool chain (concat never materialized, low live VMEM) ----
    acc = jnp.dot(t.astype(bf16), w2_ref[0], preferred_element_type=f32)
    cur = t.reshape(H, Wb, cm)
    for i in range(1, 4):
        cur = _maxpool2d_same(cur, pad_ref, k=k, pad_w=pad_w,
                              w_valid=w_valid, col_mask=col_mask)
        acc = acc + jnp.dot(cur.reshape(HW, cm).astype(bf16), w2_ref[i],
                            preferred_element_type=f32)

    acc = acc * s2_ref[...] + b2_ref[...]
    acc = acc * jax.nn.sigmoid(acc)                            # SiLU
    out_ref[...] = acc.reshape(H, Wb, c2).astype(out_ref.dtype)


def sppf_forward_nhwc(x_nhwc, params, k=5):
    """SPPF forward on NHWC input: (N, H, W, c1) float32 -> (N, H, W, c2)."""
    N, H, W, c1 = x_nhwc.shape
    w1, s1, b1 = params["w1"], params["s1"], params["b1"]   # (c1,c_), (1,c_), (1,c_)
    w2, s2, b2 = params["w2"], params["s2"], params["b2"]   # (4,c_,c2), (1,c2), (1,c2)
    cm = w1.shape[1]
    c2 = w2.shape[2]

    pad = k // 2
    pad_w = max(8, -(-pad // 8) * 8)    # sublane-aligned scratch padding >= pad

    # Pad W to a multiple of 8 so in-kernel (H,W,C)<->(H*W,C) reshapes are
    # layout-preserving (no relayout copies).  Padded columns stay -inf in the
    # pooling scratch and are masked before the cv2 matmuls.
    Wb = -(-W // 8) * 8
    if Wb != W:
        x_nhwc = jnp.pad(x_nhwc, ((0, 0), (0, 0), (0, Wb - W), (0, 0)))

    # Weights in bf16 (native MXU rate); BN scale/bias stay f32.
    w1b = w1.astype(jnp.bfloat16)
    w2b = w2.astype(jnp.bfloat16)

    out = pl.pallas_call(
        functools.partial(_sppf_kernel, k=k, pad_w=pad_w, w_valid=W),
        out_shape=jax.ShapeDtypeStruct((N, H, Wb, c2), x_nhwc.dtype),
        grid_spec=pltpu.PrefetchScalarGridSpec(
            num_scalar_prefetch=0,
            grid=(N,),
            in_specs=[
                pl.BlockSpec((None, H, Wb, c1), lambda n: (n, 0, 0, 0)),
                pl.BlockSpec((c1, cm), lambda n: (0, 0)),
                pl.BlockSpec((1, cm), lambda n: (0, 0)),
                pl.BlockSpec((1, cm), lambda n: (0, 0)),
                pl.BlockSpec((4, cm, c2), lambda n: (0, 0, 0)),
                pl.BlockSpec((1, c2), lambda n: (0, 0)),
                pl.BlockSpec((1, c2), lambda n: (0, 0)),
            ],
            out_specs=pl.BlockSpec((None, H, Wb, c2), lambda n: (n, 0, 0, 0)),
            scratch_shapes=[
                pltpu.VMEM((H + 2 * pad, Wb + 2 * pad_w, cm), jnp.float32),
            ],
        ),
        compiler_params=pltpu.CompilerParams(
            dimension_semantics=("parallel",),
            vmem_limit_bytes=32 * 1024 * 1024,
        ),
    )(x_nhwc, w1b, s1, b1, w2b, s2, b2)

    if Wb != W:
        out = out[:, :, :W, :]
    return out


def sppf_forward(x_nchw, params, k=5):
    """NCHW shim matching the PyTorch interface: (N, c1, H, W) -> (N, c2, H, W).

    NOTE: the two HBM transposes below exist only for NCHW parity; an
    NHWC-native model should call sppf_forward_nhwc directly (no transposes).
    """
    x_nhwc = jnp.transpose(x_nchw, (0, 2, 3, 1))
    out_nhwc = sppf_forward_nhwc(x_nhwc, params, k=k)
    return jnp.transpose(out_nhwc, (0, 3, 1, 2))


def fold_bn(conv_w_oihw, gamma, beta, mean, var, eps=BN_EPS):
    """Fold Conv2d(1x1, bias=False) + BatchNorm2d (eval) into matmul + affine."""
    w = jnp.transpose(conv_w_oihw[:, :, 0, 0])        # (Cin, Cout)
    scale = gamma / jnp.sqrt(var + eps)
    bias = beta - mean * scale
    return w, scale[None, :], bias[None, :]


def sppf_reference(x, w1_oihw, bn1, w2_oihw, bn2, k=5):
    """Pure-JAX NCHW reference matching the PyTorch SPPF forward (eval BN)."""
    def conv_bn_silu(v, w_oihw, bn):
        gamma, beta, mean, var = bn
        y = jnp.einsum("nchw,oc->nohw", v, w_oihw[:, :, 0, 0],
                       precision=jax.lax.Precision.HIGHEST)
        scale = gamma / jnp.sqrt(var + BN_EPS)
        bias = beta - mean * scale
        y = y * scale[None, :, None, None] + bias[None, :, None, None]
        return y * jax.nn.sigmoid(y)

    def maxpool(v):
        p = k // 2
        return jax.lax.reduce_window(
            v, -jnp.inf, jax.lax.max,
            window_dimensions=(1, 1, k, k),
            window_strides=(1, 1, 1, 1),
            padding=((0, 0), (0, 0), (p, p), (p, p)))

    t = conv_bn_silu(x, w1_oihw, bn1)
    y1 = maxpool(t)
    y2 = maxpool(y1)
    y3 = maxpool(y2)
    cat = jnp.concatenate([t, y1, y2, y3], axis=1)
    return conv_bn_silu(cat, w2_oihw, bn2)


if __name__ == "__main__":
    key = jax.random.PRNGKey(0)
    ks = jax.random.split(key, 11)

    N, c1, c2, H, W, k = 2, 16, 16, 16, 16, 5
    cm = c1 // 2

    x = jax.random.normal(ks[0], (N, c1, H, W), dtype=jnp.float32)

    # cv1 / cv2 parameters: Conv2d(1x1, bias=False) weights + BatchNorm2d
    # (eval-mode) affine params and running stats.
    w1_oihw = 0.2 * jax.random.normal(ks[1], (cm, c1, 1, 1), jnp.float32)
    g1 = 1.0 + 0.1 * jax.random.normal(ks[2], (cm,), jnp.float32)
    be1 = 0.1 * jax.random.normal(ks[3], (cm,), jnp.float32)
    mu1 = 0.1 * jax.random.normal(ks[4], (cm,), jnp.float32)
    va1 = 1.0 + 0.1 * jax.random.uniform(ks[5], (cm,), jnp.float32)

    w2_oihw = 0.2 * jax.random.normal(ks[6], (c2, 4 * cm, 1, 1), jnp.float32)
    g2 = 1.0 + 0.1 * jax.random.normal(ks[7], (c2,), jnp.float32)
    be2 = 0.1 * jax.random.normal(ks[8], (c2,), jnp.float32)
    mu2 = 0.1 * jax.random.normal(ks[9], (c2,), jnp.float32)
    va2 = 1.0 + 0.1 * jax.random.uniform(ks[10], (c2,), jnp.float32)

    w1, s1, b1 = fold_bn(w1_oihw, g1, be1, mu1, va1)
    w2_flat, s2, b2 = fold_bn(w2_oihw, g2, be2, mu2, va2)
    # Split cv2's 4*c_ input channels into 4 chunks -> concat fused in-kernel.
    w2 = w2_flat.reshape(4, cm, c2)

    params = dict(w1=w1, s1=s1, b1=b1, w2=w2, s2=s2, b2=b2)

    out = jax.block_until_ready(sppf_forward(x, params, k=k))
    ref = sppf_reference(x, w1_oihw, (g1, be1, mu1, va1),
                         w2_oihw, (g2, be2, mu2, va2), k=k)

    assert out.shape == (N, c2, H, W), out.shape
    # Tolerance is deliberately looser than f32: the kernel runs the MXU with
    # bf16 operands (f32 accumulation), while the reference uses f32 HIGHEST.
    err = float(jnp.max(jnp.abs(out - ref)))
    assert jnp.allclose(out, ref, atol=1e-1, rtol=5e-2), f"max abs err {err}"
    print("KERNEL_OK")
</pallas_src>

<mosaic_0001>
module attributes {stable_mosaic.version = 11 : i64} {
  func.func @_sppf_kernel(%arg0: i32, %arg1: memref<1x16x16x16xf32, #tpu.memory_space<vmem>>, %arg2: memref<16x8xbf16, #tpu.memory_space<vmem>>, %arg3: memref<1x8xf32, #tpu.memory_space<vmem>>, %arg4: memref<1x8xf32, #tpu.memory_space<vmem>>, %arg5: memref<4x8x16xbf16, #tpu.memory_space<vmem>>, %arg6: memref<1x16xf32, #tpu.memory_space<vmem>>, %arg7: memref<1x16xf32, #tpu.memory_space<vmem>>, %arg8: memref<1x16x16x16xf32, #tpu.memory_space<vmem>>, %arg9: memref<20x32x8xf32, #tpu.memory_space<vmem>>) attributes {dimension_semantics = [#tpu.dimension_semantics<parallel>], iteration_bounds = array<i64: 2>, scalar_prefetch = 0 : i64, scratch_operands = 1 : i64, tpu.core_type = #tpu.core_type<tc>, window_params = [{transform_indices = @transform_0, window_bounds = array<i64: 1, 16, 16, 16>}, {pipeline_mode = #tpu.pipeline_mode<synchronous>, transform_indices = @transform_1, window_bounds = array<i64: 16, 8>}, {pipeline_mode = #tpu.pipeline_mode<synchronous>, transform_indices = @transform_2, window_bounds = array<i64: 1, 8>}, {pipeline_mode = #tpu.pipeline_mode<synchronous>, transform_indices = @transform_3, window_bounds = array<i64: 1, 8>}, {pipeline_mode = #tpu.pipeline_mode<synchronous>, transform_indices = @transform_4, window_bounds = array<i64: 4, 8, 16>}, {pipeline_mode = #tpu.pipeline_mode<synchronous>, transform_indices = @transform_5, window_bounds = array<i64: 1, 16>}, {pipeline_mode = #tpu.pipeline_mode<synchronous>, transform_indices = @transform_6, window_bounds = array<i64: 1, 16>}, {transform_indices = @transform_7, window_bounds = array<i64: 1, 16, 16, 16>}]} {
    %cst = arith.constant 0xFF800000 : f32
    %0 = vector.broadcast %cst : f32 to vector<2x32x8xf32>
    %c0 = arith.constant 0 : index
    %c0_0 = arith.constant 0 : index
    %c0_1 = arith.constant 0 : index
    %1 = vector.load %arg9[%c0, %c0_0, %c0_1] : memref<20x32x8xf32, #tpu.memory_space<vmem>>, vector<2x32x8xf32>
    tpu.vector_store %arg9[%c0, %c0_0, %c0_1], %0 {strides = array<i32>} : memref<20x32x8xf32, #tpu.memory_space<vmem>>, vector<2x32x8xf32>,
    %cst_2 = arith.constant 0xFF800000 : f32
    %2 = vector.broadcast %cst_2 : f32 to vector<2x32x8xf32>
    %c18 = arith.constant 18 : index
    %c0_3 = arith.constant 0 : index
    %c0_4 = arith.constant 0 : index
    %3 = vector.load %arg9[%c18, %c0_3, %c0_4] : memref<20x32x8xf32, #tpu.memory_space<vmem>>, vector<2x32x8xf32>
    tpu.vector_store %arg9[%c18, %c0_3, %c0_4], %2 {strides = array<i32>} : memref<20x32x8xf32, #tpu.memory_space<vmem>>, vector<2x32x8xf32>,
    %cst_5 = arith.constant 0xFF800000 : f32
    %4 = vector.broadcast %cst_5 : f32 to vector<20x8x8xf32>
    %c0_6 = arith.constant 0 : index
    %c0_7 = arith.constant 0 : index
    %c0_8 = arith.constant 0 : index
    %5 = vector.load %arg9[%c0_6, %c0_7, %c0_8] : memref<20x32x8xf32, #tpu.memory_space<vmem>>, vector<20x8x8xf32>
    tpu.vector_store %arg9[%c0_6, %c0_7, %c0_8], %4 {strides = array<i32>} : memref<20x32x8xf32, #tpu.memory_space<vmem>>, vector<20x8x8xf32>,
    %cst_9 = arith.constant 0xFF800000 : f32
    %6 = vector.broadcast %cst_9 : f32 to vector<20x8x8xf32>
    %c0_10 = arith.constant 0 : index
    %c24 = arith.constant 24 : index
    %c0_11 = arith.constant 0 : index
    %7 = vector.load %arg9[%c0_10, %c24, %c0_11] : memref<20x32x8xf32, #tpu.memory_space<vmem>>, vector<20x8x8xf32>
    tpu.vector_store %arg9[%c0_10, %c24, %c0_11], %6 {strides = array<i32>} : memref<20x32x8xf32, #tpu.memory_space<vmem>>, vector<20x8x8xf32>,
    %c0_12 = arith.constant 0 : index
    %c0_13 = arith.constant 0 : index
    %c0_14 = arith.constant 0 : index
    %c0_15 = arith.constant 0 : index
    %8 = vector.load %arg1[%c0_12, %c0_13, %c0_14, %c0_15] : memref<1x16x16x16xf32, #tpu.memory_space<vmem>>, vector<1x16x16x16xf32>
    %9 = vector.shape_cast %8 : vector<1x16x16x16xf32> to vector<16x16x16xf32>
    %10 = vector.shape_cast %9 : vector<16x16x16xf32> to vector<256x16xf32>
    %11 = arith.truncf %10 : vector<256x16xf32> to vector<256x16xbf16>
    %c0_16 = arith.constant 0 : index
    %c0_17 = arith.constant 0 : index
    %12 = vector.load %arg2[%c0_16, %c0_17] : memref<16x8xbf16, #tpu.memory_space<vmem>>, vector<16x8xbf16>
    %cst_18 = arith.constant dense<0.000000e+00> : vector<256x8xf32>
    %13 = tpu.matmul %11, %12, %cst_18 {dimension_numbers = #tpu.dot_dimension_numbers<[1], [0], [0], [1], [0, 0, 1, 1], [], []>} : vector<256x16xbf16>, vector<16x8xbf16>, vector<256x8xf32> -> vector<256x8xf32>
    %c0_19 = arith.constant 0 : index
    %c0_20 = arith.constant 0 : index
    %14 = vector.load %arg3[%c0_19, %c0_20] : memref<1x8xf32, #tpu.memory_space<vmem>>, vector<1x8xf32>
    %15 = vector.broadcast %14 : vector<1x8xf32> to vector<256x8xf32>
    %16 = arith.mulf %13, %15 : vector<256x8xf32>
    %c0_21 = arith.constant 0 : index
    %c0_22 = arith.constant 0 : index
    %17 = vector.load %arg4[%c0_21, %c0_22] : memref<1x8xf32, #tpu.memory_space<vmem>>, vector<1x8xf32>
    %18 = vector.broadcast %17 : vector<1x8xf32> to vector<256x8xf32>
    %19 = arith.addf %16, %18 : vector<256x8xf32>
    %20 = arith.negf %19 : vector<256x8xf32>
    %21 = math.exp %20 : vector<256x8xf32>
    %cst_23 = arith.constant 1.000000e+00 : f32
    %22 = vector.broadcast %cst_23 : f32 to vector<256x8xf32>
    %23 = arith.addf %22, %21 : vector<256x8xf32>
    %24 = arith.divf %22, %23 : vector<256x8xf32>
    %25 = arith.mulf %19, %24 : vector<256x8xf32>
    %26 = arith.truncf %25 : vector<256x8xf32> to vector<256x8xbf16>
    %c0_24 = arith.constant 0 : index
    %c0_25 = arith.constant 0 : index
    %c0_26 = arith.constant 0 : index
    %27 = vector.load %arg5[%c0_24, %c0_25, %c0_26] : memref<4x8x16xbf16, #tpu.memory_space<vmem>>, vector<1x8x16xbf16>
    %28 = vector.shape_cast %27 : vector<1x8x16xbf16> to vector<8x16xbf16>
    %cst_27 = arith.constant dense<0.000000e+00> : vector<256x16xf32>
    %29 = tpu.matmul %26, %28, %cst_27 {dimension_numbers = #tpu.dot_dimension_numbers<[1], [0], [0], [1], [0, 0, 1, 1], [], []>} : vector<256x8xbf16>, vector<8x16xbf16>, vector<256x16xf32> -> vector<256x16xf32>
    %30 = vector.shape_cast %25 : vector<256x8xf32> to vector<16x16x8xf32>
    %c2 = arith.constant 2 : index
    %c8 = arith.constant 8 : index
    %c0_28 = arith.constant 0 : index
    %31 = vector.load %arg9[%c2, %c8, %c0_28] : memref<20x32x8xf32, #tpu.memory_space<vmem>>, vector<16x16x8xf32>
    tpu.vector_store %arg9[%c2, %c8, %c0_28], %30 {strides = array<i32>} : memref<20x32x8xf32, #tpu.memory_space<vmem>>, vector<16x16x8xf32>,
    %c0_29 = arith.constant 0 : index
    %c6 = arith.constant 6 : index
    %c0_30 = arith.constant 0 : index
    %32 = vector.load %arg9[%c0_29, %c6, %c0_30] : memref<20x32x8xf32, #tpu.memory_space<vmem>>, vector<20x16x8xf32>
    %c0_31 = arith.constant 0 : index
    %c7 = arith.constant 7 : index
    %c0_32 = arith.constant 0 : index
    %33 = vector.load %arg9[%c0_31, %c7, %c0_32] : memref<20x32x8xf32, #tpu.memory_space<vmem>>, vector<20x16x8xf32>
    %34 = arith.maximumf %32, %33 : vector<20x16x8xf32>
    %c0_33 = arith.constant 0 : index
    %c8_34 = arith.constant 8 : index
    %c0_35 = arith.constant 0 : index
    %35 = vector.load %arg9[%c0_33, %c8_34, %c0_35] : memref<20x32x8xf32, #tpu.memory_space<vmem>>, vector<20x16x8xf32>
    %36 = arith.maximumf %34, %35 : vector<20x16x8xf32>
    %c0_36 = arith.constant 0 : index
    %c9 = arith.constant 9 : index
    %c0_37 = arith.constant 0 : index
    %37 = vector.load %arg9[%c0_36, %c9, %c0_37] : memref<20x32x8xf32, #tpu.memory_space<vmem>>, vector<20x16x8xf32>
    %38 = arith.maximumf %36, %37 : vector<20x16x8xf32>
    %c0_38 = arith.constant 0 : index
    %c10 = arith.constant 10 : index
    %c0_39 = arith.constant 0 : index
    %39 = vector.load %arg9[%c0_38, %c10, %c0_39] : memref<20x32x8xf32, #tpu.memory_space<vmem>>, vector<20x16x8xf32>
    %40 = arith.maximumf %38, %39 : vector<20x16x8xf32>
    %41 = vector.extract_strided_slice %40 {offsets = [0, 0, 0], sizes = [16, 16, 8], strides = [1, 1, 1]} : vector<20x16x8xf32> to vector<16x16x8xf32>
    %42 = vector.extract_strided_slice %40 {offsets = [1, 0, 0], sizes = [16, 16, 8], strides = [1, 1, 1]} : vector<20x16x8xf32> to vector<16x16x8xf32>
    %43 = arith.maximumf %41, %42 : vector<16x16x8xf32>
    %44 = vector.extract_strided_slice %40 {offsets = [2, 0, 0], sizes = [16, 16, 8], strides = [1, 1, 1]} : vector<20x16x8xf32> to vector<16x16x8xf32>
    %45 = arith.maximumf %43, %44 : vector<16x16x8xf32>
    %46 = vector.extract_strided_slice %40 {offsets = [3, 0, 0], sizes = [16, 16, 8], strides = [1, 1, 1]} : vector<20x16x8xf32> to vector<16x16x8xf32>
    %47 = arith.maximumf %45, %46 : vector<16x16x8xf32>
    %48 = vector.extract_strided_slice %40 {offsets = [4, 0, 0], sizes = [16, 16, 8], strides = [1, 1, 1]} : vector<20x16x8xf32> to vector<16x16x8xf32>
    %49 = arith.maximumf %47, %48 : vector<16x16x8xf32>
    %50 = vector.shape_cast %49 : vector<16x16x8xf32> to vector<256x8xf32>
    %51 = arith.truncf %50 : vector<256x8xf32> to vector<256x8xbf16>
    %c1 = arith.constant 1 : index
    %c0_40 = arith.constant 0 : index
    %c0_41 = arith.constant 0 : index
    %52 = vector.load %arg5[%c1, %c0_40, %c0_41] : memref<4x8x16xbf16, #tpu.memory_space<vmem>>, vector<1x8x16xbf16>
    %53 = vector.shape_cast %52 : vector<1x8x16xbf16> to vector<8x16xbf16>
    %cst_42 = arith.constant dense<0.000000e+00> : vector<256x16xf32>
    %54 = tpu.matmul %51, %53, %cst_42 {dimension_numbers = #tpu.dot_dimension_numbers<[1], [0], [0], [1], [0, 0, 1, 1], [], []>} : vector<256x8xbf16>, vector<8x16xbf16>, vector<256x16xf32> -> vector<256x16xf32>
    %55 = arith.addf %29, %54 : vector<256x16xf32>
    %c2_43 = arith.constant 2 : index
    %c8_44 = arith.constant 8 : index
    %c0_45 = arith.constant 0 : index
    %56 = vector.load %arg9[%c2_43, %c8_44, %c0_45] : memref<20x32x8xf32, #tpu.memory_space<vmem>>, vector<16x16x8xf32>
    tpu.vector_store %arg9[%c2_43, %c8_44, %c0_45], %49 {strides = array<i32>} : memref<20x32x8xf32, #tpu.memory_space<vmem>>, vector<16x16x8xf32>,
    %c0_46 = arith.constant 0 : index
    %c6_47 = arith.constant 6 : index
    %c0_48 = arith.constant 0 : index
    %57 = vector.load %arg9[%c0_46, %c6_47, %c0_48] : memref<20x32x8xf32, #tpu.memory_space<vmem>>, vector<20x16x8xf32>
    %c0_49 = arith.constant 0 : index
    %c7_50 = arith.constant 7 : index
    %c0_51 = arith.constant 0 : index
    %58 = vector.load %arg9[%c0_49, %c7_50, %c0_51] : memref<20x32x8xf32, #tpu.memory_space<vmem>>, vector<20x16x8xf32>
    %59 = arith.maximumf %57, %58 : vector<20x16x8xf32>
    %c0_52 = arith.constant 0 : index
    %c8_53 = arith.constant 8 : index
    %c0_54 = arith.constant 0 : index
    %60 = vector.load %arg9[%c0_52, %c8_53, %c0_54] : memref<20x32x8xf32, #tpu.memory_space<vmem>>, vector<20x16x8xf32>
    %61 = arith.maximumf %59, %60 : vector<20x16x8xf32>
    %c0_55 = arith.constant 0 : index
    %c9_56 = arith.constant 9 : index
    %c0_57 = arith.constant 0 : index
    %62 = vector.load %arg9[%c0_55, %c9_56, %c0_57] : memref<20x32x8xf32, #tpu.memory_space<vmem>>, vector<20x16x8xf32>
    %63 = arith.maximumf %61, %62 : vector<20x16x8xf32>
    %c0_58 = arith.constant 0 : index
    %c10_59 = arith.constant 10 : index
    %c0_60 = arith.constant 0 : index
    %64 = vector.load %arg9[%c0_58, %c10_59, %c0_60] : memref<20x32x8xf32, #tpu.memory_space<vmem>>, vector<20x16x8xf32>
    %65 = arith.maximumf %63, %64 : vector<20x16x8xf32>
    %66 = vector.extract_strided_slice %65 {offsets = [0, 0, 0], sizes = [16, 16, 8], strides = [1, 1, 1]} : vector<20x16x8xf32> to vector<16x16x8xf32>
    %67 = vector.extract_strided_slice %65 {offsets = [1, 0, 0], sizes = [16, 16, 8], strides = [1, 1, 1]} : vector<20x16x8xf32> to vector<16x16x8xf32>
    %68 = arith.maximumf %66, %67 : vector<16x16x8xf32>
    %69 = vector.extract_strided_slice %65 {offsets = [2, 0, 0], sizes = [16, 16, 8], strides = [1, 1, 1]} : vector<20x16x8xf32> to vector<16x16x8xf32>
    %70 = arith.maximumf %68, %69 : vector<16x16x8xf32>
    %71 = vector.extract_strided_slice %65 {offsets = [3, 0, 0], sizes = [16, 16, 8], strides = [1, 1, 1]} : vector<20x16x8xf32> to vector<16x16x8xf32>
    %72 = arith.maximumf %70, %71 : vector<16x16x8xf32>
    %73 = vector.extract_strided_slice %65 {offsets = [4, 0, 0], sizes = [16, 16, 8], strides = [1, 1, 1]} : vector<20x16x8xf32> to vector<16x16x8xf32>
    %74 = arith.maximumf %72, %73 : vector<16x16x8xf32>
    %75 = vector.shape_cast %74 : vector<16x16x8xf32> to vector<256x8xf32>
    %76 = arith.truncf %75 : vector<256x8xf32> to vector<256x8xbf16>
    %c2_61 = arith.constant 2 : index
    %c0_62 = arith.constant 0 : index
    %c0_63 = arith.constant 0 : index
    %77 = vector.load %arg5[%c2_61, %c0_62, %c0_63] : memref<4x8x16xbf16, #tpu.memory_space<vmem>>, vector<1x8x16xbf16>
    %78 = vector.shape_cast %77 : vector<1x8x16xbf16> to vector<8x16xbf16>
    %cst_64 = arith.constant dense<0.000000e+00> : vector<256x16xf32>
    %79 = tpu.matmul %76, %78, %cst_64 {dimension_numbers = #tpu.dot_dimension_numbers<[1], [0], [0], [1], [0, 0, 1, 1], [], []>} : vector<256x8xbf16>, vector<8x16xbf16>, vector<256x16xf32> -> vector<256x16xf32>
    %80 = arith.addf %55, %79 : vector<256x16xf32>
    %c2_65 = arith.constant 2 : index
    %c8_66 = arith.constant 8 : index
    %c0_67 = arith.constant 0 : index
    %81 = vector.load %arg9[%c2_65, %c8_66, %c0_67] : memref<20x32x8xf32, #tpu.memory_space<vmem>>, vector<16x16x8xf32>
    tpu.vector_store %arg9[%c2_65, %c8_66, %c0_67], %74 {strides = array<i32>} : memref<20x32x8xf32, #tpu.memory_space<vmem>>, vector<16x16x8xf32>,
    %c0_68 = arith.constant 0 : index
    %c6_69 = arith.constant 6 : index
    %c0_70 = arith.constant 0 : index
    %82 = vector.load %arg9[%c0_68, %c6_69, %c0_70] : memref<20x32x8xf32, #tpu.memory_space<vmem>>, vector<20x16x8xf32>
    %c0_71 = arith.constant 0 : index
    %c7_72 = arith.constant 7 : index
    %c0_73 = arith.constant 0 : index
    %83 = vector.load %arg9[%c0_71, %c7_72, %c0_73] : memref<20x32x8xf32, #tpu.memory_space<vmem>>, vector<20x16x8xf32>
    %84 = arith.maximumf %82, %83 : vector<20x16x8xf32>
    %c0_74 = arith.constant 0 : index
    %c8_75 = arith.constant 8 : index
    %c0_76 = arith.constant 0 : index
    %85 = vector.load %arg9[%c0_74, %c8_75, %c0_76] : memref<20x32x8xf32, #tpu.memory_space<vmem>>, vector<20x16x8xf32>
    %86 = arith.maximumf %84, %85 : vector<20x16x8xf32>
    %c0_77 = arith.constant 0 : index
    %c9_78 = arith.constant 9 : index
    %c0_79 = arith.constant 0 : index
    %87 = vector.load %arg9[%c0_77, %c9_78, %c0_79] : memref<20x32x8xf32, #tpu.memory_space<vmem>>, vector<20x16x8xf32>
    %88 = arith.maximumf %86, %87 : vector<20x16x8xf32>
    %c0_80 = arith.constant 0 : index
    %c10_81 = arith.constant 10 : index
    %c0_82 = arith.constant 0 : index
    %89 = vector.load %arg9[%c0_80, %c10_81, %c0_82] : memref<20x32x8xf32, #tpu.memory_space<vmem>>, vector<20x16x8xf32>
    %90 = arith.maximumf %88, %89 : vector<20x16x8xf32>
    %91 = vector.extract_strided_slice %90 {offsets = [0, 0, 0], sizes = [16, 16, 8], strides = [1, 1, 1]} : vector<20x16x8xf32> to vector<16x16x8xf32>
    %92 = vector.extract_strided_slice %90 {offsets = [1, 0, 0], sizes = [16, 16, 8], strides = [1, 1, 1]} : vector<20x16x8xf32> to vector<16x16x8xf32>
    %93 = arith.maximumf %91, %92 : vector<16x16x8xf32>
    %94 = vector.extract_strided_slice %90 {offsets = [2, 0, 0], sizes = [16, 16, 8], strides = [1, 1, 1]} : vector<20x16x8xf32> to vector<16x16x8xf32>
    %95 = arith.maximumf %93, %94 : vector<16x16x8xf32>
    %96 = vector.extract_strided_slice %90 {offsets = [3, 0, 0], sizes = [16, 16, 8], strides = [1, 1, 1]} : vector<20x16x8xf32> to vector<16x16x8xf32>
    %97 = arith.maximumf %95, %96 : vector<16x16x8xf32>
    %98 = vector.extract_strided_slice %90 {offsets = [4, 0, 0], sizes = [16, 16, 8], strides = [1, 1, 1]} : vector<20x16x8xf32> to vector<16x16x8xf32>
    %99 = arith.maximumf %97, %98 : vector<16x16x8xf32>
    %100 = vector.shape_cast %99 : vector<16x16x8xf32> to vector<256x8xf32>
    %101 = arith.truncf %100 : vector<256x8xf32> to vector<256x8xbf16>
    %c3 = arith.constant 3 : index
    %c0_83 = arith.constant 0 : index
    %c0_84 = arith.constant 0 : index
    %102 = vector.load %arg5[%c3, %c0_83, %c0_84] : memref<4x8x16xbf16, #tpu.memory_space<vmem>>, vector<1x8x16xbf16>
    %103 = vector.shape_cast %102 : vector<1x8x16xbf16> to vector<8x16xbf16>
    %cst_85 = arith.constant dense<0.000000e+00> : vector<256x16xf32>
    %104 = tpu.matmul %101, %103, %cst_85 {dimension_numbers = #tpu.dot_dimension_numbers<[1], [0], [0], [1], [0, 0, 1, 1], [], []>} : vector<256x8xbf16>, vector<8x16xbf16>, vector<256x16xf32> -> vector<256x16xf32>
    %105 = arith.addf %80, %104 : vector<256x16xf32>
    %c0_86 = arith.constant 0 : index
    %c0_87 = arith.constant 0 : index
    %106 = vector.load %arg6[%c0_86, %c0_87] : memref<1x16xf32, #tpu.memory_space<vmem>>, vector<1x16xf32>
    %107 = vector.broadcast %106 : vector<1x16xf32> to vector<256x16xf32>
    %108 = arith.mulf %105, %107 : vector<256x16xf32>
    %c0_88 = arith.constant 0 : index
    %c0_89 = arith.constant 0 : index
    %109 = vector.load %arg7[%c0_88, %c0_89] : memref<1x16xf32, #tpu.memory_space<vmem>>, vector<1x16xf32>
    %110 = vector.broadcast %109 : vector<1x16xf32> to vector<256x16xf32>
    %111 = arith.addf %108, %110 : vector<256x16xf32>
    %112 = arith.negf %111 : vector<256x16xf32>
    %113 = math.exp %112 : vector<256x16xf32>
    %cst_90 = arith.constant 1.000000e+00 : f32
    %114 = vector.broadcast %cst_90 : f32 to vector<256x16xf32>
    %115 = arith.addf %114, %113 : vector<256x16xf32>
    %116 = arith.divf %114, %115 : vector<256x16xf32>
    %117 = arith.mulf %111, %116 : vector<256x16xf32>
    %118 = vector.shape_cast %117 : vector<256x16xf32> to vector<16x16x16xf32>
    %c0_91 = arith.constant 0 : index
    %c0_92 = arith.constant 0 : index
    %c0_93 = arith.constant 0 : index
    %c0_94 = arith.constant 0 : index
    %119 = vector.load %arg8[%c0_91, %c0_92, %c0_93, %c0_94] : memref<1x16x16x16xf32, #tpu.memory_space<vmem>>, vector<1x16x16x16xf32>
    %120 = vector.shape_cast %119 : vector<1x16x16x16xf32> to vector<16x16x16xf32>
    %121 = vector.shape_cast %118 : vector<16x16x16xf32> to vector<1x16x16x16xf32>
    tpu.vector_store %arg8[%c0_91, %c0_92, %c0_93, %c0_94], %121 {strides = array<i32>} : memref<1x16x16x16xf32, #tpu.memory_space<vmem>>, vector<1x16x16x16xf32>,
    return
  }
  func.func @transform_0(%arg0: i32) -> (i32, i32, i32, i32) {
    %c0_i32 = arith.constant 0 : i32
    %c0_i32_0 = arith.constant 0 : i32
    %c0_i32_1 = arith.constant 0 : i32
    %c0_i32_2 = arith.constant 0 : i32
    return %arg0, %c0_i32, %c0_i32_0, %c0_i32_1 : i32, i32, i32, i32
  }
  func.func @transform_1(%arg0: i32) -> (i32, i32) {
    %c0_i32 = arith.constant 0 : i32
    %c0_i32_0 = arith.constant 0 : i32
    %c0_i32_1 = arith.constant 0 : i32
    return %c0_i32, %c0_i32_0 : i32, i32
  }
  func.func @transform_2(%arg0: i32) -> (i32, i32) {
    %c0_i32 = arith.constant 0 : i32
    %c0_i32_0 = arith.constant 0 : i32
    %c0_i32_1 = arith.constant 0 : i32
    return %c0_i32, %c0_i32_0 : i32, i32
  }
  func.func @transform_3(%arg0: i32) -> (i32, i32) {
    %c0_i32 = arith.constant 0 : i32
    %c0_i32_0 = arith.constant 0 : i32
    %c0_i32_1 = arith.constant 0 : i32
    return %c0_i32, %c0_i32_0 : i32, i32
  }
  func.func @transform_4(%arg0: i32) -> (i32, i32, i32) {
    %c0_i32 = arith.constant 0 : i32
    %c0_i32_0 = arith.constant 0 : i32
    %c0_i32_1 = arith.constant 0 : i32
    %c0_i32_2 = arith.constant 0 : i32
    return %c0_i32, %c0_i32_0, %c0_i32_1 : i32, i32, i32
  }
  func.func @transform_5(%arg0: i32) -> (i32, i32) {
    %c0_i32 = arith.constant 0 : i32
    %c0_i32_0 = arith.constant 0 : i32
    %c0_i32_1 = arith.constant 0 : i32
    return %c0_i32, %c0_i32_0 : i32, i32
  }
  func.func @transform_6(%arg0: i32) -> (i32, i32) {
    %c0_i32 = arith.constant 0 : i32
    %c0_i32_0 = arith.constant 0 : i32
    %c0_i32_1 = arith.constant 0 : i32
    return %c0_i32, %c0_i32_0 : i32, i32
  }
  func.func @transform_7(%arg0: i32) -> (i32, i32, i32, i32) {
    %c0_i32 = arith.constant 0 : i32
    %c0_i32_0 = arith.constant 0 : i32
    %c0_i32_1 = arith.constant 0 : i32
    %c0_i32_2 = arith.constant 0 : i32
    return %arg0, %c0_i32, %c0_i32_0, %c0_i32_1 : i32, i32, i32, i32
  }
}

</mosaic_0001>

<llo_original>
// kernel: tpu_custom_call.1
$region0: #{tpu_custom_call.1}
  #allocation0 [shape = 'u32[]', space=smem, size = 0x4, offset = 0x4, fixed_abs, tag = 'smem constant byte address 0x4 - core index']
  #allocation1 [shape = 'u32[144,128]{1,0:T(1,128)}', space=vmem, size = 0x12000, scoped, tag = 'internal scratch']
  #allocation2 [shape = 'f32[20,32,8]{2,1,0:T(8,128)}', space=vmem, size = 0x50000, scoped, tag = 'scratch operand']
  %s0 = inlined_call_operand.hbm [shape: f32[2,16,16,16], index: 0, kind: input, shape index: {}]
  %s1 = inlined_call_operand.vmem [shape: bf16[16,8], index: 1, kind: input, shape index: {}]
  %s2 = inlined_call_operand.vmem [shape: f32[1,8], index: 2, kind: input, shape index: {}]
  %s3 = inlined_call_operand.vmem [shape: f32[1,8], index: 3, kind: input, shape index: {}]
  %s4 = inlined_call_operand.vmem [shape: bf16[4,8,16], index: 4, kind: input, shape index: {}]
  %s5 = inlined_call_operand.vmem [shape: f32[1,16], index: 5, kind: input, shape index: {}]
  %s6 = inlined_call_operand.vmem [shape: f32[1,16], index: 6, kind: input, shape index: {}]
  %s7 = inlined_call_operand.hbm [shape: f32[2,16,16,16], index: 7, kind: output, shape index: {}]
  %s8 = sld [smem:[#allocation0]]
  $region65: #{tpu_custom_call.1} parent=0
    _
  %s10 = ssub.s32 1, %s8
  %s11 = scalar_select 0, %s10, %s8
  $region1: #{tpu_custom_call.1} parent=0
    #allocation3 [shape = 'u8[262144]{0}', space=vmem, size = 0x40000, scoped, tag = 'input window, operand 0']
    #allocation4 [shape = 's32[2]{0}', space=sflag, size = 0x8, scoped, tag = 'scoped memory for tpu_custom_call.1']
    #allocation5 [shape = 's32[2]{0}', space=sflag, size = 0x8, scoped, tag = 'scoped memory for tpu_custom_call.1']
    #allocation6 [shape = 'u8[262144]{0}', space=vmem, size = 0x40000, scoped, tag = 'output window, operand 0']
    %12 = vsyncpa [#allocation4], 0
    %s13 = scalar_lea.sflag [#allocation4], 1
    %14 = vsyncpa %s13, 0
    %15 = vsyncpa [#allocation5], 0
    %s16 = scalar_lea.sflag [#allocation5], 1
    %17 = vsyncpa %s16, 0
    loop: start=0, step=1, limit=4
    $region2: #{tpu_custom_call.1} parent=1 // loop_pre_header
      _
    $region3: #{tpu_custom_call.1} parent=1 // loop_header
      %s19 = sphi 0, %s23
      %p20 = scmp.ge.s32.totalorder %s19, 4
      %s29 = sphi 0, %s31
      %s32 = sphi 0, %s29
      %s33 = sphi 0, %s32
      %s49 = sphi 0, %s33
      %s53 = sphi 0, %s53
      %s55 = sphi 0, %s53
      %s56 = sphi 0, %s55
      %s70 = sphi 0, %s56
      %s74 = sphi 0, %s74
      %s76 = sphi 0, %s74
      %s77 = sphi 0, %s76
      %s91 = sphi 0, %s77
      %s95 = sphi 0, %s95
      %s97 = sphi 0, %s95
      %s98 = sphi 0, %s97
      %s112 = sphi 0, %s98
      %s116 = sphi 0, %s116
      %s118 = sphi 0, %s116
      %s119 = sphi 0, %s118
      %s133 = sphi 0, %s119
      %s137 = sphi 0, %s137
      %s139 = sphi 0, %s137
      %s140 = sphi 0, %s139
      %s154 = sphi 0, %s140
      %s158 = sphi 0, %s158
      %s160 = sphi 0, %s158
      %s161 = sphi 0, %s160
      %s175 = sphi 0, %s161
      %s181 = sphi 0, %s183
      %s184 = sphi 0, %s181
      %s185 = sphi 0, %s184
      %s201 = sphi 0, %s185
    $region4: #{tpu_custom_call.1} parent=1 // loop_header_branch
      %22 = sbr.rel (%p20) target = $region8
    $region5: #{tpu_custom_call.1} parent=1 // loop_body
      %s24 = ssub.s32 %s19, 1
      %s25 = ssub.s32 %s19, 2
      %s26 = sadd.s32 %s19, 1
      %s27 = ssub.s32 %s19, %s26
      %p28 = scmp.eq.s32.totalorder %s27, 0
      %s30 = sadd.s32 %s29, 1
      %s31 = scalar_select %p28, %s29, %s30
      %p34 = pneg %p28
      %p35 = scmp.eq.s32.totalorder %s19, 1
      %p36 = por %p34, %p35
      %p37 = scmp.ne.s32.totalorder %s29, %s32
      %p38 = scmp.eq.s32.totalorder %s19, 0
      %p39 = por %p37, %p38
      %p40 = scmp.ne.s32.totalorder %s29, %s32
      %p41 = scmp.eq.s32.totalorder %s24, 1
      %p42 = por %p40, %p41
      %p43 = scmp.ne.s32.totalorder %s32, %s33
      %p44 = scmp.eq.s32.totalorder %s24, 0
      %p45 = por %p43, %p44
      %p46 = scmp.ne.s32.totalorder %s32, %s33
      %p47 = scmp.eq.s32.totalorder %s25, 1
      %p48 = por %p46, %p47
      %p50 = scmp.ne.s32.totalorder %s33, %s49
      %p51 = scmp.eq.s32.totalorder %s25, 0
      %p52 = por %p50, %p51
      %s54 = sadd.s32 %s53, 1
      %p57 = scmp.eq.s32.totalorder %s19, 1
      %p58 = scmp.ne.s32.totalorder %s53, %s55
      %p59 = scmp.eq.s32.totalorder %s19, 0
      %p60 = por %p58, %p59
      %p61 = scmp.ne.s32.totalorder %s53, %s55
      %p62 = scmp.eq.s32.totalorder %s24, 1
      %p63 = por %p61, %p62
      %p64 = scmp.ne.s32.totalorder %s55, %s56
      %p65 = scmp.eq.s32.totalorder %s24, 0
      %p66 = por %p64, %p65
      %p67 = scmp.ne.s32.totalorder %s55, %s56
      %p68 = scmp.eq.s32.totalorder %s25, 1
      %p69 = por %p67, %p68
      %p71 = scmp.ne.s32.totalorder %s56, %s70
      %p72 = scmp.eq.s32.totalorder %s25, 0
      %p73 = por %p71, %p72
      %s75 = sadd.s32 %s74, 1
      %p78 = scmp.eq.s32.totalorder %s19, 1
      %p79 = scmp.ne.s32.totalorder %s74, %s76
      %p80 = scmp.eq.s32.totalorder %s19, 0
      %p81 = por %p79, %p80
      %p82 = scmp.ne.s32.totalorder %s74, %s76
      %p83 = scmp.eq.s32.totalorder %s24, 1
      %p84 = por %p82, %p83
      %p85 = scmp.ne.s32.totalorder %s76, %s77
      %p86 = scmp.eq.s32.totalorder %s24, 0
      %p87 = por %p85, %p86
      %p88 = scmp.ne.s32.totalorder %s76, %s77
      %p89 = scmp.eq.s32.totalorder %s25, 1
      %p90 = por %p88, %p89
      %p92 = scmp.ne.s32.totalorder %s77, %s91
      %p93 = scmp.eq.s32.totalorder %s25, 0
      %p94 = por %p92, %p93
      %s96 = sadd.s32 %s95, 1
      %p99 = scmp.eq.s32.totalorder %s19, 1
      %p100 = scmp.ne.s32.totalorder %s95, %s97
      %p101 = scmp.eq.s32.totalorder %s19, 0
      %p102 = por %p100, %p101
      %p103 = scmp.ne.s32.totalorder %s95, %s97
      %p104 = scmp.eq.s32.totalorder %s24, 1
      %p105 = por %p103, %p104
      %p106 = scmp.ne.s32.totalorder %s97, %s98
      %p107 = scmp.eq.s32.totalorder %s24, 0
      %p108 = por %p106, %p107
      %p109 = scmp.ne.s32.totalorder %s97, %s98
      %p110 = scmp.eq.s32.totalorder %s25, 1
      %p111 = por %p109, %p110
      %p113 = scmp.ne.s32.totalorder %s98, %s112
      %p114 = scmp.eq.s32.totalorder %s25, 0
      %p115 = por %p113, %p114
      %s117 = sadd.s32 %s116, 1
      %p120 = scmp.eq.s32.totalorder %s19, 1
      %p121 = scmp.ne.s32.totalorder %s116, %s118
      %p122 = scmp.eq.s32.totalorder %s19, 0
      %p123 = por %p121, %p122
      %p124 = scmp.ne.s32.totalorder %s116, %s118
      %p125 = scmp.eq.s32.totalorder %s24, 1
      %p126 = por %p124, %p125
      %p127 = scmp.ne.s32.totalorder %s118, %s119
      %p128 = scmp.eq.s32.totalorder %s24, 0
      %p129 = por %p127, %p128
      %p130 = scmp.ne.s32.totalorder %s118, %s119
      %p131 = scmp.eq.s32.totalorder %s25, 1
      %p132 = por %p130, %p131
      %p134 = scmp.ne.s32.totalorder %s119, %s133
      %p135 = scmp.eq.s32.totalorder %s25, 0
      %p136 = por %p134, %p135
      %s138 = sadd.s32 %s137, 1
      %p141 = scmp.eq.s32.totalorder %s19, 1
      %p142 = scmp.ne.s32.totalorder %s137, %s139
      %p143 = scmp.eq.s32.totalorder %s19, 0
      %p144 = por %p142, %p143
      %p145 = scmp.ne.s32.totalorder %s137, %s139
      %p146 = scmp.eq.s32.totalorder %s24, 1
      %p147 = por %p145, %p146
      %p148 = scmp.ne.s32.totalorder %s139, %s140
      %p149 = scmp.eq.s32.totalorder %s24, 0
      %p150 = por %p148, %p149
      %p151 = scmp.ne.s32.totalorder %s139, %s140
      %p152 = scmp.eq.s32.totalorder %s25, 1
      %p153 = por %p151, %p152
      %p155 = scmp.ne.s32.totalorder %s140, %s154
      %p156 = scmp.eq.s32.totalorder %s25, 0
      %p157 = por %p155, %p156
      %s159 = sadd.s32 %s158, 1
      %p162 = scmp.eq.s32.totalorder %s19, 1
      %p163 = scmp.ne.s32.totalorder %s158, %s160
      %p164 = scmp.eq.s32.totalorder %s19, 0
      %p165 = por %p163, %p164
      %p166 = scmp.ne.s32.totalorder %s158, %s160
      %p167 = scmp.eq.s32.totalorder %s24, 1
      %p168 = por %p166, %p167
      %p169 = scmp.ne.s32.totalorder %s160, %s161
      %p170 = scmp.eq.s32.totalorder %s24, 0
      %p171 = por %p169, %p170
      %p172 = scmp.ne.s32.totalorder %s160, %s161
      %p173 = scmp.eq.s32.totalorder %s25, 1
      %p174 = por %p172, %p173
      %p176 = scmp.ne.s32.totalorder %s161, %s175
      %p177 = scmp.eq.s32.totalorder %s25, 0
      %p178 = por %p176, %p177
      %s179 = ssub.s32 %s19, %s26
      %p180 = scmp.eq.s32.totalorder %s179, 0
      %s182 = sadd.s32 %s181, 1
      %s183 = scalar_select %p180, %s181, %s182
      %p186 = pneg %p180
      %p187 = scmp.eq.s32.totalorder %s19, 1
      %p188 = por %p186, %p187
      %p189 = scmp.ne.s32.totalorder %s181, %s184
      %p190 = scmp.eq.s32.totalorder %s19, 0
      %p191 = por %p189, %p190
      %p192 = scmp.ne.s32.totalorder %s181, %s184
      %p193 = scmp.eq.s32.totalorder %s24, 1
      %p194 = por %p192, %p193
      %p195 = scmp.ne.s32.totalorder %s184, %s185
      %p196 = scmp.eq.s32.totalorder %s24, 0
      %p197 = por %p195, %p196
      %p198 = scmp.ne.s32.totalorder %s184, %s185
      %p199 = scmp.eq.s32.totalorder %s25, 1
      %p200 = por %p198, %p199
      %p202 = scmp.ne.s32.totalorder %s185, %s201
      %p203 = scmp.eq.s32.totalorder %s25, 0
      %p204 = por %p202, %p203
      %p205 = scmp.le.s32.totalorder 1, %s19
      %p206 = scmp.lt.s32.totalorder %s19, 3
      %p207 = pnand %p205, %p206
      %p208 = pneg %p207
      // Predicated region
      $region9: #{tpu_custom_call.1} parent=5 // pred_check
        _
      $region10: #{tpu_custom_call.1} parent=5 // pred_check_branch
        %210 = sbr.rel (%p207) target = $region12
      $region11: #{tpu_custom_call.1} parent=5 // pred_region
        %s211 = ssub.s32 %s19, 1
        // Predicated region
        $region13: #{tpu_custom_call.1} parent=11 // pred_check
          %p212 = pneg %p66
        $region14: #{tpu_custom_call.1} parent=11 // pred_check_branch
          %214 = sbr.rel (%p212) target = $region16
        $region15: #{tpu_custom_call.1} parent=11 // pred_region
          _
        $region16: #{tpu_custom_call.1} parent=11 // pred_fallthru
          _
        // Predicated region
        $region17: #{tpu_custom_call.1} parent=11 // pred_check
          %p215 = pneg %p87
        $region18: #{tpu_custom_call.1} parent=11 // pred_check_branch
          %217 = sbr.rel (%p215) target = $region20
        $region19: #{tpu_custom_call.1} parent=11 // pred_region
          _
        $region20: #{tpu_custom_call.1} parent=11 // pred_fallthru
          _
        // Predicated region
        $region21: #{tpu_custom_call.1} parent=11 // pred_check
          %p218 = pneg %p108
        $region22: #{tpu_custom_call.1} parent=11 // pred_check_branch
          %220 = sbr.rel (%p218) target = $region24
        $region23: #{tpu_custom_call.1} parent=11 // pred_region
          _
        $region24: #{tpu_custom_call.1} parent=11 // pred_fallthru
          _
        // Predicated region
        $region25: #{tpu_custom_call.1} parent=11 // pred_check
          %p221 = pneg %p129
        $region26: #{tpu_custom_call.1} parent=11 // pred_check_branch
          %223 = sbr.rel (%p221) target = $region28
        $region27: #{tpu_custom_call.1} parent=11 // pred_region
          _
        $region28: #{tpu_custom_call.1} parent=11 // pred_fallthru
          _
        // Predicated region
        $region29: #{tpu_custom_call.1} parent=11 // pred_check
          %p224 = pneg %p150
        $region30: #{tpu_custom_call.1} parent=11 // pred_check_branch
          %226 = sbr.rel (%p224) target = $region32
        $region31: #{tpu_custom_call.1} parent=11 // pred_region
          _
        $region32: #{tpu_custom_call.1} parent=11 // pred_fallthru
          _
        // Predicated region
        $region33: #{tpu_custom_call.1} parent=11 // pred_check
          %p227 = pneg %p171
        $region34: #{tpu_custom_call.1} parent=11 // pred_check_branch
          %229 = sbr.rel (%p227) target = $region36
        $region35: #{tpu_custom_call.1} parent=11 // pred_region
          _
        $region36: #{tpu_custom_call.1} parent=11 // pred_fallthru
          _
      $region12: #{tpu_custom_call.1} parent=5 // pred_fallthru
        _
      %p230 = scmp.lt.s32.totalorder %s19, 2
      // Predicated region
      $region37: #{tpu_custom_call.1} parent=5 // pred_check
        %p231 = pneg %p230
      $region38: #{tpu_custom_call.1} parent=5 // pred_check_branch
        %233 = sbr.rel (%p231) target = $region40
      $region39: #{tpu_custom_call.1} parent=5 // pred_region
        // Predicated region
        $region41: #{tpu_custom_call.1} parent=39 // pred_check
          %p234 = pneg %p39
        $region42: #{tpu_custom_call.1} parent=39 // pred_check_branch
          %236 = sbr.rel (%p234) target = $region44
        $region43: #{tpu_custom_call.1} parent=39 // pred_region
          %s237 = sand.u32 %s29, 1
          %s238 = scalar_lea.sflag [#allocation4], %s237
          %s239 = sand.u32 %s29, 1
          %s240 = smul.addr %s239, 256
          %s241 = scalar_lea.vmem [#allocation3], %s240
          %s243 = ssub.s32 4096, 4096
          %244 = vsyncadd %s238, %s243
          %s245 = smul.addr %s19, 32
          %s246 = smul.addr %s245, 128
          %s247 = scalar_lea.hbm %s0, %s246
          %s248 = sshll.u32 %s241, 4
          %s249 = int_to_ptr.vmem [resolvable:$true] %s248
          %254 = dma.hbm_to_vmem [thread:$0]  %s247, 4096, %s249, %s238, 128, 128, 8
        $region44: #{tpu_custom_call.1} parent=39 // pred_fallthru
          _
      $region40: #{tpu_custom_call.1} parent=5 // pred_fallthru
        _
      %p255 = scmp.le.s32.totalorder 1, %s19
      %p256 = scmp.lt.s32.totalorder %s19, 3
      %p257 = pnand %p255, %p256
      %p258 = pneg %p257
      // Predicated region
      $region45: #{tpu_custom_call.1} parent=5 // pred_check
        _
      $region46: #{tpu_custom_call.1} parent=5 // pred_check_branch
        %260 = sbr.rel (%p257) target = $region48
      $region47: #{tpu_custom_call.1} parent=5 // pred_region
        %s261 = ssub.s32 %s19, 1
        %s262 = sand.u32 %s32, 1
        %s263 = scalar_lea.sflag [#allocation4], %s262
        %s264 = sand.u32 %s32, 1
        %s265 = smul.addr %s264, 256
        %s266 = scalar_lea.vmem [#allocation3], %s265
        // Predicated region
        $region49: #{tpu_custom_call.1} parent=47 // pred_check
          %p267 = pneg %p45
        $region50: #{tpu_custom_call.1} parent=47 // pred_check_branch
          %269 = sbr.rel (%p267) target = $region52
        $region51: #{tpu_custom_call.1} parent=47 // pred_region
          %270 = dma.done %s263, 4096
        $region52: #{tpu_custom_call.1} parent=47 // pred_fallthru
          _
        %s271 = sand.u32 %s32, 1
        %s272 = scalar_lea.sflag [#allocation4], %s271
        %s273 = sand.u32 %s32, 1
        %s274 = smul.addr %s273, 256
        %s275 = scalar_lea.vmem [#allocation3], %s274
        %p276 = pneg %p45
        %p277 = pneg %p42
        %p278 = pneg %p66
        %p279 = pneg %p63
        %p280 = pneg %p87
        %p281 = pneg %p84
        %p282 = pneg %p108
        %p283 = pneg %p105
        %p284 = pneg %p129
        %p285 = pneg %p126
        %p286 = pneg %p150
        %p287 = pneg %p147
        %p288 = pneg %p171
        %p289 = pneg %p168
        %p290 = pneg %p197
        %p291 = pneg %p194
        %s292 = sand.u32 %s184, 1
        %s293 = scalar_lea.sflag [#allocation5], %s292
        %s294 = sand.u32 %s184, 1
        %s295 = smul.addr %s294, 256
        %s296 = scalar_lea.vmem [#allocation6], %s295
        %vm298 = vcmask 64512
        %299 = vst.msk [vmem:[#allocation2] sm:$0xff] %vm298, -inf
        %300 = vst.msk [vmem:[#allocation2 + $0x8] sm:$0xff] %vm298, -inf
        %301 = vst.msk [vmem:[#allocation2 + $0x10] sm:$0xff] %vm298, -inf
        %302 = vst.msk [vmem:[#allocation2 + $0x18] sm:$0xff] %vm298, -inf
        %303 = vst.msk [vmem:[#allocation2 + $0x20] sm:$0xff] %vm298, -inf
        %304 = vst.msk [vmem:[#allocation2 + $0x28] sm:$0xff] %vm298, -inf
        %305 = vst.msk [vmem:[#allocation2 + $0x30] sm:$0xff] %vm298, -inf
        %306 = vst.msk [vmem:[#allocation2 + $0x38] sm:$0xff] %vm298, -inf
        %s307 = scalar_lea.vmem [#allocation2], 576
        %308 = vst.msk [vmem:[%s307] sm:$0xff] %vm298, -inf
        %309 = vst.msk [vmem:[%s307 + $0x8] sm:$0xff] %vm298, -inf
        %310 = vst.msk [vmem:[%s307 + $0x10] sm:$0xff] %vm298, -inf
        %311 = vst.msk [vmem:[%s307 + $0x18] sm:$0xff] %vm298, -inf
        %312 = vst.msk [vmem:[%s307 + $0x20] sm:$0xff] %vm298, -inf
        %313 = vst.msk [vmem:[%s307 + $0x28] sm:$0xff] %vm298, -inf
        %314 = vst.msk [vmem:[%s307 + $0x30] sm:$0xff] %vm298, -inf
        %315 = vst.msk [vmem:[%s307 + $0x38] sm:$0xff] %vm298, -inf
        %316 = vst.msk [vmem:[#allocation2] sm:$0xff] %vm298, -inf
        %317 = vst.msk [vmem:[#allocation2 + $0x20] sm:$0xff] %vm298, -inf
        %318 = vst.msk [vmem:[#allocation2 + $0x40] sm:$0xff] %vm298, -inf
        %319 = vst.msk [vmem:[#allocation2 + $0x60] sm:$0xff] %vm298, -inf
        %320 = vst.msk [vmem:[#allocation2 + $0x80] sm:$0xff] %vm298, -inf
        %321 = vst.msk [vmem:[#allocation2 + $0xa0] sm:$0xff] %vm298, -inf
        %322 = vst.msk [vmem:[#allocation2 + $0xc0] sm:$0xff] %vm298, -inf
        %323 = vst.msk [vmem:[#allocation2 + $0xe0] sm:$0xff] %vm298, -inf
        %324 = vst.msk [vmem:[#allocation2 + $0x100] sm:$0xff] %vm298, -inf
        %325 = vst.msk [vmem:[#allocation2 + $0x120] sm:$0xff] %vm298, -inf
        %326 = vst.msk [vmem:[#allocation2 + $0x140] sm:$0xff] %vm298, -inf
        %327 = vst.msk [vmem:[#allocation2 + $0x160] sm:$0xff] %vm298, -inf
        %328 = vst.msk [vmem:[#allocation2 + $0x180] sm:$0xff] %vm298, -inf
        %329 = vst.msk [vmem:[#allocation2 + $0x1a0] sm:$0xff] %vm298, -inf
        %330 = vst.msk [vmem:[#allocation2 + $0x1c0] sm:$0xff] %vm298, -inf
        %331 = vst.msk [vmem:[#allocation2 + $0x1e0] sm:$0xff] %vm298, -inf
        %332 = vst.msk [vmem:[#allocation2 + $0x200] sm:$0xff] %vm298, -inf
        %333 = vst.msk [vmem:[#allocation2 + $0x220] sm:$0xff] %vm298, -inf
        %334 = vst.msk [vmem:[#allocation2 + $0x240] sm:$0xff] %vm298, -inf
        %335 = vst.msk [vmem:[#allocation2 + $0x260] sm:$0xff] %vm298, -inf
        %336 = vst.msk [vmem:[#allocation2 + $0x18] sm:$0xff] %vm298, -inf
        %337 = vst.msk [vmem:[#allocation2 + $0x38] sm:$0xff] %vm298, -inf
        %338 = vst.msk [vmem:[#allocation2 + $0x58] sm:$0xff] %vm298, -inf
        %339 = vst.msk [vmem:[#allocation2 + $0x78] sm:$0xff] %vm298, -inf
        %340 = vst.msk [vmem:[#allocation2 + $0x98] sm:$0xff] %vm298, -inf
        %341 = vst.msk [vmem:[#allocation2 + $0xb8] sm:$0xff] %vm298, -inf
        %342 = vst.msk [vmem:[#allocation2 + $0xd8] sm:$0xff] %vm298, -inf
        %343 = vst.msk [vmem:[#allocation2 + $0xf8] sm:$0xff] %vm298, -inf
        %344 = vst.msk [vmem:[#allocation2 + $0x118] sm:$0xff] %vm298, -inf
        %345 = vst.msk [vmem:[#allocation2 + $0x138] sm:$0xff] %vm298, -inf
        %346 = vst.msk [vmem:[#allocation2 + $0x158] sm:$0xff] %vm298, -inf
        %347 = vst.msk [vmem:[#allocation2 + $0x178] sm:$0xff] %vm298, -inf
        %348 = vst.msk [vmem:[#allocation2 + $0x198] sm:$0xff] %vm298, -inf
        %349 = vst.msk [vmem:[#allocation2 + $0x1b8] sm:$0xff] %vm298, -inf
        %350 = vst.msk [vmem:[#allocation2 + $0x1d8] sm:$0xff] %vm298, -inf
        %351 = vst.msk [vmem:[#allocation2 + $0x1f8] sm:$0xff] %vm298, -inf
        %352 = vst.msk [vmem:[#allocation2 + $0x218] sm:$0xff] %vm298, -inf
        %353 = vst.msk [vmem:[#allocation2 + $0x238] sm:$0xff] %vm298, -inf
        %354 = vst.msk [vmem:[#allocation2 + $0x258] sm:$0xff] %vm298, -inf
        %355 = vst.msk [vmem:[#allocation2 + $0x278] sm:$0xff] %vm298, -inf
        %v356 = vld [vmem:[%s266] sm:$0xff]
        %v357 = vld [vmem:[%s266 + $0x8] sm:$0xff]
        %v358 = vld [vmem:[%s266 + $0x10] sm:$0xff]
        %v359 = vld [vmem:[%s266 + $0x18] sm:$0xff]
        %v360 = vld [vmem:[%s266 + $0x20] sm:$0xff]
        %v361 = vld [vmem:[%s266 + $0x28] sm:$0xff]
        %v362 = vld [vmem:[%s266 + $0x30] sm:$0xff]
        %v363 = vld [vmem:[%s266 + $0x38] sm:$0xff]
        %v364 = vld [vmem:[%s266 + $0x40] sm:$0xff]
        %v365 = vld [vmem:[%s266 + $0x48] sm:$0xff]
        %v366 = vld [vmem:[%s266 + $0x50] sm:$0xff]
        %v367 = vld [vmem:[%s266 + $0x58] sm:$0xff]
        %v368 = vld [vmem:[%s266 + $0x60] sm:$0xff]
        %v369 = vld [vmem:[%s266 + $0x68] sm:$0xff]
        %v370 = vld [vmem:[%s266 + $0x70] sm:$0xff]
        %v371 = vld [vmem:[%s266 + $0x78] sm:$0xff]
        %v372 = vld [vmem:[%s266 + $0x80] sm:$0xff]
        %v373 = vld [vmem:[%s266 + $0x88] sm:$0xff]
        %v374 = vld [vmem:[%s266 + $0x90] sm:$0xff]
        %v375 = vld [vmem:[%s266 + $0x98] sm:$0xff]
        %v376 = vld [vmem:[%s266 + $0xa0] sm:$0xff]
        %v377 = vld [vmem:[%s266 + $0xa8] sm:$0xff]
        %v378 = vld [vmem:[%s266 + $0xb0] sm:$0xff]
        %v379 = vld [vmem:[%s266 + $0xb8] sm:$0xff]
        %v380 = vld [vmem:[%s266 + $0xc0] sm:$0xff]
        %v381 = vld [vmem:[%s266 + $0xc8] sm:$0xff]
        %v382 = vld [vmem:[%s266 + $0xd0] sm:$0xff]
        %v383 = vld [vmem:[%s266 + $0xd8] sm:$0xff]
        %v384 = vld [vmem:[%s266 + $0xe0] sm:$0xff]
        %v385 = vld [vmem:[%s266 + $0xe8] sm:$0xff]
        %v386 = vld [vmem:[%s266 + $0xf0] sm:$0xff]
        %v387 = vld [vmem:[%s266 + $0xf8] sm:$0xff]
        %v388 = vpack.c.bf16 %v357, %v356
        %v389 = vpack.c.bf16 %v359, %v358
        %v390 = vpack.c.bf16 %v361, %v360
        %v391 = vpack.c.bf16 %v363, %v362
        %v392 = vpack.c.bf16 %v365, %v364
        %v393 = vpack.c.bf16 %v367, %v366
        %v394 = vpack.c.bf16 %v369, %v368
        %v395 = vpack.c.bf16 %v371, %v370
        %v396 = vpack.c.bf16 %v373, %v372
        %v397 = vpack.c.bf16 %v375, %v374
        %v398 = vpack.c.bf16 %v377, %v376
        %v399 = vpack.c.bf16 %v379, %v378
        %v400 = vpack.c.bf16 %v381, %v380
        %v401 = vpack.c.bf16 %v383, %v382
        %v402 = vpack.c.bf16 %v385, %v384
        %v403 = vpack.c.bf16 %v387, %v386
        %v404 = vld [vmem:[%s1] sm:$0xf]
        %v405 = vld [vmem:[%s1 + $0x4] sm:$0xf]
        %v408 = vunpack.c.l.b16 %v404
        %v409 = vunpack.c.l.b16 %v405
        %v410 = vpack.c.b16 %v409, %v408
        %vm412 = vcmask 130048
        %v414 = vsel %vm412, %v388, 0
        %v417 = vsel %vm412, %v389, 0
        %v420 = vsel %vm412, %v390, 0
        %v423 = vsel %vm412, %v391, 0
        %v426 = vsel %vm412, %v392, 0
        %v429 = vsel %vm412, %v393, 0
        %v432 = vsel %vm412, %v394, 0
        %v435 = vsel %vm412, %v395, 0
        %v438 = vsel %vm412, %v396, 0
        %v441 = vsel %vm412, %v397, 0
        %v444 = vsel %vm412, %v398, 0
        %v447 = vsel %vm412, %v399, 0
        %v450 = vsel %vm412, %v400, 0
        %v453 = vsel %vm412, %v401, 0
        %v456 = vsel %vm412, %v402, 0
        %v459 = vsel %vm412, %v403, 0
        %461 = vmatprep.subr.bf16.mxu0 0
        %462 = vmatpush1.bf16.msra.mxu0 %v410
        %463 = vmatprep.subr.bf16.mxu0 0
        %464 = vmatpush1.bf16.msra.mxu0 0
        %465 = vmatprep.subr.bf16.mxu0 0
        %466 = vmatpush1.bf16.msra.mxu0 0
        %467 = vmatprep.subr.bf16.mxu0 0
        %468 = vmatpush1.bf16.msra.mxu0 0
        %469 = vmatprep.subr.bf16.mxu0 0
        %470 = vmatpush1.bf16.msra.mxu0 0
        %471 = vmatprep.subr.bf16.mxu0 0
        %472 = vmatpush1.bf16.msra.mxu0 0
        %473 = vmatprep.subr.bf16.mxu0 0
        %474 = vmatpush1.bf16.msra.mxu0 0
        %475 = vmatprep.subr.bf16.mxu0 0
        %476 = vmatpush1.bf16.msra.mxu0 0
        %477 = vmatprep.subr.bf16.mxu0 0
        %478 = vmatpush1.bf16.msra.mxu0 0
        %479 = vmatprep.subr.bf16.mxu0 0
        %480 = vmatpush1.bf16.msra.mxu0 0
        %481 = vmatprep.subr.bf16.mxu0 0
        %482 = vmatpush1.bf16.msra.mxu0 0
        %483 = vmatprep.subr.bf16.mxu0 0
        %484 = vmatpush1.bf16.msra.mxu0 0
        %485 = vmatprep.subr.bf16.mxu0 0
        %486 = vmatpush1.bf16.msra.mxu0 0
        %487 = vmatprep.subr.bf16.mxu0 0
        %488 = vmatpush1.bf16.msra.mxu0 0
        %489 = vmatprep.subr.bf16.mxu0 0
        %490 = vmatpush1.bf16.msra.mxu0 0
        %491 = vmatprep.subr.bf16.mxu0 0
        %492 = vmatpush1.bf16.msra.mxu0 0
        %493 = vmatprep.mubr.bf16.mxu0 0
        %494 = vmatmul.mubr.bf16.gmra.mrb[0].mxu0 %v414
        %v495 = vpop.f32.mrb[0].mxu0
        %v496 = vadd.f32 0.0, %v495
        %v497 = vpop.f32.mrb[0].mxu0
        %v498 = vpop.f32.mrb[0].mxu0
        %v499 = vadd.f32 0.0, %v498
        %v500 = vpop.f32.mrb[0].mxu0
        %501 = vmatprep.mubr.bf16.mxu0 0
        %502 = vmatmul.mubr.bf16.gmra.mrb[0].mxu0 %v417
        %v503 = vpop.f32.mrb[0].mxu0
        %v504 = vadd.f32 0.0, %v503
        %v505 = vpop.f32.mrb[0].mxu0
        %v506 = vpop.f32.mrb[0].mxu0
        %v507 = vadd.f32 0.0, %v506
        %v508 = vpop.f32.mrb[0].mxu0
        %509 = vmatprep.mubr.bf16.mxu0 0
        %510 = vmatmul.mubr.bf16.gmra.mrb[0].mxu0 %v420
        %v511 = vpop.f32.mrb[0].mxu0
        %v512 = vadd.f32 0.0, %v511
        %v513 = vpop.f32.mrb[0].mxu0
        %v514 = vpop.f32.mrb[0].mxu0
        %v515 = vadd.f32 0.0, %v514
        %v516 = vpop.f32.mrb[0].mxu0
        %517 = vmatprep.mubr.bf16.mxu0 0
        %518 = vmatmul.mubr.bf16.gmra.mrb[0].mxu0 %v423
        %v519 = vpop.f32.mrb[0].mxu0
        %v520 = vadd.f32 0.0, %v519
        %v521 = vpop.f32.mrb[0].mxu0
        %v522 = vpop.f32.mrb[0].mxu0
        %v523 = vadd.f32 0.0, %v522
        %v524 = vpop.f32.mrb[0].mxu0
        %525 = vmatprep.mubr.bf16.mxu0 0
        %526 = vmatmul.mubr.bf16.gmra.mrb[0].mxu0 %v426
        %v527 = vpop.f32.mrb[0].mxu0
        %v528 = vadd.f32 0.0, %v527
        %v529 = vpop.f32.mrb[0].mxu0
        %v530 = vpop.f32.mrb[0].mxu0
        %v531 = vadd.f32 0.0, %v530
        %v532 = vpop.f32.mrb[0].mxu0
        %533 = vmatprep.mubr.bf16.mxu0 0
        %534 = vmatmul.mubr.bf16.gmra.mrb[0].mxu0 %v429
        %v535 = vpop.f32.mrb[0].mxu0
        %v536 = vadd.f32 0.0, %v535
        %v537 = vpop.f32.mrb[0].mxu0
        %v538 = vpop.f32.mrb[0].mxu0
        %v539 = vadd.f32 0.0, %v538
        %v540 = vpop.f32.mrb[0].mxu0
        %541 = vmatprep.mubr.bf16.mxu0 0
        %542 = vmatmul.mubr.bf16.gmra.mrb[0].mxu0 %v432
        %v543 = vpop.f32.mrb[0].mxu0
        %v544 = vadd.f32 0.0, %v543
        %v545 = vpop.f32.mrb[0].mxu0
        %v546 = vpop.f32.mrb[0].mxu0
        %v547 = vadd.f32 0.0, %v546
        %v548 = vpop.f32.mrb[0].mxu0
        %549 = vmatprep.mubr.bf16.mxu0 0
        %550 = vmatmul.mubr.bf16.gmra.mrb[0].mxu0 %v435
        %v551 = vpop.f32.mrb[0].mxu0
        %v552 = vadd.f32 0.0, %v551
        %v553 = vpop.f32.mrb[0].mxu0
        %v554 = vpop.f32.mrb[0].mxu0
        %v555 = vadd.f32 0.0, %v554
        %v556 = vpop.f32.mrb[0].mxu0
        %557 = vmatprep.mubr.bf16.mxu0 0
        %558 = vmatmul.mubr.bf16.gmra.mrb[0].mxu0 %v438
        %v559 = vpop.f32.mrb[0].mxu0
        %v560 = vadd.f32 0.0, %v559
        %v561 = vpop.f32.mrb[0].mxu0
        %v562 = vpop.f32.mrb[0].mxu0
        %v563 = vadd.f32 0.0, %v562
        %v564 = vpop.f32.mrb[0].mxu0
        %565 = vmatprep.mubr.bf16.mxu0 0
        %566 = vmatmul.mubr.bf16.gmra.mrb[0].mxu0 %v441
        %v567 = vpop.f32.mrb[0].mxu0
        %v568 = vadd.f32 0.0, %v567
        %v569 = vpop.f32.mrb[0].mxu0
        %v570 = vpop.f32.mrb[0].mxu0
        %v571 = vadd.f32 0.0, %v570
        %v572 = vpop.f32.mrb[0].mxu0
        %573 = vmatprep.mubr.bf16.mxu0 0
        %574 = vmatmul.mubr.bf16.gmra.mrb[0].mxu0 %v444
        %v575 = vpop.f32.mrb[0].mxu0
        %v576 = vadd.f32 0.0, %v575
        %v577 = vpop.f32.mrb[0].mxu0
        %v578 = vpop.f32.mrb[0].mxu0
        %v579 = vadd.f32 0.0, %v578
        %v580 = vpop.f32.mrb[0].mxu0
        %581 = vmatprep.mubr.bf16.mxu0 0
        %582 = vmatmul.mubr.bf16.gmra.mrb[0].mxu0 %v447
        %v583 = vpop.f32.mrb[0].mxu0
        %v584 = vadd.f32 0.0, %v583
        %v585 = vpop.f32.mrb[0].mxu0
        %v586 = vpop.f32.mrb[0].mxu0
        %v587 = vadd.f32 0.0, %v586
        %v588 = vpop.f32.mrb[0].mxu0
        %589 = vmatprep.mubr.bf16.mxu0 0
        %590 = vmatmul.mubr.bf16.gmra.mrb[0].mxu0 %v450
        %v591 = vpop.f32.mrb[0].mxu0
        %v592 = vadd.f32 0.0, %v591
        %v593 = vpop.f32.mrb[0].mxu0
        %v594 = vpop.f32.mrb[0].mxu0
        %v595 = vadd.f32 0.0, %v594
        %v596 = vpop.f32.mrb[0].mxu0
        %597 = vmatprep.mubr.bf16.mxu0 0
        %598 = vmatmul.mubr.bf16.gmra.mrb[0].mxu0 %v453
        %v599 = vpop.f32.mrb[0].mxu0
        %v600 = vadd.f32 0.0, %v599
        %v601 = vpop.f32.mrb[0].mxu0
        %v602 = vpop.f32.mrb[0].mxu0
        %v603 = vadd.f32 0.0, %v602
        %v604 = vpop.f32.mrb[0].mxu0
        %605 = vmatprep.mubr.bf16.mxu0 0
        %606 = vmatmul.mubr.bf16.gmra.mrb[0].mxu0 %v456
        %v607 = vpop.f32.mrb[0].mxu0
        %v608 = vadd.f32 0.0, %v607
        %v609 = vpop.f32.mrb[0].mxu0
        %v610 = vpop.f32.mrb[0].mxu0
        %v611 = vadd.f32 0.0, %v610
        %v612 = vpop.f32.mrb[0].mxu0
        %613 = vmatprep.mubr.bf16.mxu0 0
        %614 = vmatmul.mubr.bf16.gmra.mrb[0].mxu0 %v459
        %v615 = vpop.f32.mrb[0].mxu0
        %v616 = vadd.f32 0.0, %v615
        %v617 = vpop.f32.mrb[0].mxu0
        %v618 = vpop.f32.mrb[0].mxu0
        %v619 = vadd.f32 0.0, %v618
        %v620 = vpop.f32.mrb[0].mxu0
        %621 = vdwg.mxu0
        %v622 = vld [vmem:[%s2] sm:$0x1]
        %v624 = vlaneseq
        %v625 = vshrl.u32 %v624, 7
        %v626 = vsub.s32 0, %v625
        %v627 = vrot.slane %v622, %v626
        %v629 = vmul.f32 %v496, %v627
        %v630 = vmul.f32 %v499, %v627
        %v631 = vmul.f32 %v504, %v627
        %v632 = vmul.f32 %v507, %v627
        %v633 = vmul.f32 %v512, %v627
        %v634 = vmul.f32 %v515, %v627
        %v635 = vmul.f32 %v520, %v627
        %v636 = vmul.f32 %v523, %v627
        %v637 = vmul.f32 %v528, %v627
        %v638 = vmul.f32 %v531, %v627
        %v639 = vmul.f32 %v536, %v627
        %v640 = vmul.f32 %v539, %v627
        %v641 = vmul.f32 %v544, %v627
        %v642 = vmul.f32 %v547, %v627
        %v643 = vmul.f32 %v552, %v627
        %v644 = vmul.f32 %v555, %v627
        %v645 = vmul.f32 %v560, %v627
        %v646 = vmul.f32 %v563, %v627
        %v647 = vmul.f32 %v568, %v627
        %v648 = vmul.f32 %v571, %v627
        %v649 = vmul.f32 %v576, %v627
        %v650 = vmul.f32 %v579, %v627
        %v651 = vmul.f32 %v584, %v627
        %v652 = vmul.f32 %v587, %v627
        %v653 = vmul.f32 %v592, %v627
        %v654 = vmul.f32 %v595, %v627
        %v655 = vmul.f32 %v600, %v627
        %v656 = vmul.f32 %v603, %v627
        %v657 = vmul.f32 %v608, %v627
        %v658 = vmul.f32 %v611, %v627
        %v659 = vmul.f32 %v616, %v627
        %v660 = vmul.f32 %v619, %v627
        %v661 = vld [vmem:[%s3] sm:$0x1]
        %v663 = vlaneseq
        %v664 = vshrl.u32 %v663, 7
        %v665 = vsub.s32 0, %v664
        %v666 = vrot.slane %v661, %v665
        %v668 = vadd.f32 %v629, %v666
        %v669 = vadd.f32 %v630, %v666
        %v670 = vadd.f32 %v631, %v666
        %v671 = vadd.f32 %v632, %v666
        %v672 = vadd.f32 %v633, %v666
        %v673 = vadd.f32 %v634, %v666
        %v674 = vadd.f32 %v635, %v666
        %v675 = vadd.f32 %v636, %v666
        %v676 = vadd.f32 %v637, %v666
        %v677 = vadd.f32 %v638, %v666
        %v678 = vadd.f32 %v639, %v666
        %v679 = vadd.f32 %v640, %v666
        %v680 = vadd.f32 %v641, %v666
        %v681 = vadd.f32 %v642, %v666
        %v682 = vadd.f32 %v643, %v666
        %v683 = vadd.f32 %v644, %v666
        %v684 = vadd.f32 %v645, %v666
        %v685 = vadd.f32 %v646, %v666
        %v686 = vadd.f32 %v647, %v666
        %v687 = vadd.f32 %v648, %v666
        %v688 = vadd.f32 %v649, %v666
        %v689 = vadd.f32 %v650, %v666
        %v690 = vadd.f32 %v651, %v666
        %v691 = vadd.f32 %v652, %v666
        %v692 = vadd.f32 %v653, %v666
        %v693 = vadd.f32 %v654, %v666
        %v694 = vadd.f32 %v655, %v666
        %v695 = vadd.f32 %v656, %v666
        %v696 = vadd.f32 %v657, %v666
        %v697 = vadd.f32 %v658, %v666
        %v698 = vadd.f32 %v659, %v666
        %v699 = vadd.f32 %v660, %v666
        %v700 = vxor.u32 %v668, 2147483648
        %v701 = vxor.u32 %v669, 2147483648
        %v702 = vxor.u32 %v670, 2147483648
        %v703 = vxor.u32 %v671, 2147483648
        %v704 = vxor.u32 %v672, 2147483648
        %v705 = vxor.u32 %v673, 2147483648
        %v706 = vxor.u32 %v674, 2147483648
        %v707 = vxor.u32 %v675, 2147483648
        %v708 = vxor.u32 %v676, 2147483648
        %v709 = vxor.u32 %v677, 2147483648
        %v710 = vxor.u32 %v678, 2147483648
        %v711 = vxor.u32 %v679, 2147483648
        %v712 = vxor.u32 %v680, 2147483648
        %v713 = vxor.u32 %v681, 2147483648
        %v714 = vxor.u32 %v682, 2147483648
        %v715 = vxor.u32 %v683, 2147483648
        %v716 = vxor.u32 %v684, 2147483648
        %v717 = vxor.u32 %v685, 2147483648
        %v718 = vxor.u32 %v686, 2147483648
        %v719 = vxor.u32 %v687, 2147483648
        %v720 = vxor.u32 %v688, 2147483648
        %v721 = vxor.u32 %v689, 2147483648
        %v722 = vxor.u32 %v690, 2147483648
        %v723 = vxor.u32 %v691, 2147483648
        %v724 = vxor.u32 %v692, 2147483648
        %v725 = vxor.u32 %v693, 2147483648
        %v726 = vxor.u32 %v694, 2147483648
        %v727 = vxor.u32 %v695, 2147483648
        %v728 = vxor.u32 %v696, 2147483648
        %v729 = vxor.u32 %v697, 2147483648
        %v730 = vxor.u32 %v698, 2147483648
        %v731 = vxor.u32 %v699, 2147483648
        %v732 = vmul.f32 %v700, 1.442695
        %v733 = vpow.pop %v732
        %v734 = vmul.f32 %v701, 1.442695
        %v735 = vpow.pop %v734
        %v736 = vmul.f32 %v702, 1.442695
        %v737 = vpow.pop %v736
        %v738 = vmul.f32 %v703, 1.442695
        %v739 = vpow.pop %v738
        %v740 = vmul.f32 %v704, 1.442695
        %v741 = vpow.pop %v740
        %v742 = vmul.f32 %v705, 1.442695
        %v743 = vpow.pop %v742
        %v744 = vmul.f32 %v706, 1.442695
        %v745 = vpow.pop %v744
        %v746 = vmul.f32 %v707, 1.442695
        %v747 = vpow.pop %v746
        %v748 = vmul.f32 %v708, 1.442695
        %v749 = vpow.pop %v748
        %v750 = vmul.f32 %v709, 1.442695
        %v751 = vpow.pop %v750
        %v752 = vmul.f32 %v710, 1.442695
        %v753 = vpow.pop %v752
        %v754 = vmul.f32 %v711, 1.442695
        %v755 = vpow.pop %v754
        %v756 = vmul.f32 %v712, 1.442695
        %v757 = vpow.pop %v756
        %v758 = vmul.f32 %v713, 1.442695
        %v759 = vpow.pop %v758
        %v760 = vmul.f32 %v714, 1.442695
        %v761 = vpow.pop %v760
        %v762 = vmul.f32 %v715, 1.442695
        %v763 = vpow.pop %v762
        %v764 = vmul.f32 %v716, 1.442695
        %v765 = vpow.pop %v764
        %v766 = vmul.f32 %v717, 1.442695
        %v767 = vpow.pop %v766
        %v768 = vmul.f32 %v718, 1.442695
        %v769 = vpow.pop %v768
        %v770 = vmul.f32 %v719, 1.442695
        %v771 = vpow.pop %v770
        %v772 = vmul.f32 %v720, 1.442695
        %v773 = vpow.pop %v772
        %v774 = vmul.f32 %v721, 1.442695
        %v775 = vpow.pop %v774
        %v776 = vmul.f32 %v722, 1.442695
        %v777 = vpow.pop %v776
        %v778 = vmul.f32 %v723, 1.442695
        %v779 = vpow.pop %v778
        %v780 = vmul.f32 %v724, 1.442695
        %v781 = vpow.pop %v780
        %v782 = vmul.f32 %v725, 1.442695
        %v783 = vpow.pop %v782
        %v784 = vmul.f32 %v726, 1.442695
        %v785 = vpow.pop %v784
        %v786 = vmul.f32 %v727, 1.442695
        %v787 = vpow.pop %v786
        %v788 = vmul.f32 %v728, 1.442695
        %v789 = vpow.pop %v788
        %v790 = vmul.f32 %v729, 1.442695
        %v791 = vpow.pop %v790
        %v792 = vmul.f32 %v730, 1.442695
        %v793 = vpow.pop %v792
        %v794 = vmul.f32 %v731, 1.442695
        %v795 = vpow.pop %v794
        %v796 = vadd.f32 %v733, 1.0
        %v797 = vadd.f32 %v735, 1.0
        %v798 = vadd.f32 %v737, 1.0
        %v799 = vadd.f32 %v739, 1.0
        %v800 = vadd.f32 %v741, 1.0
        %v801 = vadd.f32 %v743, 1.0
        %v802 = vadd.f32 %v745, 1.0
        %v803 = vadd.f32 %v747, 1.0
        %v804 = vadd.f32 %v749, 1.0
        %v805 = vadd.f32 %v751, 1.0
        %v806 = vadd.f32 %v753, 1.0
        %v807 = vadd.f32 %v755, 1.0
        %v808 = vadd.f32 %v757, 1.0
        %v809 = vadd.f32 %v759, 1.0
        %v810 = vadd.f32 %v761, 1.0
        %v811 = vadd.f32 %v763, 1.0
        %v812 = vadd.f32 %v765, 1.0
        %v813 = vadd.f32 %v767, 1.0
        %v814 = vadd.f32 %v769, 1.0
        %v815 = vadd.f32 %v771, 1.0
        %v816 = vadd.f32 %v773, 1.0
        %v817 = vadd.f32 %v775, 1.0
        %v818 = vadd.f32 %v777, 1.0
        %v819 = vadd.f32 %v779, 1.0
        %v820 = vadd.f32 %v781, 1.0
        %v821 = vadd.f32 %v783, 1.0
        %v822 = vadd.f32 %v785, 1.0
        %v823 = vadd.f32 %v787, 1.0
        %v824 = vadd.f32 %v789, 1.0
        %v825 = vadd.f32 %v791, 1.0
        %v826 = vadd.f32 %v793, 1.0
        %v827 = vadd.f32 %v795, 1.0
        %v828 = vrcp.pop %v796
        %v829 = vmul.f32 1.0, %v828
        %v830 = vrcp.pop %v797
        %v831 = vmul.f32 1.0, %v830
        %v832 = vrcp.pop %v798
        %v833 = vmul.f32 1.0, %v832
        %v834 = vrcp.pop %v799
        %v835 = vmul.f32 1.0, %v834
        %v836 = vrcp.pop %v800
        %v837 = vmul.f32 1.0, %v836
        %v838 = vrcp.pop %v801
        %v839 = vmul.f32 1.0, %v838
        %v840 = vrcp.pop %v802
        %v841 = vmul.f32 1.0, %v840
        %v842 = vrcp.pop %v803
        %v843 = vmul.f32 1.0, %v842
        %v844 = vrcp.pop %v804
        %v845 = vmul.f32 1.0, %v844
        %v846 = vrcp.pop %v805
        %v847 = vmul.f32 1.0, %v846
        %v848 = vrcp.pop %v806
        %v849 = vmul.f32 1.0, %v848
        %v850 = vrcp.pop %v807
        %v851 = vmul.f32 1.0, %v850
        %v852 = vrcp.pop %v808
        %v853 = vmul.f32 1.0, %v852
        %v854 = vrcp.pop %v809
        %v855 = vmul.f32 1.0, %v854
        %v856 = vrcp.pop %v810
        %v857 = vmul.f32 1.0, %v856
        %v858 = vrcp.pop %v811
        %v859 = vmul.f32 1.0, %v858
        %v860 = vrcp.pop %v812
        %v861 = vmul.f32 1.0, %v860
        %v862 = vrcp.pop %v813
        %v863 = vmul.f32 1.0, %v862
        %v864 = vrcp.pop %v814
        %v865 = vmul.f32 1.0, %v864
        %v866 = vrcp.pop %v815
        %v867 = vmul.f32 1.0, %v866
        %v868 = vrcp.pop %v816
        %v869 = vmul.f32 1.0, %v868
        %v870 = vrcp.pop %v817
        %v871 = vmul.f32 1.0, %v870
        %v872 = vrcp.pop %v818
        %v873 = vmul.f32 1.0, %v872
        %v874 = vrcp.pop %v819
        %v875 = vmul.f32 1.0, %v874
        %v876 = vrcp.pop %v820
        %v877 = vmul.f32 1.0, %v876
        %v878 = vrcp.pop %v821
        %v879 = vmul.f32 1.0, %v878
        %v880 = vrcp.pop %v822
        %v881 = vmul.f32 1.0, %v880
        %v882 = vrcp.pop %v823
        %v883 = vmul.f32 1.0, %v882
        %v884 = vrcp.pop %v824
        %v885 = vmul.f32 1.0, %v884
        %v886 = vrcp.pop %v825
        %v887 = vmul.f32 1.0, %v886
        %v888 = vrcp.pop %v826
        %v889 = vmul.f32 1.0, %v888
        %v890 = vrcp.pop %v827
        %v891 = vmul.f32 1.0, %v890
        %v892 = vmul.f32 %v668, %v829
        %v893 = vmul.f32 %v669, %v831
        %v894 = vmul.f32 %v670, %v833
        %v895 = vmul.f32 %v671, %v835
        %v896 = vmul.f32 %v672, %v837
        %v897 = vmul.f32 %v673, %v839
        %v898 = vmul.f32 %v674, %v841
        %v899 = vmul.f32 %v675, %v843
        %v900 = vmul.f32 %v676, %v845
        %v901 = vmul.f32 %v677, %v847
        %v902 = vmul.f32 %v678, %v849
        %v903 = vmul.f32 %v679, %v851
        %v904 = vmul.f32 %v680, %v853
        %v905 = vmul.f32 %v681, %v855
        %v906 = vmul.f32 %v682, %v857
        %v907 = vmul.f32 %v683, %v859
        %v908 = vmul.f32 %v684, %v861
        %v909 = vmul.f32 %v685, %v863
        %v910 = vmul.f32 %v686, %v865
        %v911 = vmul.f32 %v687, %v867
        %v912 = vmul.f32 %v688, %v869
        %v913 = vmul.f32 %v689, %v871
        %v914 = vmul.f32 %v690, %v873
        %v915 = vmul.f32 %v691, %v875
        %v916 = vmul.f32 %v692, %v877
        %v917 = vmul.f32 %v693, %v879
        %v918 = vmul.f32 %v694, %v881
        %v919 = vmul.f32 %v695, %v883
        %v920 = vmul.f32 %v696, %v885
        %v921 = vmul.f32 %v697, %v887
        %v922 = vmul.f32 %v698, %v889
        %v923 = vmul.f32 %v699, %v891
        %v924 = vpack.c.bf16 %v893, %v892
        %v925 = vpack.c.bf16 %v895, %v894
        %v926 = vpack.c.bf16 %v897, %v896
        %v927 = vpack.c.bf16 %v899, %v898
        %v928 = vpack.c.bf16 %v901, %v900
        %v929 = vpack.c.bf16 %v903, %v902
        %v930 = vpack.c.bf16 %v905, %v904
        %v931 = vpack.c.bf16 %v907, %v906
        %v932 = vpack.c.bf16 %v909, %v908
        %v933 = vpack.c.bf16 %v911, %v910
        %v934 = vpack.c.bf16 %v913, %v912
        %v935 = vpack.c.bf16 %v915, %v914
        %v936 = vpack.c.bf16 %v917, %v916
        %v937 = vpack.c.bf16 %v919, %v918
        %v938 = vpack.c.bf16 %v921, %v920
        %v939 = vpack.c.bf16 %v923, %v922
        %v940 = vld [vmem:[%s4] sm:$0xf]
        %s941 = scalar_lea.vmem [#allocation2], 64
        %942 = vst.msk [vmem:[%s941 + $0x8] sm:$0xff] %vm298, %v892
        %943 = vst.msk [vmem:[%s941 + $0x10] sm:$0xff] %vm298, %v893
        %944 = vst.msk [vmem:[%s941 + $0x28] sm:$0xff] %vm298, %v894
        %945 = vst.msk [vmem:[%s941 + $0x30] sm:$0xff] %vm298, %v895
        %946 = vst.msk [vmem:[%s941 + $0x48] sm:$0xff] %vm298, %v896
        %947 = vst.msk [vmem:[%s941 + $0x50] sm:$0xff] %vm298, %v897
        %948 = vst.msk [vmem:[%s941 + $0x68] sm:$0xff] %vm298, %v898
        %949 = vst.msk [vmem:[%s941 + $0x70] sm:$0xff] %vm298, %v899
        %950 = vst.msk [vmem:[%s941 + $0x88] sm:$0xff] %vm298, %v900
        %951 = vst.msk [vmem:[%s941 + $0x90] sm:$0xff] %vm298, %v901
        %952 = vst.msk [vmem:[%s941 + $0xa8] sm:$0xff] %vm298, %v902
        %953 = vst.msk [vmem:[%s941 + $0xb0] sm:$0xff] %vm298, %v903
        %954 = vst.msk [vmem:[%s941 + $0xc8] sm:$0xff] %vm298, %v904
        %955 = vst.msk [vmem:[%s941 + $0xd0] sm:$0xff] %vm298, %v905
        %956 = vst.msk [vmem:[%s941 + $0xe8] sm:$0xff] %vm298, %v906
        %957 = vst.msk [vmem:[%s941 + $0xf0] sm:$0xff] %vm298, %v907
        %958 = vst.msk [vmem:[%s941 + $0x108] sm:$0xff] %vm298, %v908
        %959 = vst.msk [vmem:[%s941 + $0x110] sm:$0xff] %vm298, %v909
        %960 = vst.msk [vmem:[%s941 + $0x128] sm:$0xff] %vm298, %v910
        %961 = vst.msk [vmem:[%s941 + $0x130] sm:$0xff] %vm298, %v911
        %962 = vst.msk [vmem:[%s941 + $0x148] sm:$0xff] %vm298, %v912
        %963 = vst.msk [vmem:[%s941 + $0x150] sm:$0xff] %vm298, %v913
        %964 = vst.msk [vmem:[%s941 + $0x168] sm:$0xff] %vm298, %v914
        %965 = vst.msk [vmem:[%s941 + $0x170] sm:$0xff] %vm298, %v915
        %966 = vst.msk [vmem:[%s941 + $0x188] sm:$0xff] %vm298, %v916
        %967 = vst.msk [vmem:[%s941 + $0x190] sm:$0xff] %vm298, %v917
        %968 = vst.msk [vmem:[%s941 + $0x1a8] sm:$0xff] %vm298, %v918
        %969 = vst.msk [vmem:[%s941 + $0x1b0] sm:$0xff] %vm298, %v919
        %970 = vst.msk [vmem:[%s941 + $0x1c8] sm:$0xff] %vm298, %v920
        %971 = vst.msk [vmem:[%s941 + $0x1d0] sm:$0xff] %vm298, %v921
        %972 = vst.msk [vmem:[%s941 + $0x1e8] sm:$0xff] %vm298, %v922
        %973 = vst.msk [vmem:[%s941 + $0x1f0] sm:$0xff] %vm298, %v923
        %v974 = vld [vmem:[#allocation2 + $0x6] sm:$0xff]
        %v975 = vld [vmem:[#allocation2 + $0xe] sm:$0xff]
        %v976 = vld [vmem:[#allocation2 + $0x26] sm:$0xff]
        %v977 = vld [vmem:[#allocation2 + $0x2e] sm:$0xff]
        %v978 = vld [vmem:[#allocation2 + $0x46] sm:$0xff]
        %v979 = vld [vmem:[#allocation2 + $0x4e] sm:$0xff]
        %v980 = vld [vmem:[#allocation2 + $0x66] sm:$0xff]
        %v981 = vld [vmem:[#allocation2 + $0x6e] sm:$0xff]
        %v982 = vld [vmem:[#allocation2 + $0x86] sm:$0xff]
        %v983 = vld [vmem:[#allocation2 + $0x8e] sm:$0xff]
        %v984 = vld [vmem:[#allocation2 + $0xa6] sm:$0xff]
        %v985 = vld [vmem:[#allocation2 + $0xae] sm:$0xff]
        %v986 = vld [vmem:[#allocation2 + $0xc6] sm:$0xff]
        %v987 = vld [vmem:[#allocation2 + $0xce] sm:$0xff]
        %v988 = vld [vmem:[#allocation2 + $0xe6] sm:$0xff]
        %v989 = vld [vmem:[#allocation2 + $0xee] sm:$0xff]
        %v990 = vld [vmem:[#allocation2 + $0x106] sm:$0xff]
        %v991 = vld [vmem:[#allocation2 + $0x10e] sm:$0xff]
        %v992 = vld [vmem:[#allocation2 + $0x126] sm:$0xff]
        %v993 = vld [vmem:[#allocation2 + $0x12e] sm:$0xff]
        %v994 = vld [vmem:[#allocation2 + $0x146] sm:$0xff]
        %v995 = vld [vmem:[#allocation2 + $0x14e] sm:$0xff]
        %v996 = vld [vmem:[#allocation2 + $0x166] sm:$0xff]
        %v997 = vld [vmem:[#allocation2 + $0x16e] sm:$0xff]
        %v998 = vld [vmem:[#allocation2 + $0x186] sm:$0xff]
        %v999 = vld [vmem:[#allocation2 + $0x18e] sm:$0xff]
        %v1000 = vld [vmem:[#allocation2 + $0x1a6] sm:$0xff]
        %v1001 = vld [vmem:[#allocation2 + $0x1ae] sm:$0xff]
        %v1002 = vld [vmem:[#allocation2 + $0x1c6] sm:$0xff]
        %v1003 = vld [vmem:[#allocation2 + $0x1ce] sm:$0xff]
        %v1004 = vld [vmem:[#allocation2 + $0x1e6] sm:$0xff]
        %v1005 = vld [vmem:[#allocation2 + $0x1ee] sm:$0xff]
        %v1006 = vld [vmem:[#allocation2 + $0x206] sm:$0xff]
        %v1007 = vld [vmem:[#allocation2 + $0x20e] sm:$0xff]
        %v1008 = vld [vmem:[#allocation2 + $0x226] sm:$0xff]
        %v1009 = vld [vmem:[#allocation2 + $0x22e] sm:$0xff]
        %v1010 = vld [vmem:[#allocation2 + $0x246] sm:$0xff]
        %v1011 = vld [vmem:[#allocation2 + $0x24e] sm:$0xff]
        %v1012 = vld [vmem:[#allocation2 + $0x266] sm:$0xff]
        %v1013 = vld [vmem:[#allocation2 + $0x26e] sm:$0xff]
        %v1014 = vld [vmem:[#allocation2 + $0x7] sm:$0xff]
        %v1015 = vld [vmem:[#allocation2 + $0xf] sm:$0xff]
        %v1016 = vld [vmem:[#allocation2 + $0x27] sm:$0xff]
        %v1017 = vld [vmem:[#allocation2 + $0x2f] sm:$0xff]
        %v1018 = vld [vmem:[#allocation2 + $0x47] sm:$0xff]
        %v1019 = vld [vmem:[#allocation2 + $0x4f] sm:$0xff]
        %v1020 = vld [vmem:[#allocation2 + $0x67] sm:$0xff]
        %v1021 = vld [vmem:[#allocation2 + $0x6f] sm:$0xff]
        %v1022 = vld [vmem:[#allocation2 + $0x87] sm:$0xff]
        %v1023 = vld [vmem:[#allocation2 + $0x8f] sm:$0xff]
        %v1024 = vld [vmem:[#allocation2 + $0xa7] sm:$0xff]
        %v1025 = vld [vmem:[#allocation2 + $0xaf] sm:$0xff]
        %v1026 = vld [vmem:[#allocation2 + $0xc7] sm:$0xff]
        %v1027 = vld [vmem:[#allocation2 + $0xcf] sm:$0xff]
        %v1028 = vld [vmem:[#allocation2 + $0xe7] sm:$0xff]
        %v1029 = vld [vmem:[#allocation2 + $0xef] sm:$0xff]
        %v1030 = vld [vmem:[#allocation2 + $0x107] sm:$0xff]
        %v1031 = vld [vmem:[#allocation2 + $0x10f] sm:$0xff]
        %v1032 = vld [vmem:[#allocation2 + $0x127] sm:$0xff]
        %v1033 = vld [vmem:[#allocation2 + $0x12f] sm:$0xff]
        %v1034 = vld [vmem:[#allocation2 + $0x147] sm:$0xff]
        %v1035 = vld [vmem:[#allocation2 + $0x14f] sm:$0xff]
        %v1036 = vld [vmem:[#allocation2 + $0x167] sm:$0xff]
        %v1037 = vld [vmem:[#allocation2 + $0x16f] sm:$0xff]
        %v1038 = vld [vmem:[#allocation2 + $0x187] sm:$0xff]
        %v1039 = vld [vmem:[#allocation2 + $0x18f] sm:$0xff]
        %v1040 = vld [vmem:[#allocation2 + $0x1a7] sm:$0xff]
        %v1041 = vld [vmem:[#allocation2 + $0x1af] sm:$0xff]
        %v1042 = vld [vmem:[#allocation2 + $0x1c7] sm:$0xff]
        %v1043 = vld [vmem:[#allocation2 + $0x1cf] sm:$0xff]
        %v1044 = vld [vmem:[#allocation2 + $0x1e7] sm:$0xff]
        %v1045 = vld [vmem:[#allocation2 + $0x1ef] sm:$0xff]
        %v1046 = vld [vmem:[#allocation2 + $0x207] sm:$0xff]
        %v1047 = vld [vmem:[#allocation2 + $0x20f] sm:$0xff]
        %v1048 = vld [vmem:[#allocation2 + $0x227] sm:$0xff]
        %v1049 = vld [vmem:[#allocation2 + $0x22f] sm:$0xff]
        %v1050 = vld [vmem:[#allocation2 + $0x247] sm:$0xff]
        %v1051 = vld [vmem:[#allocation2 + $0x24f] sm:$0xff]
        %v1052 = vld [vmem:[#allocation2 + $0x267] sm:$0xff]
        %v1053 = vld [vmem:[#allocation2 + $0x26f] sm:$0xff]
        %v1054 = vmax.f32 %v974, %v1014
        %v1055 = vmax.f32 %v975, %v1015
        %v1056 = vmax.f32 %v976, %v1016
        %v1057 = vmax.f32 %v977, %v1017
        %v1058 = vmax.f32 %v978, %v1018
        %v1059 = vmax.f32 %v979, %v1019
        %v1060 = vmax.f32 %v980, %v1020
        %v1061 = vmax.f32 %v981, %v1021
        %v1062 = vmax.f32 %v982, %v1022
        %v1063 = vmax.f32 %v983, %v1023
        %v1064 = vmax.f32 %v984, %v1024
        %v1065 = vmax.f32 %v985, %v1025
        %v1066 = vmax.f32 %v986, %v1026
        %v1067 = vmax.f32 %v987, %v1027
        %v1068 = vmax.f32 %v988, %v1028
        %v1069 = vmax.f32 %v989, %v1029
        %v1070 = vmax.f32 %v990, %v1030
        %v1071 = vmax.f32 %v991, %v1031
        %v1072 = vmax.f32 %v992, %v1032
        %v1073 = vmax.f32 %v993, %v1033
        %v1074 = vmax.f32 %v994, %v1034
        %v1075 = vmax.f32 %v995, %v1035
        %v1076 = vmax.f32 %v996, %v1036
        %v1077 = vmax.f32 %v997, %v1037
        %v1078 = vmax.f32 %v998, %v1038
        %v1079 = vmax.f32 %v999, %v1039
        %v1080 = vmax.f32 %v1000, %v1040
        %v1081 = vmax.f32 %v1001, %v1041
        %v1082 = vmax.f32 %v1002, %v1042
        %v1083 = vmax.f32 %v1003, %v1043
        %v1084 = vmax.f32 %v1004, %v1044
        %v1085 = vmax.f32 %v1005, %v1045
        %v1086 = vmax.f32 %v1006, %v1046
        %v1087 = vmax.f32 %v1007, %v1047
        %v1088 = vmax.f32 %v1008, %v1048
        %v1089 = vmax.f32 %v1009, %v1049
        %v1090 = vmax.f32 %v1010, %v1050
        %v1091 = vmax.f32 %v1011, %v1051
        %v1092 = vmax.f32 %v1012, %v1052
        %v1093 = vmax.f32 %v1013, %v1053
        %v1094 = vld [vmem:[#allocation2 + $0x8] sm:$0xff]
        %v1095 = vld [vmem:[#allocation2 + $0x10] sm:$0xff]
        %v1096 = vld [vmem:[#allocation2 + $0x28] sm:$0xff]
        %v1097 = vld [vmem:[#allocation2 + $0x30] sm:$0xff]
        %v1098 = vld [vmem:[#allocation2 + $0x48] sm:$0xff]
        %v1099 = vld [vmem:[#allocation2 + $0x50] sm:$0xff]
        %v1100 = vld [vmem:[#allocation2 + $0x68] sm:$0xff]
        %v1101 = vld [vmem:[#allocation2 + $0x70] sm:$0xff]
        %v1102 = vld [vmem:[#allocation2 + $0x88] sm:$0xff]
        %v1103 = vld [vmem:[#allocation2 + $0x90] sm:$0xff]
        %v1104 = vld [vmem:[#allocation2 + $0xa8] sm:$0xff]
        %v1105 = vld [vmem:[#allocation2 + $0xb0] sm:$0xff]
        %v1106 = vld [vmem:[#allocation2 + $0xc8] sm:$0xff]
        %v1107 = vld [vmem:[#allocation2 + $0xd0] sm:$0xff]
        %v1108 = vld [vmem:[#allocation2 + $0xe8] sm:$0xff]
        %v1109 = vld [vmem:[#allocation2 + $0xf0] sm:$0xff]
        %v1110 = vld [vmem:[#allocation2 + $0x108] sm:$0xff]
        %v1111 = vld [vmem:[#allocation2 + $0x110] sm:$0xff]
        %v1112 = vld [vmem:[#allocation2 + $0x128] sm:$0xff]
        %v1113 = vld [vmem:[#allocation2 + $0x130] sm:$0xff]
        %v1114 = vld [vmem:[#allocation2 + $0x148] sm:$0xff]
        %v1115 = vld [vmem:[#allocation2 + $0x150] sm:$0xff]
        %v1116 = vld [vmem:[#allocation2 + $0x168] sm:$0xff]
        %v1117 = vld [vmem:[#allocation2 + $0x170] sm:$0xff]
        %v1118 = vld [vmem:[#allocation2 + $0x188] sm:$0xff]
        %v1119 = vld [vmem:[#allocation2 + $0x190] sm:$0xff]
        %v1120 = vld [vmem:[#allocation2 + $0x1a8] sm:$0xff]
        %v1121 = vld [vmem:[#allocation2 + $0x1b0] sm:$0xff]
        %v1122 = vld [vmem:[#allocation2 + $0x1c8] sm:$0xff]
        %v1123 = vld [vmem:[#allocation2 + $0x1d0] sm:$0xff]
        %v1124 = vld [vmem:[#allocation2 + $0x1e8] sm:$0xff]
        %v1125 = vld [vmem:[#allocation2 + $0x1f0] sm:$0xff]
        %v1126 = vld [vmem:[#allocation2 + $0x208] sm:$0xff]
        %v1127 = vld [vmem:[#allocation2 + $0x210] sm:$0xff]
        %v1128 = vld [vmem:[#allocation2 + $0x228] sm:$0xff]
        %v1129 = vld [vmem:[#allocation2 + $0x230] sm:$0xff]
        %v1130 = vld [vmem:[#allocation2 + $0x248] sm:$0xff]
        %v1131 = vld [vmem:[#allocation2 + $0x250] sm:$0xff]
        %v1132 = vld [vmem:[#allocation2 + $0x268] sm:$0xff]
        %v1133 = vld [vmem:[#allocation2 + $0x270] sm:$0xff]
        %v1134 = vmax.f32 %v1054, %v1094
        %v1135 = vmax.f32 %v1055, %v1095
        %v1136 = vmax.f32 %v1056, %v1096
        %v1137 = vmax.f32 %v1057, %v1097
        %v1138 = vmax.f32 %v1058, %v1098
        %v1139 = vmax.f32 %v1059, %v1099
        %v1140 = vmax.f32 %v1060, %v1100
        %v1141 = vmax.f32 %v1061, %v1101
        %v1142 = vmax.f32 %v1062, %v1102
        %v1143 = vmax.f32 %v1063, %v1103
        %v1144 = vmax.f32 %v1064, %v1104
        %v1145 = vmax.f32 %v1065, %v1105
        %v1146 = vmax.f32 %v1066, %v1106
        %v1147 = vmax.f32 %v1067, %v1107
        %v1148 = vmax.f32 %v1068, %v1108
        %v1149 = vmax.f32 %v1069, %v1109
        %v1150 = vmax.f32 %v1070, %v1110
        %v1151 = vmax.f32 %v1071, %v1111
        %v1152 = vmax.f32 %v1072, %v1112
        %v1153 = vmax.f32 %v1073, %v1113
        %v1154 = vmax.f32 %v1074, %v1114
        %v1155 = vmax.f32 %v1075, %v1115
        %v1156 = vmax.f32 %v1076, %v1116
        %v1157 = vmax.f32 %v1077, %v1117
        %v1158 = vmax.f32 %v1078, %v1118
        %v1159 = vmax.f32 %v1079, %v1119
        %v1160 = vmax.f32 %v1080, %v1120
        %v1161 = vmax.f32 %v1081, %v1121
        %v1162 = vmax.f32 %v1082, %v1122
        %v1163 = vmax.f32 %v1083, %v1123
        %v1164 = vmax.f32 %v1084, %v1124
        %v1165 = vmax.f32 %v1085, %v1125
        %v1166 = vmax.f32 %v1086, %v1126
        %v1167 = vmax.f32 %v1087, %v1127
        %v1168 = vmax.f32 %v1088, %v1128
        %v1169 = vmax.f32 %v1089, %v1129
        %v1170 = vmax.f32 %v1090, %v1130
        %v1171 = vmax.f32 %v1091, %v1131
        %v1172 = vmax.f32 %v1092, %v1132
        %v1173 = vmax.f32 %v1093, %v1133
        %v1174 = vld [vmem:[#allocation2 + $0x9] sm:$0xff]
        %v1175 = vld [vmem:[#allocation2 + $0x11] sm:$0xff]
        %v1176 = vld [vmem:[#allocation2 + $0x29] sm:$0xff]
        %v1177 = vld [vmem:[#allocation2 + $0x31] sm:$0xff]
        %v1178 = vld [vmem:[#allocation2 + $0x49] sm:$0xff]
        %v1179 = vld [vmem:[#allocation2 + $0x51] sm:$0xff]
        %v1180 = vld [vmem:[#allocation2 + $0x69] sm:$0xff]
        %v1181 = vld [vmem:[#allocation2 + $0x71] sm:$0xff]
        %v1182 = vld [vmem:[#allocation2 + $0x89] sm:$0xff]
        %v1183 = vld [vmem:[#allocation2 + $0x91] sm:$0xff]
        %v1184 = vld [vmem:[#allocation2 + $0xa9] sm:$0xff]
        %v1185 = vld [vmem:[#allocation2 + $0xb1] sm:$0xff]
        %v1186 = vld [vmem:[#allocation2 + $0xc9] sm:$0xff]
        %v1187 = vld [vmem:[#allocation2 + $0xd1] sm:$0xff]
        %v1188 = vld [vmem:[#allocation2 + $0xe9] sm:$0xff]
        %v1189 = vld [vmem:[#allocation2 + $0xf1] sm:$0xff]
        %v1190 = vld [vmem:[#allocation2 + $0x109] sm:$0xff]
        %v1191 = vld [vmem:[#allocation2 + $0x111] sm:$0xff]
        %v1192 = vld [vmem:[#allocation2 + $0x129] sm:$0xff]
        %v1193 = vld [vmem:[#allocation2 + $0x131] sm:$0xff]
        %v1194 = vld [vmem:[#allocation2 + $0x149] sm:$0xff]
        %v1195 = vld [vmem:[#allocation2 + $0x151] sm:$0xff]
        %v1196 = vld [vmem:[#allocation2 + $0x169] sm:$0xff]
        %v1197 = vld [vmem:[#allocation2 + $0x171] sm:$0xff]
        %v1198 = vld [vmem:[#allocation2 + $0x189] sm:$0xff]
        %v1199 = vld [vmem:[#allocation2 + $0x191] sm:$0xff]
        %v1200 = vld [vmem:[#allocation2 + $0x1a9] sm:$0xff]
        %v1201 = vld [vmem:[#allocation2 + $0x1b1] sm:$0xff]
        %v1202 = vld [vmem:[#allocation2 + $0x1c9] sm:$0xff]
        %v1203 = vld [vmem:[#allocation2 + $0x1d1] sm:$0xff]
        %v1204 = vld [vmem:[#allocation2 + $0x1e9] sm:$0xff]
        %v1205 = vld [vmem:[#allocation2 + $0x1f1] sm:$0xff]
        %v1206 = vld [vmem:[#allocation2 + $0x209] sm:$0xff]
        %v1207 = vld [vmem:[#allocation2 + $0x211] sm:$0xff]
        %v1208 = vld [vmem:[#allocation2 + $0x229] sm:$0xff]
        %v1209 = vld [vmem:[#allocation2 + $0x231] sm:$0xff]
        %v1210 = vld [vmem:[#allocation2 + $0x249] sm:$0xff]
        %v1211 = vld [vmem:[#allocation2 + $0x251] sm:$0xff]
        %v1212 = vld [vmem:[#allocation2 + $0x269] sm:$0xff]
        %v1213 = vld [vmem:[#allocation2 + $0x271] sm:$0xff]
        %v1214 = vmax.f32 %v1134, %v1174
        %v1215 = vmax.f32 %v1135, %v1175
        %v1216 = vmax.f32 %v1136, %v1176
        %v1217 = vmax.f32 %v1137, %v1177
        %v1218 = vmax.f32 %v1138, %v1178
        %v1219 = vmax.f32 %v1139, %v1179
        %v1220 = vmax.f32 %v1140, %v1180
        %v1221 = vmax.f32 %v1141, %v1181
        %v1222 = vmax.f32 %v1142, %v1182
        %v1223 = vmax.f32 %v1143, %v1183
        %v1224 = vmax.f32 %v1144, %v1184
        %v1225 = vmax.f32 %v1145, %v1185
        %v1226 = vmax.f32 %v1146, %v1186
        %v1227 = vmax.f32 %v1147, %v1187
        %v1228 = vmax.f32 %v1148, %v1188
        %v1229 = vmax.f32 %v1149, %v1189
        %v1230 = vmax.f32 %v1150, %v1190
        %v1231 = vmax.f32 %v1151, %v1191
        %v1232 = vmax.f32 %v1152, %v1192
        %v1233 = vmax.f32 %v1153, %v1193
        %v1234 = vmax.f32 %v1154, %v1194
        %v1235 = vmax.f32 %v1155, %v1195
        %v1236 = vmax.f32 %v1156, %v1196
        %v1237 = vmax.f32 %v1157, %v1197
        %v1238 = vmax.f32 %v1158, %v1198
        %v1239 = vmax.f32 %v1159, %v1199
        %v1240 = vmax.f32 %v1160, %v1200
        %v1241 = vmax.f32 %v1161, %v1201
        %v1242 = vmax.f32 %v1162, %v1202
        %v1243 = vmax.f32 %v1163, %v1203
        %v1244 = vmax.f32 %v1164, %v1204
        %v1245 = vmax.f32 %v1165, %v1205
        %v1246 = vmax.f32 %v1166, %v1206
        %v1247 = vmax.f32 %v1167, %v1207
        %v1248 = vmax.f32 %v1168, %v1208
        %v1249 = vmax.f32 %v1169, %v1209
        %v1250 = vmax.f32 %v1170, %v1210
        %v1251 = vmax.f32 %v1171, %v1211
        %v1252 = vmax.f32 %v1172, %v1212
        %v1253 = vmax.f32 %v1173, %v1213
        %v1254 = vld [vmem:[#allocation2 + $0xa] sm:$0xff]
        %v1255 = vld [vmem:[#allocation2 + $0x12] sm:$0xff]
        %v1256 = vld [vmem:[#allocation2 + $0x2a] sm:$0xff]
        %v1257 = vld [vmem:[#allocation2 + $0x32] sm:$0xff]
        %v1258 = vld [vmem:[#allocation2 + $0x4a] sm:$0xff]
        %v1259 = vld [vmem:[#allocation2 + $0x52] sm:$0xff]
        %v1260 = vld [vmem:[#allocation2 + $0x6a] sm:$0xff]
        %v1261 = vld [vmem:[#allocation2 + $0x72] sm:$0xff]
        %v1262 = vld [vmem:[#allocation2 + $0x8a] sm:$0xff]
        %v1263 = vld [vmem:[#allocation2 + $0x92] sm:$0xff]
        %v1264 = vld [vmem:[#allocation2 + $0xaa] sm:$0xff]
        %v1265 = vld [vmem:[#allocation2 + $0xb2] sm:$0xff]
        %v1266 = vld [vmem:[#allocation2 + $0xca] sm:$0xff]
        %v1267 = vld [vmem:[#allocation2 + $0xd2] sm:$0xff]
        %v1268 = vld [vmem:[#allocation2 + $0xea] sm:$0xff]
        %v1269 = vld [vmem:[#allocation2 + $0xf2] sm:$0xff]
        %v1270 = vld [vmem:[#allocation2 + $0x10a] sm:$0xff]
        %v1271 = vld [vmem:[#allocation2 + $0x112] sm:$0xff]
        %v1272 = vld [vmem:[#allocation2 + $0x12a] sm:$0xff]
        %v1273 = vld [vmem:[#allocation2 + $0x132] sm:$0xff]
        %v1274 = vld [vmem:[#allocation2 + $0x14a] sm:$0xff]
        %v1275 = vld [vmem:[#allocation2 + $0x152] sm:$0xff]
        %v1276 = vld [vmem:[#allocation2 + $0x16a] sm:$0xff]
        %v1277 = vld [vmem:[#allocation2 + $0x172] sm:$0xff]
        %v1278 = vld [vmem:[#allocation2 + $0x18a] sm:$0xff]
        %v1279 = vld [vmem:[#allocation2 + $0x192] sm:$0xff]
        %v1280 = vld [vmem:[#allocation2 + $0x1aa] sm:$0xff]
        %v1281 = vld [vmem:[#allocation2 + $0x1b2] sm:$0xff]
        %v1282 = vld [vmem:[#allocation2 + $0x1ca] sm:$0xff]
        %v1283 = vld [vmem:[#allocation2 + $0x1d2] sm:$0xff]
        %v1284 = vld [vmem:[#allocation2 + $0x1ea] sm:$0xff]
        %v1285 = vld [vmem:[#allocation2 + $0x1f2] sm:$0xff]
        %v1286 = vld [vmem:[#allocation2 + $0x20a] sm:$0xff]
        %v1287 = vld [vmem:[#allocation2 + $0x212] sm:$0xff]
        %v1288 = vld [vmem:[#allocation2 + $0x22a] sm:$0xff]
        %v1289 = vld [vmem:[#allocation2 + $0x232] sm:$0xff]
        %v1290 = vld [vmem:[#allocation2 + $0x24a] sm:$0xff]
        %v1291 = vld [vmem:[#allocation2 + $0x252] sm:$0xff]
        %v1292 = vld [vmem:[#allocation2 + $0x26a] sm:$0xff]
        %v1293 = vld [vmem:[#allocation2 + $0x272] sm:$0xff]
        %v1294 = vmax.f32 %v1214, %v1254
        %v1295 = vmax.f32 %v1215, %v1255
        %v1296 = vmax.f32 %v1216, %v1256
        %v1297 = vmax.f32 %v1217, %v1257
        %v1298 = vmax.f32 %v1218, %v1258
        %v1299 = vmax.f32 %v1219, %v1259
        %v1300 = vmax.f32 %v1220, %v1260
        %v1301 = vmax.f32 %v1221, %v1261
        %v1302 = vmax.f32 %v1222, %v1262
        %v1303 = vmax.f32 %v1223, %v1263
        %v1304 = vmax.f32 %v1224, %v1264
        %v1305 = vmax.f32 %v1225, %v1265
        %v1306 = vmax.f32 %v1226, %v1266
        %v1307 = vmax.f32 %v1227, %v1267
        %v1308 = vmax.f32 %v1228, %v1268
        %v1309 = vmax.f32 %v1229, %v1269
        %v1310 = vmax.f32 %v1230, %v1270
        %v1311 = vmax.f32 %v1231, %v1271
        %v1312 = vmax.f32 %v1232, %v1272
        %v1313 = vmax.f32 %v1233, %v1273
        %v1314 = vmax.f32 %v1234, %v1274
        %v1315 = vmax.f32 %v1235, %v1275
        %v1316 = vmax.f32 %v1236, %v1276
        %v1317 = vmax.f32 %v1237, %v1277
        %v1318 = vmax.f32 %v1238, %v1278
        %v1319 = vmax.f32 %v1239, %v1279
        %v1320 = vmax.f32 %v1240, %v1280
        %v1321 = vmax.f32 %v1241, %v1281
        %v1322 = vmax.f32 %v1242, %v1282
        %v1323 = vmax.f32 %v1243, %v1283
        %v1324 = vmax.f32 %v1244, %v1284
        %v1325 = vmax.f32 %v1245, %v1285
        %v1326 = vmax.f32 %v1246, %v1286
        %v1327 = vmax.f32 %v1247, %v1287
        %v1328 = vmax.f32 %v1248, %v1288
        %v1329 = vmax.f32 %v1249, %v1289
        %v1330 = vmax.f32 %v1250, %v1290
        %v1331 = vmax.f32 %v1251, %v1291
        %v1332 = vmax.f32 %v1252, %v1292
        %v1333 = vmax.f32 %v1253, %v1293
        %v1334 = vmax.f32 %v1294, %v1296
        %v1335 = vmax.f32 %v1295, %v1297
        %v1336 = vmax.f32 %v1296, %v1298
        %v1337 = vmax.f32 %v1297, %v1299
        %v1338 = vmax.f32 %v1298, %v1300
        %v1339 = vmax.f32 %v1299, %v1301
        %v1340 = vmax.f32 %v1300, %v1302
        %v1341 = vmax.f32 %v1301, %v1303
        %v1342 = vmax.f32 %v1302, %v1304
        %v1343 = vmax.f32 %v1303, %v1305
        %v1344 = vmax.f32 %v1304, %v1306
        %v1345 = vmax.f32 %v1305, %v1307
        %v1346 = vmax.f32 %v1306, %v1308
        %v1347 = vmax.f32 %v1307, %v1309
        %v1348 = vmax.f32 %v1308, %v1310
        %v1349 = vmax.f32 %v1309, %v1311
        %v1350 = vmax.f32 %v1310, %v1312
        %v1351 = vmax.f32 %v1311, %v1313
        %v1352 = vmax.f32 %v1312, %v1314
        %v1353 = vmax.f32 %v1313, %v1315
        %v1354 = vmax.f32 %v1314, %v1316
        %v1355 = vmax.f32 %v1315, %v1317
        %v1356 = vmax.f32 %v1316, %v1318
        %v1357 = vmax.f32 %v1317, %v1319
        %v1358 = vmax.f32 %v1318, %v1320
        %v1359 = vmax.f32 %v1319, %v1321
        %v1360 = vmax.f32 %v1320, %v1322
        %v1361 = vmax.f32 %v1321, %v1323
        %v1362 = vmax.f32 %v1322, %v1324
        %v1363 = vmax.f32 %v1323, %v1325
        %v1364 = vmax.f32 %v1324, %v1326
        %v1365 = vmax.f32 %v1325, %v1327
        %v1366 = vmax.f32 %v1334, %v1298
        %v1367 = vmax.f32 %v1335, %v1299
        %v1368 = vmax.f32 %v1336, %v1300
        %v1369 = vmax.f32 %v1337, %v1301
        %v1370 = vmax.f32 %v1338, %v1302
        %v1371 = vmax.f32 %v1339, %v1303
        %v1372 = vmax.f32 %v1340, %v1304
        %v1373 = vmax.f32 %v1341, %v1305
        %v1374 = vmax.f32 %v1342, %v1306
        %v1375 = vmax.f32 %v1343, %v1307
        %v1376 = vmax.f32 %v1344, %v1308
        %v1377 = vmax.f32 %v1345, %v1309
        %v1378 = vmax.f32 %v1346, %v1310
        %v1379 = vmax.f32 %v1347, %v1311
        %v1380 = vmax.f32 %v1348, %v1312
        %v1381 = vmax.f32 %v1349, %v1313
        %v1382 = vmax.f32 %v1350, %v1314
        %v1383 = vmax.f32 %v1351, %v1315
        %v1384 = vmax.f32 %v1352, %v1316
        %v1385 = vmax.f32 %v1353, %v1317
        %v1386 = vmax.f32 %v1354, %v1318
        %v1387 = vmax.f32 %v1355, %v1319
        %v1388 = vmax.f32 %v1356, %v1320
        %v1389 = vmax.f32 %v1357, %v1321
        %v1390 = vmax.f32 %v1358, %v1322
        %v1391 = vmax.f32 %v1359, %v1323
        %v1392 = vmax.f32 %v1360, %v1324
        %v1393 = vmax.f32 %v1361, %v1325
        %v1394 = vmax.f32 %v1362, %v1326
        %v1395 = vmax.f32 %v1363, %v1327
        %v1396 = vmax.f32 %v1364, %v1328
        %v1397 = vmax.f32 %v1365, %v1329
        %v1398 = vmax.f32 %v1366, %v1300
        %v1399 = vmax.f32 %v1367, %v1301
        %v1400 = vmax.f32 %v1368, %v1302
        %v1401 = vmax.f32 %v1369, %v1303
        %v1402 = vmax.f32 %v1370, %v1304
        %v1403 = vmax.f32 %v1371, %v1305
        %v1404 = vmax.f32 %v1372, %v1306
        %v1405 = vmax.f32 %v1373, %v1307
        %v1406 = vmax.f32 %v1374, %v1308
        %v1407 = vmax.f32 %v1375, %v1309
        %v1408 = vmax.f32 %v1376, %v1310
        %v1409 = vmax.f32 %v1377, %v1311
        %v1410 = vmax.f32 %v1378, %v1312
        %v1411 = vmax.f32 %v1379, %v1313
        %v1412 = vmax.f32 %v1380, %v1314
        %v1413 = vmax.f32 %v1381, %v1315
        %v1414 = vmax.f32 %v1382, %v1316
        %v1415 = vmax.f32 %v1383, %v1317
        %v1416 = vmax.f32 %v1384, %v1318
        %v1417 = vmax.f32 %v1385, %v1319
        %v1418 = vmax.f32 %v1386, %v1320
        %v1419 = vmax.f32 %v1387, %v1321
        %v1420 = vmax.f32 %v1388, %v1322
        %v1421 = vmax.f32 %v1389, %v1323
        %v1422 = vmax.f32 %v1390, %v1324
        %v1423 = vmax.f32 %v1391, %v1325
        %v1424 = vmax.f32 %v1392, %v1326
        %v1425 = vmax.f32 %v1393, %v1327
        %v1426 = vmax.f32 %v1394, %v1328
        %v1427 = vmax.f32 %v1395, %v1329
        %v1428 = vmax.f32 %v1396, %v1330
        %v1429 = vmax.f32 %v1397, %v1331
        %v1430 = vmax.f32 %v1398, %v1302
        %v1431 = vmax.f32 %v1399, %v1303
        %v1432 = vmax.f32 %v1400, %v1304
        %v1433 = vmax.f32 %v1401, %v1305
        %v1434 = vmax.f32 %v1402, %v1306
        %v1435 = vmax.f32 %v1403, %v1307
        %v1436 = vmax.f32 %v1404, %v1308
        %v1437 = vmax.f32 %v1405, %v1309
        %v1438 = vmax.f32 %v1406, %v1310
        %v1439 = vmax.f32 %v1407, %v1311
        %v1440 = vmax.f32 %v1408, %v1312
        %v1441 = vmax.f32 %v1409, %v1313
        %v1442 = vmax.f32 %v1410, %v1314
        %v1443 = vmax.f32 %v1411, %v1315
        %v1444 = vmax.f32 %v1412, %v1316
        %v1445 = vmax.f32 %v1413, %v1317
        %v1446 = vmax.f32 %v1414, %v1318
        %v1447 = vmax.f32 %v1415, %v1319
        %v1448 = vmax.f32 %v1416, %v1320
        %v1449 = vmax.f32 %v1417, %v1321
        %v1450 = vmax.f32 %v1418, %v1322
        %v1451 = vmax.f32 %v1419, %v1323
        %v1452 = vmax.f32 %v1420, %v1324
        %v1453 = vmax.f32 %v1421, %v1325
        %v1454 = vmax.f32 %v1422, %v1326
        %v1455 = vmax.f32 %v1423, %v1327
        %v1456 = vmax.f32 %v1424, %v1328
        %v1457 = vmax.f32 %v1425, %v1329
        %v1458 = vmax.f32 %v1426, %v1330
        %v1459 = vmax.f32 %v1427, %v1331
        %v1460 = vmax.f32 %v1428, %v1332
        %v1461 = vmax.f32 %v1429, %v1333
        %v1462 = vpack.c.bf16 %v1431, %v1430
        %v1463 = vpack.c.bf16 %v1433, %v1432
        %v1464 = vpack.c.bf16 %v1435, %v1434
        %v1465 = vpack.c.bf16 %v1437, %v1436
        %v1466 = vpack.c.bf16 %v1439, %v1438
        %v1467 = vpack.c.bf16 %v1441, %v1440
        %v1468 = vpack.c.bf16 %v1443, %v1442
        %v1469 = vpack.c.bf16 %v1445, %v1444
        %v1470 = vpack.c.bf16 %v1447, %v1446
        %v1471 = vpack.c.bf16 %v1449, %v1448
        %v1472 = vpack.c.bf16 %v1451, %v1450
        %v1473 = vpack.c.bf16 %v1453, %v1452
        %v1474 = vpack.c.bf16 %v1455, %v1454
        %v1475 = vpack.c.bf16 %v1457, %v1456
        %v1476 = vpack.c.bf16 %v1459, %v1458
        %v1477 = vpack.c.bf16 %v1461, %v1460
        %s1478 = scalar_lea.vmem %s4, 4
        %v1479 = vld [vmem:[%s1478] sm:$0xf]
        %v1481 = vsel %vm298, %v1462, 0
        %v1484 = vsel %vm298, %v1463, 0
        %v1487 = vsel %vm298, %v1464, 0
        %v1490 = vsel %vm298, %v1465, 0
        %v1493 = vsel %vm298, %v1466, 0
        %v1496 = vsel %vm298, %v1467, 0
        %v1499 = vsel %vm298, %v1468, 0
        %v1502 = vsel %vm298, %v1469, 0
        %v1505 = vsel %vm298, %v1470, 0
        %v1508 = vsel %vm298, %v1471, 0
        %v1511 = vsel %vm298, %v1472, 0
        %v1514 = vsel %vm298, %v1473, 0
        %v1517 = vsel %vm298, %v1474, 0
        %v1520 = vsel %vm298, %v1475, 0
        %v1523 = vsel %vm298, %v1476, 0
        %v1526 = vsel %vm298, %v1477, 0
        %vm1528 = vcmask 1043456
        %v1530 = vsel %vm1528, %v1479, 0
        %1532 = vmatprep.subr.bf16.mxu0 0
        %1533 = vmatpush1.bf16.msra.mxu0 %v1530
        %1534 = vmatprep.subr.bf16.mxu0 0
        %1535 = vmatpush1.bf16.msra.mxu0 0
        %1536 = vmatprep.subr.bf16.mxu0 0
        %1537 = vmatpush1.bf16.msra.mxu0 0
        %1538 = vmatprep.subr.bf16.mxu0 0
        %1539 = vmatpush1.bf16.msra.mxu0 0
        %1540 = vmatprep.subr.bf16.mxu0 0
        %1541 = vmatpush1.bf16.msra.mxu0 0
        %1542 = vmatprep.subr.bf16.mxu0 0
        %1543 = vmatpush1.bf16.msra.mxu0 0
        %1544 = vmatprep.subr.bf16.mxu0 0
        %1545 = vmatpush1.bf16.msra.mxu0 0
        %1546 = vmatprep.subr.bf16.mxu0 0
        %1547 = vmatpush1.bf16.msra.mxu0 0
        %1548 = vmatprep.subr.bf16.mxu0 0
        %1549 = vmatpush1.bf16.msra.mxu0 0
        %1550 = vmatprep.subr.bf16.mxu0 0
        %1551 = vmatpush1.bf16.msra.mxu0 0
        %1552 = vmatprep.subr.bf16.mxu0 0
        %1553 = vmatpush1.bf16.msra.mxu0 0
        %1554 = vmatprep.subr.bf16.mxu0 0
        %1555 = vmatpush1.bf16.msra.mxu0 0
        %1556 = vmatprep.subr.bf16.mxu0 0
        %1557 = vmatpush1.bf16.msra.mxu0 0
        %1558 = vmatprep.subr.bf16.mxu0 0
        %1559 = vmatpush1.bf16.msra.mxu0 0
        %1560 = vmatprep.subr.bf16.mxu0 0
        %1561 = vmatpush1.bf16.msra.mxu0 0
        %1562 = vmatprep.subr.bf16.mxu0 0
        %1563 = vmatpush1.bf16.msra.mxu0 0
        %1564 = vmatprep.mubr.bf16.mxu0 0
        %1565 = vmatmul.mubr.bf16.gmra.mrb[0].mxu0 %v1481
        %v1566 = vpop.f32.mrb[0].mxu0
        %v1567 = vadd.f32 0.0, %v1566
        %v1568 = vpop.f32.mrb[0].mxu0
        %v1569 = vpop.f32.mrb[0].mxu0
        %v1570 = vadd.f32 0.0, %v1569
        %v1571 = vpop.f32.mrb[0].mxu0
        %1572 = vmatprep.mubr.bf16.mxu0 0
        %1573 = vmatmul.mubr.bf16.gmra.mrb[0].mxu0 %v1484
        %v1574 = vpop.f32.mrb[0].mxu0
        %v1575 = vadd.f32 0.0, %v1574
        %v1576 = vpop.f32.mrb[0].mxu0
        %v1577 = vpop.f32.mrb[0].mxu0
        %v1578 = vadd.f32 0.0, %v1577
        %v1579 = vpop.f32.mrb[0].mxu0
        %1580 = vmatprep.mubr.bf16.mxu0 0
        %1581 = vmatmul.mubr.bf16.gmra.mrb[0].mxu0 %v1487
        %v1582 = vpop.f32.mrb[0].mxu0
        %v1583 = vadd.f32 0.0, %v1582
        %v1584 = vpop.f32.mrb[0].mxu0
        %v1585 = vpop.f32.mrb[0].mxu0
        %v1586 = vadd.f32 0.0, %v1585
        %v1587 = vpop.f32.mrb[0].mxu0
        %1588 = vmatprep.mubr.bf16.mxu0 0
        %1589 = vmatmul.mubr.bf16.gmra.mrb[0].mxu0 %v1490
        %v1590 = vpop.f32.mrb[0].mxu0
        %v1591 = vadd.f32 0.0, %v1590
        %v1592 = vpop.f32.mrb[0].mxu0
        %v1593 = vpop.f32.mrb[0].mxu0
        %v1594 = vadd.f32 0.0, %v1593
        %v1595 = vpop.f32.mrb[0].mxu0
        %1596 = vmatprep.mubr.bf16.mxu0 0
        %1597 = vmatmul.mubr.bf16.gmra.mrb[0].mxu0 %v1493
        %v1598 = vpop.f32.mrb[0].mxu0
        %v1599 = vadd.f32 0.0, %v1598
        %v1600 = vpop.f32.mrb[0].mxu0
        %v1601 = vpop.f32.mrb[0].mxu0
        %v1602 = vadd.f32 0.0, %v1601
        %v1603 = vpop.f32.mrb[0].mxu0
        %1604 = vmatprep.mubr.bf16.mxu0 0
        %1605 = vmatmul.mubr.bf16.gmra.mrb[0].mxu0 %v1496
        %v1606 = vpop.f32.mrb[0].mxu0
        %v1607 = vadd.f32 0.0, %v1606
        %v1608 = vpop.f32.mrb[0].mxu0
        %v1609 = vpop.f32.mrb[0].mxu0
        %v1610 = vadd.f32 0.0, %v1609
        %v1611 = vpop.f32.mrb[0].mxu0
        %1612 = vmatprep.mubr.bf16.mxu0 0
        %1613 = vmatmul.mubr.bf16.gmra.mrb[0].mxu0 %v1499
        %v1614 = vpop.f32.mrb[0].mxu0
        %v1615 = vadd.f32 0.0, %v1614
        %v1616 = vpop.f32.mrb[0].mxu0
        %v1617 = vpop.f32.mrb[0].mxu0
        %v1618 = vadd.f32 0.0, %v1617
        %v1619 = vpop.f32.mrb[0].mxu0
        %1620 = vmatprep.mubr.bf16.mxu0 0
        %1621 = vmatmul.mubr.bf16.gmra.mrb[0].mxu0 %v1502
        %v1622 = vpop.f32.mrb[0].mxu0
        %v1623 = vadd.f32 0.0, %v1622
        %v1624 = vpop.f32.mrb[0].mxu0
        %v1625 = vpop.f32.mrb[0].mxu0
        %v1626 = vadd.f32 0.0, %v1625
        %v1627 = vpop.f32.mrb[0].mxu0
        %1628 = vmatprep.mubr.bf16.mxu0 0
        %1629 = vmatmul.mubr.bf16.gmra.mrb[0].mxu0 %v1505
        %v1630 = vpop.f32.mrb[0].mxu0
        %v1631 = vadd.f32 0.0, %v1630
        %v1632 = vpop.f32.mrb[0].mxu0
        %v1633 = vpop.f32.mrb[0].mxu0
        %v1634 = vadd.f32 0.0, %v1633
        %v1635 = vpop.f32.mrb[0].mxu0
        %1636 = vmatprep.mubr.bf16.mxu0 0
        %1637 = vmatmul.mubr.bf16.gmra.mrb[0].mxu0 %v1508
        %v1638 = vpop.f32.mrb[0].mxu0
        %v1639 = vadd.f32 0.0, %v1638
        %v1640 = vpop.f32.mrb[0].mxu0
        %v1641 = vpop.f32.mrb[0].mxu0
        %v1642 = vadd.f32 0.0, %v1641
        %v1643 = vpop.f32.mrb[0].mxu0
        %1644 = vmatprep.mubr.bf16.mxu0 0
        %1645 = vmatmul.mubr.bf16.gmra.mrb[0].mxu0 %v1511
        %v1646 = vpop.f32.mrb[0].mxu0
        %v1647 = vadd.f32 0.0, %v1646
        %v1648 = vpop.f32.mrb[0].mxu0
        %v1649 = vpop.f32.mrb[0].mxu0
        %v1650 = vadd.f32 0.0, %v1649
        %v1651 = vpop.f32.mrb[0].mxu0
        %1652 = vmatprep.mubr.bf16.mxu0 0
        %1653 = vmatmul.mubr.bf16.gmra.mrb[0].mxu0 %v1514
        %v1654 = vpop.f32.mrb[0].mxu0
        %v1655 = vadd.f32 0.0, %v1654
        %v1656 = vpop.f32.mrb[0].mxu0
        %v1657 = vpop.f32.mrb[0].mxu0
        %v1658 = vadd.f32 0.0, %v1657
        %v1659 = vpop.f32.mrb[0].mxu0
        %1660 = vmatprep.mubr.bf16.mxu0 0
        %1661 = vmatmul.mubr.bf16.gmra.mrb[0].mxu0 %v1517
        %v1662 = vpop.f32.mrb[0].mxu0
        %v1663 = vadd.f32 0.0, %v1662
        %v1664 = vpop.f32.mrb[0].mxu0
        %v1665 = vpop.f32.mrb[0].mxu0
        %v1666 = vadd.f32 0.0, %v1665
        %v1667 = vpop.f32.mrb[0].mxu0
        %1668 = vmatprep.mubr.bf16.mxu0 0
        %1669 = vmatmul.mubr.bf16.gmra.mrb[0].mxu0 %v1520
        %v1670 = vpop.f32.mrb[0].mxu0
        %v1671 = vadd.f32 0.0, %v1670
        %v1672 = vpop.f32.mrb[0].mxu0
        %v1673 = vpop.f32.mrb[0].mxu0
        %v1674 = vadd.f32 0.0, %v1673
        %v1675 = vpop.f32.mrb[0].mxu0
        %1676 = vmatprep.mubr.bf16.mxu0 0
        %1677 = vmatmul.mubr.bf16.gmra.mrb[0].mxu0 %v1523
        %v1678 = vpop.f32.mrb[0].mxu0
        %v1679 = vadd.f32 0.0, %v1678
        %v1680 = vpop.f32.mrb[0].mxu0
        %v1681 = vpop.f32.mrb[0].mxu0
        %v1682 = vadd.f32 0.0, %v1681
        %v1683 = vpop.f32.mrb[0].mxu0
        %1684 = vmatprep.mubr.bf16.mxu0 0
        %1685 = vmatmul.mubr.bf16.gmra.mrb[0].mxu0 %v1526
        %v1686 = vpop.f32.mrb[0].mxu0
        %v1687 = vadd.f32 0.0, %v1686
        %v1688 = vpop.f32.mrb[0].mxu0
        %v1689 = vpop.f32.mrb[0].mxu0
        %v1690 = vadd.f32 0.0, %v1689
        %v1691 = vpop.f32.mrb[0].mxu0
        %1692 = vdwg.mxu0
        %v1694 = vsel %vm298, %v924, 0
        %v1697 = vsel %vm298, %v925, 0
        %v1700 = vsel %vm298, %v926, 0
        %v1703 = vsel %vm298, %v927, 0
        %v1706 = vsel %vm298, %v928, 0
        %v1709 = vsel %vm298, %v929, 0
        %v1712 = vsel %vm298, %v930, 0
        %v1715 = vsel %vm298, %v931, 0
        %v1718 = vsel %vm298, %v932, 0
        %v1721 = vsel %vm298, %v933, 0
        %v1724 = vsel %vm298, %v934, 0
        %v1727 = vsel %vm298, %v935, 0
        %v1730 = vsel %vm298, %v936, 0
        %v1733 = vsel %vm298, %v937, 0
        %v1736 = vsel %vm298, %v938, 0
        %v1739 = vsel %vm298, %v939, 0
        %v1742 = vsel %vm1528, %v940, 0
        %1744 = vmatprep.subr.bf16.mxu0 0
        %1745 = vmatpush1.bf16.msra.mxu0 %v1742
        %1746 = vmatprep.subr.bf16.mxu0 0
        %1747 = vmatpush1.bf16.msra.mxu0 0
        %1748 = vmatprep.subr.bf16.mxu0 0
        %1749 = vmatpush1.bf16.msra.mxu0 0
        %1750 = vmatprep.subr.bf16.mxu0 0
        %1751 = vmatpush1.bf16.msra.mxu0 0
        %1752 = vmatprep.subr.bf16.mxu0 0
        %1753 = vmatpush1.bf16.msra.mxu0 0
        %1754 = vmatprep.subr.bf16.mxu0 0
        %1755 = vmatpush1.bf16.msra.mxu0 0
        %1756 = vmatprep.subr.bf16.mxu0 0
        %1757 = vmatpush1.bf16.msra.mxu0 0
        %1758 = vmatprep.subr.bf16.mxu0 0
        %1759 = vmatpush1.bf16.msra.mxu0 0
        %1760 = vmatprep.subr.bf16.mxu0 0
        %1761 = vmatpush1.bf16.msra.mxu0 0
        %1762 = vmatprep.subr.bf16.mxu0 0
        %1763 = vmatpush1.bf16.msra.mxu0 0
        %1764 = vmatprep.subr.bf16.mxu0 0
        %1765 = vmatpush1.bf16.msra.mxu0 0
        %1766 = vmatprep.subr.bf16.mxu0 0
        %1767 = vmatpush1.bf16.msra.mxu0 0
        %1768 = vmatprep.subr.bf16.mxu0 0
        %1769 = vmatpush1.bf16.msra.mxu0 0
        %1770 = vmatprep.subr.bf16.mxu0 0
        %1771 = vmatpush1.bf16.msra.mxu0 0
        %1772 = vmatprep.subr.bf16.mxu0 0
        %1773 = vmatpush1.bf16.msra.mxu0 0
        %1774 = vmatprep.subr.bf16.mxu0 0
        %1775 = vmatpush1.bf16.msra.mxu0 0
        %1776 = vmatprep.mubr.bf16.mxu0 0
        %1777 = vmatmul.mubr.bf16.gmra.mrb[0].mxu0 %v1694
        %v1778 = vpop.f32.mrb[0].mxu0
        %v1779 = vadd.f32 %v1567, %v1778
        %v1780 = vpop.f32.mrb[0].mxu0
        %v1781 = vpop.f32.mrb[0].mxu0
        %v1782 = vadd.f32 %v1570, %v1781
        %v1783 = vpop.f32.mrb[0].mxu0
        %1784 = vmatprep.mubr.bf16.mxu0 0
        %1785 = vmatmul.mubr.bf16.gmra.mrb[0].mxu0 %v1697
        %v1786 = vpop.f32.mrb[0].mxu0
        %v1787 = vadd.f32 %v1575, %v1786
        %v1788 = vpop.f32.mrb[0].mxu0
        %v1789 = vpop.f32.mrb[0].mxu0
        %v1790 = vadd.f32 %v1578, %v1789
        %v1791 = vpop.f32.mrb[0].mxu0
        %1792 = vmatprep.mubr.bf16.mxu0 0
        %1793 = vmatmul.mubr.bf16.gmra.mrb[0].mxu0 %v1700
        %v1794 = vpop.f32.mrb[0].mxu0
        %v1795 = vadd.f32 %v1583, %v1794
        %v1796 = vpop.f32.mrb[0].mxu0
        %v1797 = vpop.f32.mrb[0].mxu0
        %v1798 = vadd.f32 %v1586, %v1797
        %v1799 = vpop.f32.mrb[0].mxu0
        %1800 = vmatprep.mubr.bf16.mxu0 0
        %1801 = vmatmul.mubr.bf16.gmra.mrb[0].mxu0 %v1703
        %v1802 = vpop.f32.mrb[0].mxu0
        %v1803 = vadd.f32 %v1591, %v1802
        %v1804 = vpop.f32.mrb[0].mxu0
        %v1805 = vpop.f32.mrb[0].mxu0
        %v1806 = vadd.f32 %v1594, %v1805
        %v1807 = vpop.f32.mrb[0].mxu0
        %1808 = vmatprep.mubr.bf16.mxu0 0
        %1809 = vmatmul.mubr.bf16.gmra.mrb[0].mxu0 %v1706
        %v1810 = vpop.f32.mrb[0].mxu0
        %v1811 = vadd.f32 %v1599, %v1810
        %v1812 = vpop.f32.mrb[0].mxu0
        %v1813 = vpop.f32.mrb[0].mxu0
        %v1814 = vadd.f32 %v1602, %v1813
        %v1815 = vpop.f32.mrb[0].mxu0
        %1816 = vmatprep.mubr.bf16.mxu0 0
        %1817 = vmatmul.mubr.bf16.gmra.mrb[0].mxu0 %v1709
        %v1818 = vpop.f32.mrb[0].mxu0
        %v1819 = vadd.f32 %v1607, %v1818
        %v1820 = vpop.f32.mrb[0].mxu0
        %v1821 = vpop.f32.mrb[0].mxu0
        %v1822 = vadd.f32 %v1610, %v1821
        %v1823 = vpop.f32.mrb[0].mxu0
        %1824 = vmatprep.mubr.bf16.mxu0 0
        %1825 = vmatmul.mubr.bf16.gmra.mrb[0].mxu0 %v1712
        %v1826 = vpop.f32.mrb[0].mxu0
        %v1827 = vadd.f32 %v1615, %v1826
        %v1828 = vpop.f32.mrb[0].mxu0
        %v1829 = vpop.f32.mrb[0].mxu0
        %v1830 = vadd.f32 %v1618, %v1829
        %v1831 = vpop.f32.mrb[0].mxu0
        %1832 = vmatprep.mubr.bf16.mxu0 0
        %1833 = vmatmul.mubr.bf16.gmra.mrb[0].mxu0 %v1715
        %v1834 = vpop.f32.mrb[0].mxu0
        %v1835 = vadd.f32 %v1623, %v1834
        %v1836 = vpop.f32.mrb[0].mxu0
        %v1837 = vpop.f32.mrb[0].mxu0
        %v1838 = vadd.f32 %v1626, %v1837
        %v1839 = vpop.f32.mrb[0].mxu0
        %1840 = vmatprep.mubr.bf16.mxu0 0
        %1841 = vmatmul.mubr.bf16.gmra.mrb[0].mxu0 %v1718
        %v1842 = vpop.f32.mrb[0].mxu0
        %v1843 = vadd.f32 %v1631, %v1842
        %v1844 = vpop.f32.mrb[0].mxu0
        %v1845 = vpop.f32.mrb[0].mxu0
        %v1846 = vadd.f32 %v1634, %v1845
        %v1847 = vpop.f32.mrb[0].mxu0
        %1848 = vmatprep.mubr.bf16.mxu0 0
        %1849 = vmatmul.mubr.bf16.gmra.mrb[0].mxu0 %v1721
        %v1850 = vpop.f32.mrb[0].mxu0
        %v1851 = vadd.f32 %v1639, %v1850
        %v1852 = vpop.f32.mrb[0].mxu0
        %v1853 = vpop.f32.mrb[0].mxu0
        %v1854 = vadd.f32 %v1642, %v1853
        %v1855 = vpop.f32.mrb[0].mxu0
        %1856 = vmatprep.mubr.bf16.mxu0 0
        %1857 = vmatmul.mubr.bf16.gmra.mrb[0].mxu0 %v1724
        %v1858 = vpop.f32.mrb[0].mxu0
        %v1859 = vadd.f32 %v1647, %v1858
        %v1860 = vpop.f32.mrb[0].mxu0
        %v1861 = vpop.f32.mrb[0].mxu0
        %v1862 = vadd.f32 %v1650, %v1861
        %v1863 = vpop.f32.mrb[0].mxu0
        %1864 = vmatprep.mubr.bf16.mxu0 0
        %1865 = vmatmul.mubr.bf16.gmra.mrb[0].mxu0 %v1727
        %v1866 = vpop.f32.mrb[0].mxu0
        %v1867 = vadd.f32 %v1655, %v1866
        %v1868 = vpop.f32.mrb[0].mxu0
        %v1869 = vpop.f32.mrb[0].mxu0
        %v1870 = vadd.f32 %v1658, %v1869
        %v1871 = vpop.f32.mrb[0].mxu0
        %1872 = vmatprep.mubr.bf16.mxu0 0
        %1873 = vmatmul.mubr.bf16.gmra.mrb[0].mxu0 %v1730
        %v1874 = vpop.f32.mrb[0].mxu0
        %v1875 = vadd.f32 %v1663, %v1874
        %v1876 = vpop.f32.mrb[0].mxu0
        %v1877 = vpop.f32.mrb[0].mxu0
        %v1878 = vadd.f32 %v1666, %v1877
        %v1879 = vpop.f32.mrb[0].mxu0
        %1880 = vmatprep.mubr.bf16.mxu0 0
        %1881 = vmatmul.mubr.bf16.gmra.mrb[0].mxu0 %v1733
        %v1882 = vpop.f32.mrb[0].mxu0
        %v1883 = vadd.f32 %v1671, %v1882
        %v1884 = vpop.f32.mrb[0].mxu0
        %v1885 = vpop.f32.mrb[0].mxu0
        %v1886 = vadd.f32 %v1674, %v1885
        %v1887 = vpop.f32.mrb[0].mxu0
        %1888 = vmatprep.mubr.bf16.mxu0 0
        %1889 = vmatmul.mubr.bf16.gmra.mrb[0].mxu0 %v1736
        %v1890 = vpop.f32.mrb[0].mxu0
        %v1891 = vadd.f32 %v1679, %v1890
        %v1892 = vpop.f32.mrb[0].mxu0
        %v1893 = vpop.f32.mrb[0].mxu0
        %v1894 = vadd.f32 %v1682, %v1893
        %v1895 = vpop.f32.mrb[0].mxu0
        %1896 = vmatprep.mubr.bf16.mxu0 0
        %1897 = vmatmul.mubr.bf16.gmra.mrb[0].mxu0 %v1739
        %v1898 = vpop.f32.mrb[0].mxu0
        %v1899 = vadd.f32 %v1687, %v1898
        %v1900 = vpop.f32.mrb[0].mxu0
        %v1901 = vpop.f32.mrb[0].mxu0
        %v1902 = vadd.f32 %v1690, %v1901
        %v1903 = vpop.f32.mrb[0].mxu0
        %1904 = vdwg.mxu0
        %1905 = vst.msk [vmem:[%s941 + $0x8] sm:$0xff] %vm298, %v1430
        %1906 = vst.msk [vmem:[%s941 + $0x10] sm:$0xff] %vm298, %v1431
        %1907 = vst.msk [vmem:[%s941 + $0x28] sm:$0xff] %vm298, %v1432
        %1908 = vst.msk [vmem:[%s941 + $0x30] sm:$0xff] %vm298, %v1433
        %1909 = vst.msk [vmem:[%s941 + $0x48] sm:$0xff] %vm298, %v1434
        %1910 = vst.msk [vmem:[%s941 + $0x50] sm:$0xff] %vm298, %v1435
        %1911 = vst.msk [vmem:[%s941 + $0x68] sm:$0xff] %vm298, %v1436
        %1912 = vst.msk [vmem:[%s941 + $0x70] sm:$0xff] %vm298, %v1437
        %1913 = vst.msk [vmem:[%s941 + $0x88] sm:$0xff] %vm298, %v1438
        %1914 = vst.msk [vmem:[%s941 + $0x90] sm:$0xff] %vm298, %v1439
        %1915 = vst.msk [vmem:[%s941 + $0xa8] sm:$0xff] %vm298, %v1440
        %1916 = vst.msk [vmem:[%s941 + $0xb0] sm:$0xff] %vm298, %v1441
        %1917 = vst.msk [vmem:[%s941 + $0xc8] sm:$0xff] %vm298, %v1442
        %1918 = vst.msk [vmem:[%s941 + $0xd0] sm:$0xff] %vm298, %v1443
        %1919 = vst.msk [vmem:[%s941 + $0xe8] sm:$0xff] %vm298, %v1444
        %1920 = vst.msk [vmem:[%s941 + $0xf0] sm:$0xff] %vm298, %v1445
        %1921 = vst.msk [vmem:[%s941 + $0x108] sm:$0xff] %vm298, %v1446
        %1922 = vst.msk [vmem:[%s941 + $0x110] sm:$0xff] %vm298, %v1447
        %1923 = vst.msk [vmem:[%s941 + $0x128] sm:$0xff] %vm298, %v1448
        %1924 = vst.msk [vmem:[%s941 + $0x130] sm:$0xff] %vm298, %v1449
        %1925 = vst.msk [vmem:[%s941 + $0x148] sm:$0xff] %vm298, %v1450
        %1926 = vst.msk [vmem:[%s941 + $0x150] sm:$0xff] %vm298, %v1451
        %1927 = vst.msk [vmem:[%s941 + $0x168] sm:$0xff] %vm298, %v1452
        %1928 = vst.msk [vmem:[%s941 + $0x170] sm:$0xff] %vm298, %v1453
        %1929 = vst.msk [vmem:[%s941 + $0x188] sm:$0xff] %vm298, %v1454
        %1930 = vst.msk [vmem:[%s941 + $0x190] sm:$0xff] %vm298, %v1455
        %1931 = vst.msk [vmem:[%s941 + $0x1a8] sm:$0xff] %vm298, %v1456
        %1932 = vst.msk [vmem:[%s941 + $0x1b0] sm:$0xff] %vm298, %v1457
        %1933 = vst.msk [vmem:[%s941 + $0x1c8] sm:$0xff] %vm298, %v1458
        %1934 = vst.msk [vmem:[%s941 + $0x1d0] sm:$0xff] %vm298, %v1459
        %1935 = vst.msk [vmem:[%s941 + $0x1e8] sm:$0xff] %vm298, %v1460
        %1936 = vst.msk [vmem:[%s941 + $0x1f0] sm:$0xff] %vm298, %v1461
        %v1937 = vld [vmem:[#allocation2 + $0x6] sm:$0xff]
        %v1938 = vld [vmem:[#allocation2 + $0xe] sm:$0xff]
        %v1939 = vld [vmem:[#allocation2 + $0x26] sm:$0xff]
        %v1940 = vld [vmem:[#allocation2 + $0x2e] sm:$0xff]
        %v1941 = vld [vmem:[#allocation2 + $0x46] sm:$0xff]
        %v1942 = vld [vmem:[#allocation2 + $0x4e] sm:$0xff]
        %v1943 = vld [vmem:[#allocation2 + $0x66] sm:$0xff]
        %v1944 = vld [vmem:[#allocation2 + $0x6e] sm:$0xff]
        %v1945 = vld [vmem:[#allocation2 + $0x86] sm:$0xff]
        %v1946 = vld [vmem:[#allocation2 + $0x8e] sm:$0xff]
        %v1947 = vld [vmem:[#allocation2 + $0xa6] sm:$0xff]
        %v1948 = vld [vmem:[#allocation2 + $0xae] sm:$0xff]
        %v1949 = vld [vmem:[#allocation2 + $0xc6] sm:$0xff]
        %v1950 = vld [vmem:[#allocation2 + $0xce] sm:$0xff]
        %v1951 = vld [vmem:[#allocation2 + $0xe6] sm:$0xff]
        %v1952 = vld [vmem:[#allocation2 + $0xee] sm:$0xff]
        %v1953 = vld [vmem:[#allocation2 + $0x106] sm:$0xff]
        %v1954 = vld [vmem:[#allocation2 + $0x10e] sm:$0xff]
        %v1955 = vld [vmem:[#allocation2 + $0x126] sm:$0xff]
        %v1956 = vld [vmem:[#allocation2 + $0x12e] sm:$0xff]
        %v1957 = vld [vmem:[#allocation2 + $0x146] sm:$0xff]
        %v1958 = vld [vmem:[#allocation2 + $0x14e] sm:$0xff]
        %v1959 = vld [vmem:[#allocation2 + $0x166] sm:$0xff]
        %v1960 = vld [vmem:[#allocation2 + $0x16e] sm:$0xff]
        %v1961 = vld [vmem:[#allocation2 + $0x186] sm:$0xff]
        %v1962 = vld [vmem:[#allocation2 + $0x18e] sm:$0xff]
        %v1963 = vld [vmem:[#allocation2 + $0x1a6] sm:$0xff]
        %v1964 = vld [vmem:[#allocation2 + $0x1ae] sm:$0xff]
        %v1965 = vld [vmem:[#allocation2 + $0x1c6] sm:$0xff]
        %v1966 = vld [vmem:[#allocation2 + $0x1ce] sm:$0xff]
        %v1967 = vld [vmem:[#allocation2 + $0x1e6] sm:$0xff]
        %v1968 = vld [vmem:[#allocation2 + $0x1ee] sm:$0xff]
        %v1969 = vld [vmem:[#allocation2 + $0x206] sm:$0xff]
        %v1970 = vld [vmem:[#allocation2 + $0x20e] sm:$0xff]
        %v1971 = vld [vmem:[#allocation2 + $0x226] sm:$0xff]
        %v1972 = vld [vmem:[#allocation2 + $0x22e] sm:$0xff]
        %v1973 = vld [vmem:[#allocation2 + $0x246] sm:$0xff]
        %v1974 = vld [vmem:[#allocation2 + $0x24e] sm:$0xff]
        %v1975 = vld [vmem:[#allocation2 + $0x266] sm:$0xff]
        %v1976 = vld [vmem:[#allocation2 + $0x26e] sm:$0xff]
        %v1977 = vld [vmem:[#allocation2 + $0x7] sm:$0xff]
        %v1978 = vld [vmem:[#allocation2 + $0xf] sm:$0xff]
        %v1979 = vld [vmem:[#allocation2 + $0x27] sm:$0xff]
        %v1980 = vld [vmem:[#allocation2 + $0x2f] sm:$0xff]
        %v1981 = vld [vmem:[#allocation2 + $0x47] sm:$0xff]
        %v1982 = vld [vmem:[#allocation2 + $0x4f] sm:$0xff]
        %v1983 = vld [vmem:[#allocation2 + $0x67] sm:$0xff]
        %v1984 = vld [vmem:[#allocation2 + $0x6f] sm:$0xff]
        %v1985 = vld [vmem:[#allocation2 + $0x87] sm:$0xff]
        %v1986 = vld [vmem:[#allocation2 + $0x8f] sm:$0xff]
        %v1987 = vld [vmem:[#allocation2 + $0xa7] sm:$0xff]
        %v1988 = vld [vmem:[#allocation2 + $0xaf] sm:$0xff]
        %v1989 = vld [vmem:[#allocation2 + $0xc7] sm:$0xff]
        %v1990 = vld [vmem:[#allocation2 + $0xcf] sm:$0xff]
        %v1991 = vld [vmem:[#allocation2 + $0xe7] sm:$0xff]
        %v1992 = vld [vmem:[#allocation2 + $0xef] sm:$0xff]
        %v1993 = vld [vmem:[#allocation2 + $0x107] sm:$0xff]
        %v1994 = vld [vmem:[#allocation2 + $0x10f] sm:$0xff]
        %v1995 = vld [vmem:[#allocation2 + $0x127] sm:$0xff]
        %v1996 = vld [vmem:[#allocation2 + $0x12f] sm:$0xff]
        %v1997 = vld [vmem:[#allocation2 + $0x147] sm:$0xff]
        %v1998 = vld [vmem:[#allocation2 + $0x14f] sm:$0xff]
        %v1999 = vld [vmem:[#allocation2 + $0x167] sm:$0xff]
        %v2000 = vld [vmem:[#allocation2 + $0x16f] sm:$0xff]
        %v2001 = vld [vmem:[#allocation2 + $0x187] sm:$0xff]
        %v2002 = vld [vmem:[#allocation2 + $0x18f] sm:$0xff]
        %v2003 = vld [vmem:[#allocation2 + $0x1a7] sm:$0xff]
        %v2004 = vld [vmem:[#allocation2 + $0x1af] sm:$0xff]
        %v2005 = vld [vmem:[#allocation2 + $0x1c7] sm:$0xff]
        %v2006 = vld [vmem:[#allocation2 + $0x1cf] sm:$0xff]
        %v2007 = vld [vmem:[#allocation2 + $0x1e7] sm:$0xff]
        %v2008 = vld [vmem:[#allocation2 + $0x1ef] sm:$0xff]
        %v2009 = vld [vmem:[#allocation2 + $0x207] sm:$0xff]
        %v2010 = vld [vmem:[#allocation2 + $0x20f] sm:$0xff]
        %v2011 = vld [vmem:[#allocation2 + $0x227] sm:$0xff]
        %v2012 = vld [vmem:[#allocation2 + $0x22f] sm:$0xff]
        %v2013 = vld [vmem:[#allocation2 + $0x247] sm:$0xff]
        %v2014 = vld [vmem:[#allocation2 + $0x24f] sm:$0xff]
        %v2015 = vld [vmem:[#allocation2 + $0x267] sm:$0xff]
        %v2016 = vld [vmem:[#allocation2 + $0x26f] sm:$0xff]
        %v2017 = vmax.f32 %v1937, %v1977
        %v2018 = vmax.f32 %v1938, %v1978
        %v2019 = vmax.f32 %v1939, %v1979
        %v2020 = vmax.f32 %v1940, %v1980
        %v2021 = vmax.f32 %v1941, %v1981
        %v2022 = vmax.f32 %v1942, %v1982
        %v2023 = vmax.f32 %v1943, %v1983
        %v2024 = vmax.f32 %v1944, %v1984
        %v2025 = vmax.f32 %v1945, %v1985
        %v2026 = vmax.f32 %v1946, %v1986
        %v2027 = vmax.f32 %v1947, %v1987
        %v2028 = vmax.f32 %v1948, %v1988
        %v2029 = vmax.f32 %v1949, %v1989
        %v2030 = vmax.f32 %v1950, %v1990
        %v2031 = vmax.f32 %v1951, %v1991
        %v2032 = vmax.f32 %v1952, %v1992
        %v2033 = vmax.f32 %v1953, %v1993
        %v2034 = vmax.f32 %v1954, %v1994
        %v2035 = vmax.f32 %v1955, %v1995
        %v2036 = vmax.f32 %v1956, %v1996
        %v2037 = vmax.f32 %v1957, %v1997
        %v2038 = vmax.f32 %v1958, %v1998
        %v2039 = vmax.f32 %v1959, %v1999
        %v2040 = vmax.f32 %v1960, %v2000
        %v2041 = vmax.f32 %v1961, %v2001
        %v2042 = vmax.f32 %v1962, %v2002
        %v2043 = vmax.f32 %v1963, %v2003
        %v2044 = vmax.f32 %v1964, %v2004
        %v2045 = vmax.f32 %v1965, %v2005
        %v2046 = vmax.f32 %v1966, %v2006
        %v2047 = vmax.f32 %v1967, %v2007
        %v2048 = vmax.f32 %v1968, %v2008
        %v2049 = vmax.f32 %v1969, %v2009
        %v2050 = vmax.f32 %v1970, %v2010
        %v2051 = vmax.f32 %v1971, %v2011
        %v2052 = vmax.f32 %v1972, %v2012
        %v2053 = vmax.f32 %v1973, %v2013
        %v2054 = vmax.f32 %v1974, %v2014
        %v2055 = vmax.f32 %v1975, %v2015
        %v2056 = vmax.f32 %v1976, %v2016
        %v2057 = vld [vmem:[#allocation2 + $0x8] sm:$0xff]
        %v2058 = vld [vmem:[#allocation2 + $0x10] sm:$0xff]
        %v2059 = vld [vmem:[#allocation2 + $0x28] sm:$0xff]
        %v2060 = vld [vmem:[#allocation2 + $0x30] sm:$0xff]
        %v2061 = vld [vmem:[#allocation2 + $0x48] sm:$0xff]
        %v2062 = vld [vmem:[#allocation2 + $0x50] sm:$0xff]
        %v2063 = vld [vmem:[#allocation2 + $0x68] sm:$0xff]
        %v2064 = vld [vmem:[#allocation2 + $0x70] sm:$0xff]
        %v2065 = vld [vmem:[#allocation2 + $0x88] sm:$0xff]
        %v2066 = vld [vmem:[#allocation2 + $0x90] sm:$0xff]
        %v2067 = vld [vmem:[#allocation2 + $0xa8] sm:$0xff]
        %v2068 = vld [vmem:[#allocation2 + $0xb0] sm:$0xff]
        %v2069 = vld [vmem:[#allocation2 + $0xc8] sm:$0xff]
        %v2070 = vld [vmem:[#allocation2 + $0xd0] sm:$0xff]
        %v2071 = vld [vmem:[#allocation2 + $0xe8] sm:$0xff]
        %v2072 = vld [vmem:[#allocation2 + $0xf0] sm:$0xff]
        %v2073 = vld [vmem:[#allocation2 + $0x108] sm:$0xff]
        %v2074 = vld [vmem:[#allocation2 + $0x110] sm:$0xff]
        %v2075 = vld [vmem:[#allocation2 + $0x128] sm:$0xff]
        %v2076 = vld [vmem:[#allocation2 + $0x130] sm:$0xff]
        %v2077 = vld [vmem:[#allocation2 + $0x148] sm:$0xff]
        %v2078 = vld [vmem:[#allocation2 + $0x150] sm:$0xff]
        %v2079 = vld [vmem:[#allocation2 + $0x168] sm:$0xff]
        %v2080 = vld [vmem:[#allocation2 + $0x170] sm:$0xff]
        %v2081 = vld [vmem:[#allocation2 + $0x188] sm:$0xff]
        %v2082 = vld [vmem:[#allocation2 + $0x190] sm:$0xff]
        %v2083 = vld [vmem:[#allocation2 + $0x1a8] sm:$0xff]
        %v2084 = vld [vmem:[#allocation2 + $0x1b0] sm:$0xff]
        %v2085 = vld [vmem:[#allocation2 + $0x1c8] sm:$0xff]
        %v2086 = vld [vmem:[#allocation2 + $0x1d0] sm:$0xff]
        %v2087 = vld [vmem:[#allocation2 + $0x1e8] sm:$0xff]
        %v2088 = vld [vmem:[#allocation2 + $0x1f0] sm:$0xff]
        %v2089 = vld [vmem:[#allocation2 + $0x208] sm:$0xff]
        %v2090 = vld [vmem:[#allocation2 + $0x210] sm:$0xff]
        %v2091 = vld [vmem:[#allocation2 + $0x228] sm:$0xff]
        %v2092 = vld [vmem:[#allocation2 + $0x230] sm:$0xff]
        %v2093 = vld [vmem:[#allocation2 + $0x248] sm:$0xff]
        %v2094 = vld [vmem:[#allocation2 + $0x250] sm:$0xff]
        %v2095 = vld [vmem:[#allocation2 + $0x268] sm:$0xff]
        %v2096 = vld [vmem:[#allocation2 + $0x270] sm:$0xff]
        %v2097 = vmax.f32 %v2017, %v2057
        %v2098 = vmax.f32 %v2018, %v2058
        %v2099 = vmax.f32 %v2019, %v2059
        %v2100 = vmax.f32 %v2020, %v2060
        %v2101 = vmax.f32 %v2021, %v2061
        %v2102 = vmax.f32 %v2022, %v2062
        %v2103 = vmax.f32 %v2023, %v2063
        %v2104 = vmax.f32 %v2024, %v2064
        %v2105 = vmax.f32 %v2025, %v2065
        %v2106 = vmax.f32 %v2026, %v2066
        %v2107 = vmax.f32 %v2027, %v2067
        %v2108 = vmax.f32 %v2028, %v2068
        %v2109 = vmax.f32 %v2029, %v2069
        %v2110 = vmax.f32 %v2030, %v2070
        %v2111 = vmax.f32 %v2031, %v2071
        %v2112 = vmax.f32 %v2032, %v2072
        %v2113 = vmax.f32 %v2033, %v2073
        %v2114 = vmax.f32 %v2034, %v2074
        %v2115 = vmax.f32 %v2035, %v2075
        %v2116 = vmax.f32 %v2036, %v2076
        %v2117 = vmax.f32 %v2037, %v2077
        %v2118 = vmax.f32 %v2038, %v2078
        %v2119 = vmax.f32 %v2039, %v2079
        %v2120 = vmax.f32 %v2040, %v2080
        %v2121 = vmax.f32 %v2041, %v2081
        %v2122 = vmax.f32 %v2042, %v2082
        %v2123 = vmax.f32 %v2043, %v2083
        %v2124 = vmax.f32 %v2044, %v2084
        %v2125 = vmax.f32 %v2045, %v2085
        %v2126 = vmax.f32 %v2046, %v2086
        %v2127 = vmax.f32 %v2047, %v2087
        %v2128 = vmax.f32 %v2048, %v2088
        %v2129 = vmax.f32 %v2049, %v2089
        %v2130 = vmax.f32 %v2050, %v2090
        %v2131 = vmax.f32 %v2051, %v2091
        %v2132 = vmax.f32 %v2052, %v2092
        %v2133 = vmax.f32 %v2053, %v2093
        %v2134 = vmax.f32 %v2054, %v2094
        %v2135 = vmax.f32 %v2055, %v2095
        %v2136 = vmax.f32 %v2056, %v2096
        %v2137 = vld [vmem:[#allocation2 + $0x9] sm:$0xff]
        %v2138 = vld [vmem:[#allocation2 + $0x11] sm:$0xff]
        %v2139 = vld [vmem:[#allocation2 + $0x29] sm:$0xff]
        %v2140 = vld [vmem:[#allocation2 + $0x31] sm:$0xff]
        %v2141 = vld [vmem:[#allocation2 + $0x49] sm:$0xff]
        %v2142 = vld [vmem:[#allocation2 + $0x51] sm:$0xff]
        %v2143 = vld [vmem:[#allocation2 + $0x69] sm:$0xff]
        %v2144 = vld [vmem:[#allocation2 + $0x71] sm:$0xff]
        %v2145 = vld [vmem:[#allocation2 + $0x89] sm:$0xff]
        %v2146 = vld [vmem:[#allocation2 + $0x91] sm:$0xff]
        %v2147 = vld [vmem:[#allocation2 + $0xa9] sm:$0xff]
        %v2148 = vld [vmem:[#allocation2 + $0xb1] sm:$0xff]
        %v2149 = vld [vmem:[#allocation2 + $0xc9] sm:$0xff]
        %v2150 = vld [vmem:[#allocation2 + $0xd1] sm:$0xff]
        %v2151 = vld [vmem:[#allocation2 + $0xe9] sm:$0xff]
        %v2152 = vld [vmem:[#allocation2 + $0xf1] sm:$0xff]
        %v2153 = vld [vmem:[#allocation2 + $0x109] sm:$0xff]
        %v2154 = vld [vmem:[#allocation2 + $0x111] sm:$0xff]
        %v2155 = vld [vmem:[#allocation2 + $0x129] sm:$0xff]
        %v2156 = vld [vmem:[#allocation2 + $0x131] sm:$0xff]
        %v2157 = vld [vmem:[#allocation2 + $0x149] sm:$0xff]
        %v2158 = vld [vmem:[#allocation2 + $0x151] sm:$0xff]
        %v2159 = vld [vmem:[#allocation2 + $0x169] sm:$0xff]
        %v2160 = vld [vmem:[#allocation2 + $0x171] sm:$0xff]
        %v2161 = vld [vmem:[#allocation2 + $0x189] sm:$0xff]
        %v2162 = vld [vmem:[#allocation2 + $0x191] sm:$0xff]
        %v2163 = vld [vmem:[#allocation2 + $0x1a9] sm:$0xff]
        %v2164 = vld [vmem:[#allocation2 + $0x1b1] sm:$0xff]
        %v2165 = vld [vmem:[#allocation2 + $0x1c9] sm:$0xff]
        %v2166 = vld [vmem:[#allocation2 + $0x1d1] sm:$0xff]
        %v2167 = vld [vmem:[#allocation2 + $0x1e9] sm:$0xff]
        %v2168 = vld [vmem:[#allocation2 + $0x1f1] sm:$0xff]
        %v2169 = vld [vmem:[#allocation2 + $0x209] sm:$0xff]
        %v2170 = vld [vmem:[#allocation2 + $0x211] sm:$0xff]
        %v2171 = vld [vmem:[#allocation2 + $0x229] sm:$0xff]
        %v2172 = vld [vmem:[#allocation2 + $0x231] sm:$0xff]
        %v2173 = vld [vmem:[#allocation2 + $0x249] sm:$0xff]
        %v2174 = vld [vmem:[#allocation2 + $0x251] sm:$0xff]
        %v2175 = vld [vmem:[#allocation2 + $0x269] sm:$0xff]
        %v2176 = vld [vmem:[#allocation2 + $0x271] sm:$0xff]
        %v2177 = vmax.f32 %v2097, %v2137
        %v2178 = vmax.f32 %v2098, %v2138
        %v2179 = vmax.f32 %v2099, %v2139
        %v2180 = vmax.f32 %v2100, %v2140
        %v2181 = vmax.f32 %v2101, %v2141
        %v2182 = vmax.f32 %v2102, %v2142
        %v2183 = vmax.f32 %v2103, %v2143
        %v2184 = vmax.f32 %v2104, %v2144
        %v2185 = vmax.f32 %v2105, %v2145
        %v2186 = vmax.f32 %v2106, %v2146
        %v2187 = vmax.f32 %v2107, %v2147
        %v2188 = vmax.f32 %v2108, %v2148
        %v2189 = vmax.f32 %v2109, %v2149
        %v2190 = vmax.f32 %v2110, %v2150
        %v2191 = vmax.f32 %v2111, %v2151
        %v2192 = vmax.f32 %v2112, %v2152
        %v2193 = vmax.f32 %v2113, %v2153
        %v2194 = vmax.f32 %v2114, %v2154
        %v2195 = vmax.f32 %v2115, %v2155
        %v2196 = vmax.f32 %v2116, %v2156
        %v2197 = vmax.f32 %v2117, %v2157
        %v2198 = vmax.f32 %v2118, %v2158
        %v2199 = vmax.f32 %v2119, %v2159
        %v2200 = vmax.f32 %v2120, %v2160
        %v2201 = vmax.f32 %v2121, %v2161
        %v2202 = vmax.f32 %v2122, %v2162
        %v2203 = vmax.f32 %v2123, %v2163
        %v2204 = vmax.f32 %v2124, %v2164
        %v2205 = vmax.f32 %v2125, %v2165
        %v2206 = vmax.f32 %v2126, %v2166
        %v2207 = vmax.f32 %v2127, %v2167
        %v2208 = vmax.f32 %v2128, %v2168
        %v2209 = vmax.f32 %v2129, %v2169
        %v2210 = vmax.f32 %v2130, %v2170
        %v2211 = vmax.f32 %v2131, %v2171
        %v2212 = vmax.f32 %v2132, %v2172
        %v2213 = vmax.f32 %v2133, %v2173
        %v2214 = vmax.f32 %v2134, %v2174
        %v2215 = vmax.f32 %v2135, %v2175
        %v2216 = vmax.f32 %v2136, %v2176
        %v2217 = vld [vmem:[#allocation2 + $0xa] sm:$0xff]
        %v2218 = vld [vmem:[#allocation2 + $0x12] sm:$0xff]
        %v2219 = vld [vmem:[#allocation2 + $0x2a] sm:$0xff]
        %v2220 = vld [vmem:[#allocation2 + $0x32] sm:$0xff]
        %v2221 = vld [vmem:[#allocation2 + $0x4a] sm:$0xff]
        %v2222 = vld [vmem:[#allocation2 + $0x52] sm:$0xff]
        %v2223 = vld [vmem:[#allocation2 + $0x6a] sm:$0xff]
        %v2224 = vld [vmem:[#allocation2 + $0x72] sm:$0xff]
        %v2225 = vld [vmem:[#allocation2 + $0x8a] sm:$0xff]
        %v2226 = vld [vmem:[#allocation2 + $0x92] sm:$0xff]
        %v2227 = vld [vmem:[#allocation2 + $0xaa] sm:$0xff]
        %v2228 = vld [vmem:[#allocation2 + $0xb2] sm:$0xff]
        %v2229 = vld [vmem:[#allocation2 + $0xca] sm:$0xff]
        %v2230 = vld [vmem:[#allocation2 + $0xd2] sm:$0xff]
        %v2231 = vld [vmem:[#allocation2 + $0xea] sm:$0xff]
        %v2232 = vld [vmem:[#allocation2 + $0xf2] sm:$0xff]
        %v2233 = vld [vmem:[#allocation2 + $0x10a] sm:$0xff]
        %v2234 = vld [vmem:[#allocation2 + $0x112] sm:$0xff]
        %v2235 = vld [vmem:[#allocation2 + $0x12a] sm:$0xff]
        %v2236 = vld [vmem:[#allocation2 + $0x132] sm:$0xff]
        %v2237 = vld [vmem:[#allocation2 + $0x14a] sm:$0xff]
        %v2238 = vld [vmem:[#allocation2 + $0x152] sm:$0xff]
        %v2239 = vld [vmem:[#allocation2 + $0x16a] sm:$0xff]
        %v2240 = vld [vmem:[#allocation2 + $0x172] sm:$0xff]
        %v2241 = vld [vmem:[#allocation2 + $0x18a] sm:$0xff]
        %v2242 = vld [vmem:[#allocation2 + $0x192] sm:$0xff]
        %v2243 = vld [vmem:[#allocation2 + $0x1aa] sm:$0xff]
        %v2244 = vld [vmem:[#allocation2 + $0x1b2] sm:$0xff]
        %v2245 = vld [vmem:[#allocation2 + $0x1ca] sm:$0xff]
        %v2246 = vld [vmem:[#allocation2 + $0x1d2] sm:$0xff]
        %v2247 = vld [vmem:[#allocation2 + $0x1ea] sm:$0xff]
        %v2248 = vld [vmem:[#allocation2 + $0x1f2] sm:$0xff]
        %v2249 = vld [vmem:[#allocation2 + $0x20a] sm:$0xff]
        %v2250 = vld [vmem:[#allocation2 + $0x212] sm:$0xff]
        %v2251 = vld [vmem:[#allocation2 + $0x22a] sm:$0xff]
        %v2252 = vld [vmem:[#allocation2 + $0x232] sm:$0xff]
        %v2253 = vld [vmem:[#allocation2 + $0x24a] sm:$0xff]
        %v2254 = vld [vmem:[#allocation2 + $0x252] sm:$0xff]
        %v2255 = vld [vmem:[#allocation2 + $0x26a] sm:$0xff]
        %v2256 = vld [vmem:[#allocation2 + $0x272] sm:$0xff]
        %v2257 = vmax.f32 %v2177, %v2217
        %v2258 = vmax.f32 %v2178, %v2218
        %v2259 = vmax.f32 %v2179, %v2219
        %v2260 = vmax.f32 %v2180, %v2220
        %v2261 = vmax.f32 %v2181, %v2221
        %v2262 = vmax.f32 %v2182, %v2222
        %v2263 = vmax.f32 %v2183, %v2223
        %v2264 = vmax.f32 %v2184, %v2224
        %v2265 = vmax.f32 %v2185, %v2225
        %v2266 = vmax.f32 %v2186, %v2226
        %v2267 = vmax.f32 %v2187, %v2227
        %v2268 = vmax.f32 %v2188, %v2228
        %v2269 = vmax.f32 %v2189, %v2229
        %v2270 = vmax.f32 %v2190, %v2230
        %v2271 = vmax.f32 %v2191, %v2231
        %v2272 = vmax.f32 %v2192, %v2232
        %v2273 = vmax.f32 %v2193, %v2233
        %v2274 = vmax.f32 %v2194, %v2234
        %v2275 = vmax.f32 %v2195, %v2235
        %v2276 = vmax.f32 %v2196, %v2236
        %v2277 = vmax.f32 %v2197, %v2237
        %v2278 = vmax.f32 %v2198, %v2238
        %v2279 = vmax.f32 %v2199, %v2239
        %v2280 = vmax.f32 %v2200, %v2240
        %v2281 = vmax.f32 %v2201, %v2241
        %v2282 = vmax.f32 %v2202, %v2242
        %v2283 = vmax.f32 %v2203, %v2243
        %v2284 = vmax.f32 %v2204, %v2244
        %v2285 = vmax.f32 %v2205, %v2245
        %v2286 = vmax.f32 %v2206, %v2246
        %v2287 = vmax.f32 %v2207, %v2247
        %v2288 = vmax.f32 %v2208, %v2248
        %v2289 = vmax.f32 %v2209, %v2249
        %v2290 = vmax.f32 %v2210, %v2250
        %v2291 = vmax.f32 %v2211, %v2251
        %v2292 = vmax.f32 %v2212, %v2252
        %v2293 = vmax.f32 %v2213, %v2253
        %v2294 = vmax.f32 %v2214, %v2254
        %v2295 = vmax.f32 %v2215, %v2255
        %v2296 = vmax.f32 %v2216, %v2256
        %v2297 = vmax.f32 %v2257, %v2259
        %v2298 = vmax.f32 %v2258, %v2260
        %v2299 = vmax.f32 %v2259, %v2261
        %v2300 = vmax.f32 %v2260, %v2262
        %v2301 = vmax.f32 %v2261, %v2263
        %v2302 = vmax.f32 %v2262, %v2264
        %v2303 = vmax.f32 %v2263, %v2265
        %v2304 = vmax.f32 %v2264, %v2266
        %v2305 = vmax.f32 %v2265, %v2267
        %v2306 = vmax.f32 %v2266, %v2268
        %v2307 = vmax.f32 %v2267, %v2269
        %v2308 = vmax.f32 %v2268, %v2270
        %v2309 = vmax.f32 %v2269, %v2271
        %v2310 = vmax.f32 %v2270, %v2272
        %v2311 = vmax.f32 %v2271, %v2273
        %v2312 = vmax.f32 %v2272, %v2274
        %v2313 = vmax.f32 %v2273, %v2275
        %v2314 = vmax.f32 %v2274, %v2276
        %v2315 = vmax.f32 %v2275, %v2277
        %v2316 = vmax.f32 %v2276, %v2278
        %v2317 = vmax.f32 %v2277, %v2279
        %v2318 = vmax.f32 %v2278, %v2280
        %v2319 = vmax.f32 %v2279, %v2281
        %v2320 = vmax.f32 %v2280, %v2282
        %v2321 = vmax.f32 %v2281, %v2283
        %v2322 = vmax.f32 %v2282, %v2284
        %v2323 = vmax.f32 %v2283, %v2285
        %v2324 = vmax.f32 %v2284, %v2286
        %v2325 = vmax.f32 %v2285, %v2287
        %v2326 = vmax.f32 %v2286, %v2288
        %v2327 = vmax.f32 %v2287, %v2289
        %v2328 = vmax.f32 %v2288, %v2290
        %v2329 = vmax.f32 %v2297, %v2261
        %v2330 = vmax.f32 %v2298, %v2262
        %v2331 = vmax.f32 %v2299, %v2263
        %v2332 = vmax.f32 %v2300, %v2264
        %v2333 = vmax.f32 %v2301, %v2265
        %v2334 = vmax.f32 %v2302, %v2266
        %v2335 = vmax.f32 %v2303, %v2267
        %v2336 = vmax.f32 %v2304, %v2268
        %v2337 = vmax.f32 %v2305, %v2269
        %v2338 = vmax.f32 %v2306, %v2270
        %v2339 = vmax.f32 %v2307, %v2271
        %v2340 = vmax.f32 %v2308, %v2272
        %v2341 = vmax.f32 %v2309, %v2273
        %v2342 = vmax.f32 %v2310, %v2274
        %v2343 = vmax.f32 %v2311, %v2275
        %v2344 = vmax.f32 %v2312, %v2276
        %v2345 = vmax.f32 %v2313, %v2277
        %v2346 = vmax.f32 %v2314, %v2278
        %v2347 = vmax.f32 %v2315, %v2279
        %v2348 = vmax.f32 %v2316, %v2280
        %v2349 = vmax.f32 %v2317, %v2281
        %v2350 = vmax.f32 %v2318, %v2282
        %v2351 = vmax.f32 %v2319, %v2283
        %v2352 = vmax.f32 %v2320, %v2284
        %v2353 = vmax.f32 %v2321, %v2285
        %v2354 = vmax.f32 %v2322, %v2286
        %v2355 = vmax.f32 %v2323, %v2287
        %v2356 = vmax.f32 %v2324, %v2288
        %v2357 = vmax.f32 %v2325, %v2289
        %v2358 = vmax.f32 %v2326, %v2290
        %v2359 = vmax.f32 %v2327, %v2291
        %v2360 = vmax.f32 %v2328, %v2292
        %v2361 = vmax.f32 %v2329, %v2263
        %v2362 = vmax.f32 %v2330, %v2264
        %v2363 = vmax.f32 %v2331, %v2265
        %v2364 = vmax.f32 %v2332, %v2266
        %v2365 = vmax.f32 %v2333, %v2267
        %v2366 = vmax.f32 %v2334, %v2268
        %v2367 = vmax.f32 %v2335, %v2269
        %v2368 = vmax.f32 %v2336, %v2270
        %v2369 = vmax.f32 %v2337, %v2271
        %v2370 = vmax.f32 %v2338, %v2272
        %v2371 = vmax.f32 %v2339, %v2273
        %v2372 = vmax.f32 %v2340, %v2274
        %v2373 = vmax.f32 %v2341, %v2275
        %v2374 = vmax.f32 %v2342, %v2276
        %v2375 = vmax.f32 %v2343, %v2277
        %v2376 = vmax.f32 %v2344, %v2278
        %v2377 = vmax.f32 %v2345, %v2279
        %v2378 = vmax.f32 %v2346, %v2280
        %v2379 = vmax.f32 %v2347, %v2281
        %v2380 = vmax.f32 %v2348, %v2282
        %v2381 = vmax.f32 %v2349, %v2283
        %v2382 = vmax.f32 %v2350, %v2284
        %v2383 = vmax.f32 %v2351, %v2285
        %v2384 = vmax.f32 %v2352, %v2286
        %v2385 = vmax.f32 %v2353, %v2287
        %v2386 = vmax.f32 %v2354, %v2288
        %v2387 = vmax.f32 %v2355, %v2289
        %v2388 = vmax.f32 %v2356, %v2290
        %v2389 = vmax.f32 %v2357, %v2291
        %v2390 = vmax.f32 %v2358, %v2292
        %v2391 = vmax.f32 %v2359, %v2293
        %v2392 = vmax.f32 %v2360, %v2294
        %v2393 = vmax.f32 %v2361, %v2265
        %v2394 = vmax.f32 %v2362, %v2266
        %v2395 = vmax.f32 %v2363, %v2267
        %v2396 = vmax.f32 %v2364, %v2268
        %v2397 = vmax.f32 %v2365, %v2269
        %v2398 = vmax.f32 %v2366, %v2270
        %v2399 = vmax.f32 %v2367, %v2271
        %v2400 = vmax.f32 %v2368, %v2272
        %v2401 = vmax.f32 %v2369, %v2273
        %v2402 = vmax.f32 %v2370, %v2274
        %v2403 = vmax.f32 %v2371, %v2275
        %v2404 = vmax.f32 %v2372, %v2276
        %v2405 = vmax.f32 %v2373, %v2277
        %v2406 = vmax.f32 %v2374, %v2278
        %v2407 = vmax.f32 %v2375, %v2279
        %v2408 = vmax.f32 %v2376, %v2280
        %v2409 = vmax.f32 %v2377, %v2281
        %v2410 = vmax.f32 %v2378, %v2282
        %v2411 = vmax.f32 %v2379, %v2283
        %v2412 = vmax.f32 %v2380, %v2284
        %v2413 = vmax.f32 %v2381, %v2285
        %v2414 = vmax.f32 %v2382, %v2286
        %v2415 = vmax.f32 %v2383, %v2287
        %v2416 = vmax.f32 %v2384, %v2288
        %v2417 = vmax.f32 %v2385, %v2289
        %v2418 = vmax.f32 %v2386, %v2290
        %v2419 = vmax.f32 %v2387, %v2291
        %v2420 = vmax.f32 %v2388, %v2292
        %v2421 = vmax.f32 %v2389, %v2293
        %v2422 = vmax.f32 %v2390, %v2294
        %v2423 = vmax.f32 %v2391, %v2295
        %v2424 = vmax.f32 %v2392, %v2296
        %v2425 = vpack.c.bf16 %v2394, %v2393
        %v2426 = vpack.c.bf16 %v2396, %v2395
        %v2427 = vpack.c.bf16 %v2398, %v2397
        %v2428 = vpack.c.bf16 %v2400, %v2399
        %v2429 = vpack.c.bf16 %v2402, %v2401
        %v2430 = vpack.c.bf16 %v2404, %v2403
        %v2431 = vpack.c.bf16 %v2406, %v2405
        %v2432 = vpack.c.bf16 %v2408, %v2407
        %v2433 = vpack.c.bf16 %v2410, %v2409
        %v2434 = vpack.c.bf16 %v2412, %v2411
        %v2435 = vpack.c.bf16 %v2414, %v2413
        %v2436 = vpack.c.bf16 %v2416, %v2415
        %v2437 = vpack.c.bf16 %v2418, %v2417
        %v2438 = vpack.c.bf16 %v2420, %v2419
        %v2439 = vpack.c.bf16 %v2422, %v2421
        %v2440 = vpack.c.bf16 %v2424, %v2423
        %s2441 = scalar_lea.vmem %s4, 8
        %v2442 = vld [vmem:[%s2441] sm:$0xf]
        %v2444 = vsel %vm298, %v2425, 0
        %v2447 = vsel %vm298, %v2426, 0
        %v2450 = vsel %vm298, %v2427, 0
        %v2453 = vsel %vm298, %v2428, 0
        %v2456 = vsel %vm298, %v2429, 0
        %v2459 = vsel %vm298, %v2430, 0
        %v2462 = vsel %vm298, %v2431, 0
        %v2465 = vsel %vm298, %v2432, 0
        %v2468 = vsel %vm298, %v2433, 0
        %v2471 = vsel %vm298, %v2434, 0
        %v2474 = vsel %vm298, %v2435, 0
        %v2477 = vsel %vm298, %v2436, 0
        %v2480 = vsel %vm298, %v2437, 0
        %v2483 = vsel %vm298, %v2438, 0
        %v2486 = vsel %vm298, %v2439, 0
        %v2489 = vsel %vm298, %v2440, 0
        %v2492 = vsel %vm1528, %v2442, 0
        %2494 = vmatprep.subr.bf16.mxu0 0
        %2495 = vmatpush1.bf16.msra.mxu0 %v2492
        %2496 = vmatprep.subr.bf16.mxu0 0
        %2497 = vmatpush1.bf16.msra.mxu0 0
        %2498 = vmatprep.subr.bf16.mxu0 0
        %2499 = vmatpush1.bf16.msra.mxu0 0
        %2500 = vmatprep.subr.bf16.mxu0 0
        %2501 = vmatpush1.bf16.msra.mxu0 0
        %2502 = vmatprep.subr.bf16.mxu0 0
        %2503 = vmatpush1.bf16.msra.mxu0 0
        %2504 = vmatprep.subr.bf16.mxu0 0
        %2505 = vmatpush1.bf16.msra.mxu0 0
        %2506 = vmatprep.subr.bf16.mxu0 0
        %2507 = vmatpush1.bf16.msra.mxu0 0
        %2508 = vmatprep.subr.bf16.mxu0 0
        %2509 = vmatpush1.bf16.msra.mxu0 0
        %2510 = vmatprep.subr.bf16.mxu0 0
        %2511 = vmatpush1.bf16.msra.mxu0 0
        %2512 = vmatprep.subr.bf16.mxu0 0
        %2513 = vmatpush1.bf16.msra.mxu0 0
        %2514 = vmatprep.subr.bf16.mxu0 0
        %2515 = vmatpush1.bf16.msra.mxu0 0
        %2516 = vmatprep.subr.bf16.mxu0 0
        %2517 = vmatpush1.bf16.msra.mxu0 0
        %2518 = vmatprep.subr.bf16.mxu0 0
        %2519 = vmatpush1.bf16.msra.mxu0 0
        %2520 = vmatprep.subr.bf16.mxu0 0
        %2521 = vmatpush1.bf16.msra.mxu0 0
        %2522 = vmatprep.subr.bf16.mxu0 0
        %2523 = vmatpush1.bf16.msra.mxu0 0
        %2524 = vmatprep.subr.bf16.mxu0 0
        %2525 = vmatpush1.bf16.msra.mxu0 0
        %2526 = vmatprep.mubr.bf16.mxu0 0
        %2527 = vmatmul.mubr.bf16.gmra.mrb[0].mxu0 %v2444
        %v2528 = vpop.f32.mrb[0].mxu0
        %v2529 = vadd.f32 0.0, %v2528
        %v2530 = vpop.f32.mrb[0].mxu0
        %v2531 = vpop.f32.mrb[0].mxu0
        %v2532 = vadd.f32 0.0, %v2531
        %v2533 = vpop.f32.mrb[0].mxu0
        %2534 = vmatprep.mubr.bf16.mxu0 0
        %2535 = vmatmul.mubr.bf16.gmra.mrb[0].mxu0 %v2447
        %v2536 = vpop.f32.mrb[0].mxu0
        %v2537 = vadd.f32 0.0, %v2536
        %v2538 = vpop.f32.mrb[0].mxu0
        %v2539 = vpop.f32.mrb[0].mxu0
        %v2540 = vadd.f32 0.0, %v2539
        %v2541 = vpop.f32.mrb[0].mxu0
        %2542 = vmatprep.mubr.bf16.mxu0 0
        %2543 = vmatmul.mubr.bf16.gmra.mrb[0].mxu0 %v2450
        %v2544 = vpop.f32.mrb[0].mxu0
        %v2545 = vadd.f32 0.0, %v2544
        %v2546 = vpop.f32.mrb[0].mxu0
        %v2547 = vpop.f32.mrb[0].mxu0
        %v2548 = vadd.f32 0.0, %v2547
        %v2549 = vpop.f32.mrb[0].mxu0
        %2550 = vmatprep.mubr.bf16.mxu0 0
        %2551 = vmatmul.mubr.bf16.gmra.mrb[0].mxu0 %v2453
        %v2552 = vpop.f32.mrb[0].mxu0
        %v2553 = vadd.f32 0.0, %v2552
        %v2554 = vpop.f32.mrb[0].mxu0
        %v2555 = vpop.f32.mrb[0].mxu0
        %v2556 = vadd.f32 0.0, %v2555
        %v2557 = vpop.f32.mrb[0].mxu0
        %2558 = vmatprep.mubr.bf16.mxu0 0
        %2559 = vmatmul.mubr.bf16.gmra.mrb[0].mxu0 %v2456
        %v2560 = vpop.f32.mrb[0].mxu0
        %v2561 = vadd.f32 0.0, %v2560
        %v2562 = vpop.f32.mrb[0].mxu0
        %v2563 = vpop.f32.mrb[0].mxu0
        %v2564 = vadd.f32 0.0, %v2563
        %v2565 = vpop.f32.mrb[0].mxu0
        %2566 = vmatprep.mubr.bf16.mxu0 0
        %2567 = vmatmul.mubr.bf16.gmra.mrb[0].mxu0 %v2459
        %v2568 = vpop.f32.mrb[0].mxu0
        %v2569 = vadd.f32 0.0, %v2568
        %v2570 = vpop.f32.mrb[0].mxu0
        %v2571 = vpop.f32.mrb[0].mxu0
        %v2572 = vadd.f32 0.0, %v2571
        %v2573 = vpop.f32.mrb[0].mxu0
        %2574 = vmatprep.mubr.bf16.mxu0 0
        %2575 = vmatmul.mubr.bf16.gmra.mrb[0].mxu0 %v2462
        %v2576 = vpop.f32.mrb[0].mxu0
        %v2577 = vadd.f32 0.0, %v2576
        %v2578 = vpop.f32.mrb[0].mxu0
        %v2579 = vpop.f32.mrb[0].mxu0
        %v2580 = vadd.f32 0.0, %v2579
        %v2581 = vpop.f32.mrb[0].mxu0
        %2582 = vmatprep.mubr.bf16.mxu0 0
        %2583 = vmatmul.mubr.bf16.gmra.mrb[0].mxu0 %v2465
        %v2584 = vpop.f32.mrb[0].mxu0
        %v2585 = vadd.f32 0.0, %v2584
        %v2586 = vpop.f32.mrb[0].mxu0
        %v2587 = vpop.f32.mrb[0].mxu0
        %v2588 = vadd.f32 0.0, %v2587
        %v2589 = vpop.f32.mrb[0].mxu0
        %2590 = vmatprep.mubr.bf16.mxu0 0
        %2591 = vmatmul.mubr.bf16.gmra.mrb[0].mxu0 %v2468
        %v2592 = vpop.f32.mrb[0].mxu0
        %v2593 = vadd.f32 0.0, %v2592
        %v2594 = vpop.f32.mrb[0].mxu0
        %v2595 = vpop.f32.mrb[0].mxu0
        %v2596 = vadd.f32 0.0, %v2595
        %v2597 = vpop.f32.mrb[0].mxu0
        %2598 = vmatprep.mubr.bf16.mxu0 0
        %2599 = vmatmul.mubr.bf16.gmra.mrb[0].mxu0 %v2471
        %v2600 = vpop.f32.mrb[0].mxu0
        %v2601 = vadd.f32 0.0, %v2600
        %v2602 = vpop.f32.mrb[0].mxu0
        %v2603 = vpop.f32.mrb[0].mxu0
        %v2604 = vadd.f32 0.0, %v2603
        %v2605 = vpop.f32.mrb[0].mxu0
        %2606 = vmatprep.mubr.bf16.mxu0 0
        %2607 = vmatmul.mubr.bf16.gmra.mrb[0].mxu0 %v2474
        %v2608 = vpop.f32.mrb[0].mxu0
        %v2609 = vadd.f32 0.0, %v2608
        %v2610 = vpop.f32.mrb[0].mxu0
        %v2611 = vpop.f32.mrb[0].mxu0
        %v2612 = vadd.f32 0.0, %v2611
        %v2613 = vpop.f32.mrb[0].mxu0
        %2614 = vmatprep.mubr.bf16.mxu0 0
        %2615 = vmatmul.mubr.bf16.gmra.mrb[0].mxu0 %v2477
        %v2616 = vpop.f32.mrb[0].mxu0
        %v2617 = vadd.f32 0.0, %v2616
        %v2618 = vpop.f32.mrb[0].mxu0
        %v2619 = vpop.f32.mrb[0].mxu0
        %v2620 = vadd.f32 0.0, %v2619
        %v2621 = vpop.f32.mrb[0].mxu0
        %2622 = vmatprep.mubr.bf16.mxu0 0
        %2623 = vmatmul.mubr.bf16.gmra.mrb[0].mxu0 %v2480
        %v2624 = vpop.f32.mrb[0].mxu0
        %v2625 = vadd.f32 0.0, %v2624
        %v2626 = vpop.f32.mrb[0].mxu0
        %v2627 = vpop.f32.mrb[0].mxu0
        %v2628 = vadd.f32 0.0, %v2627
        %v2629 = vpop.f32.mrb[0].mxu0
        %2630 = vmatprep.mubr.bf16.mxu0 0
        %2631 = vmatmul.mubr.bf16.gmra.mrb[0].mxu0 %v2483
        %v2632 = vpop.f32.mrb[0].mxu0
        %v2633 = vadd.f32 0.0, %v2632
        %v2634 = vpop.f32.mrb[0].mxu0
        %v2635 = vpop.f32.mrb[0].mxu0
        %v2636 = vadd.f32 0.0, %v2635
        %v2637 = vpop.f32.mrb[0].mxu0
        %2638 = vmatprep.mubr.bf16.mxu0 0
        %2639 = vmatmul.mubr.bf16.gmra.mrb[0].mxu0 %v2486
        %v2640 = vpop.f32.mrb[0].mxu0
        %v2641 = vadd.f32 0.0, %v2640
        %v2642 = vpop.f32.mrb[0].mxu0
        %v2643 = vpop.f32.mrb[0].mxu0
        %v2644 = vadd.f32 0.0, %v2643
        %v2645 = vpop.f32.mrb[0].mxu0
        %2646 = vmatprep.mubr.bf16.mxu0 0
        %2647 = vmatmul.mubr.bf16.gmra.mrb[0].mxu0 %v2489
        %v2648 = vpop.f32.mrb[0].mxu0
        %v2649 = vadd.f32 0.0, %v2648
        %v2650 = vpop.f32.mrb[0].mxu0
        %v2651 = vpop.f32.mrb[0].mxu0
        %v2652 = vadd.f32 0.0, %v2651
        %v2653 = vpop.f32.mrb[0].mxu0
        %2654 = vdwg.mxu0
        %v2655 = vadd.f32 %v1779, %v2529
        %v2656 = vadd.f32 %v1782, %v2532
        %v2657 = vadd.f32 %v1787, %v2537
        %v2658 = vadd.f32 %v1790, %v2540
        %v2659 = vadd.f32 %v1795, %v2545
        %v2660 = vadd.f32 %v1798, %v2548
        %v2661 = vadd.f32 %v1803, %v2553
        %v2662 = vadd.f32 %v1806, %v2556
        %v2663 = vadd.f32 %v1811, %v2561
        %v2664 = vadd.f32 %v1814, %v2564
        %v2665 = vadd.f32 %v1819, %v2569
        %v2666 = vadd.f32 %v1822, %v2572
        %v2667 = vadd.f32 %v1827, %v2577
        %v2668 = vadd.f32 %v1830, %v2580
        %v2669 = vadd.f32 %v1835, %v2585
        %v2670 = vadd.f32 %v1838, %v2588
        %v2671 = vadd.f32 %v1843, %v2593
        %v2672 = vadd.f32 %v1846, %v2596
        %v2673 = vadd.f32 %v1851, %v2601
        %v2674 = vadd.f32 %v1854, %v2604
        %v2675 = vadd.f32 %v1859, %v2609
        %v2676 = vadd.f32 %v1862, %v2612
        %v2677 = vadd.f32 %v1867, %v2617
        %v2678 = vadd.f32 %v1870, %v2620
        %v2679 = vadd.f32 %v1875, %v2625
        %v2680 = vadd.f32 %v1878, %v2628
        %v2681 = vadd.f32 %v1883, %v2633
        %v2682 = vadd.f32 %v1886, %v2636
        %v2683 = vadd.f32 %v1891, %v2641
        %v2684 = vadd.f32 %v1894, %v2644
        %v2685 = vadd.f32 %v1899, %v2649
        %v2686 = vadd.f32 %v1902, %v2652
        %2687 = vst.msk [vmem:[%s941 + $0x8] sm:$0xff] %vm298, %v2393
        %2688 = vst.msk [vmem:[%s941 + $0x10] sm:$0xff] %vm298, %v2394
        %2689 = vst.msk [vmem:[%s941 + $0x28] sm:$0xff] %vm298, %v2395
        %2690 = vst.msk [vmem:[%s941 + $0x30] sm:$0xff] %vm298, %v2396
        %2691 = vst.msk [vmem:[%s941 + $0x48] sm:$0xff] %vm298, %v2397
        %2692 = vst.msk [vmem:[%s941 + $0x50] sm:$0xff] %vm298, %v2398
        %2693 = vst.msk [vmem:[%s941 + $0x68] sm:$0xff] %vm298, %v2399
        %2694 = vst.msk [vmem:[%s941 + $0x70] sm:$0xff] %vm298, %v2400
        %2695 = vst.msk [vmem:[%s941 + $0x88] sm:$0xff] %vm298, %v2401
        %2696 = vst.msk [vmem:[%s941 + $0x90] sm:$0xff] %vm298, %v2402
        %2697 = vst.msk [vmem:[%s941 + $0xa8] sm:$0xff] %vm298, %v2403
        %2698 = vst.msk [vmem:[%s941 + $0xb0] sm:$0xff] %vm298, %v2404
        %2699 = vst.msk [vmem:[%s941 + $0xc8] sm:$0xff] %vm298, %v2405
        %2700 = vst.msk [vmem:[%s941 + $0xd0] sm:$0xff] %vm298, %v2406
        %2701 = vst.msk [vmem:[%s941 + $0xe8] sm:$0xff] %vm298, %v2407
        %2702 = vst.msk [vmem:[%s941 + $0xf0] sm:$0xff] %vm298, %v2408
        %2703 = vst.msk [vmem:[%s941 + $0x108] sm:$0xff] %vm298, %v2409
        %2704 = vst.msk [vmem:[%s941 + $0x110] sm:$0xff] %vm298, %v2410
        %2705 = vst.msk [vmem:[%s941 + $0x128] sm:$0xff] %vm298, %v2411
        %2706 = vst.msk [vmem:[%s941 + $0x130] sm:$0xff] %vm298, %v2412
        %2707 = vst.msk [vmem:[%s941 + $0x148] sm:$0xff] %vm298, %v2413
        %2708 = vst.msk [vmem:[%s941 + $0x150] sm:$0xff] %vm298, %v2414
        %2709 = vst.msk [vmem:[%s941 + $0x168] sm:$0xff] %vm298, %v2415
        %2710 = vst.msk [vmem:[%s941 + $0x170] sm:$0xff] %vm298, %v2416
        %2711 = vst.msk [vmem:[%s941 + $0x188] sm:$0xff] %vm298, %v2417
        %2712 = vst.msk [vmem:[%s941 + $0x190] sm:$0xff] %vm298, %v2418
        %2713 = vst.msk [vmem:[%s941 + $0x1a8] sm:$0xff] %vm298, %v2419
        %2714 = vst.msk [vmem:[%s941 + $0x1b0] sm:$0xff] %vm298, %v2420
        %2715 = vst.msk [vmem:[%s941 + $0x1c8] sm:$0xff] %vm298, %v2421
        %2716 = vst.msk [vmem:[%s941 + $0x1d0] sm:$0xff] %vm298, %v2422
        %2717 = vst.msk [vmem:[%s941 + $0x1e8] sm:$0xff] %vm298, %v2423
        %2718 = vst.msk [vmem:[%s941 + $0x1f0] sm:$0xff] %vm298, %v2424
        %v2719 = vld [vmem:[#allocation2 + $0x6] sm:$0xff]
        %v2720 = vld [vmem:[#allocation2 + $0xe] sm:$0xff]
        %v2721 = vld [vmem:[#allocation2 + $0x26] sm:$0xff]
        %v2722 = vld [vmem:[#allocation2 + $0x2e] sm:$0xff]
        %v2723 = vld [vmem:[#allocation2 + $0x46] sm:$0xff]
        %v2724 = vld [vmem:[#allocation2 + $0x4e] sm:$0xff]
        %v2725 = vld [vmem:[#allocation2 + $0x66] sm:$0xff]
        %v2726 = vld [vmem:[#allocation2 + $0x6e] sm:$0xff]
        %v2727 = vld [vmem:[#allocation2 + $0x86] sm:$0xff]
        %v2728 = vld [vmem:[#allocation2 + $0x8e] sm:$0xff]
        %v2729 = vld [vmem:[#allocation2 + $0xa6] sm:$0xff]
        %v2730 = vld [vmem:[#allocation2 + $0xae] sm:$0xff]
        %v2731 = vld [vmem:[#allocation2 + $0xc6] sm:$0xff]
        %v2732 = vld [vmem:[#allocation2 + $0xce] sm:$0xff]
        %v2733 = vld [vmem:[#allocation2 + $0xe6] sm:$0xff]
        %v2734 = vld [vmem:[#allocation2 + $0xee] sm:$0xff]
        %v2735 = vld [vmem:[#allocation2 + $0x106] sm:$0xff]
        %v2736 = vld [vmem:[#allocation2 + $0x10e] sm:$0xff]
        %v2737 = vld [vmem:[#allocation2 + $0x126] sm:$0xff]
        %v2738 = vld [vmem:[#allocation2 + $0x12e] sm:$0xff]
        %v2739 = vld [vmem:[#allocation2 + $0x146] sm:$0xff]
        %v2740 = vld [vmem:[#allocation2 + $0x14e] sm:$0xff]
        %v2741 = vld [vmem:[#allocation2 + $0x166] sm:$0xff]
        %v2742 = vld [vmem:[#allocation2 + $0x16e] sm:$0xff]
        %v2743 = vld [vmem:[#allocation2 + $0x186] sm:$0xff]
        %v2744 = vld [vmem:[#allocation2 + $0x18e] sm:$0xff]
        %v2745 = vld [vmem:[#allocation2 + $0x1a6] sm:$0xff]
        %v2746 = vld [vmem:[#allocation2 + $0x1ae] sm:$0xff]
        %v2747 = vld [vmem:[#allocation2 + $0x1c6] sm:$0xff]
        %v2748 = vld [vmem:[#allocation2 + $0x1ce] sm:$0xff]
        %v2749 = vld [vmem:[#allocation2 + $0x1e6] sm:$0xff]
        %v2750 = vld [vmem:[#allocation2 + $0x1ee] sm:$0xff]
        %v2751 = vld [vmem:[#allocation2 + $0x206] sm:$0xff]
        %v2752 = vld [vmem:[#allocation2 + $0x20e] sm:$0xff]
        %v2753 = vld [vmem:[#allocation2 + $0x226] sm:$0xff]
        %v2754 = vld [vmem:[#allocation2 + $0x22e] sm:$0xff]
        %v2755 = vld [vmem:[#allocation2 + $0x246] sm:$0xff]
        %v2756 = vld [vmem:[#allocation2 + $0x24e] sm:$0xff]
        %v2757 = vld [vmem:[#allocation2 + $0x266] sm:$0xff]
        %v2758 = vld [vmem:[#allocation2 + $0x26e] sm:$0xff]
        %v2759 = vld [vmem:[#allocation2 + $0x7] sm:$0xff]
        %v2760 = vld [vmem:[#allocation2 + $0xf] sm:$0xff]
        %v2761 = vld [vmem:[#allocation2 + $0x27] sm:$0xff]
        %v2762 = vld [vmem:[#allocation2 + $0x2f] sm:$0xff]
        %v2763 = vld [vmem:[#allocation2 + $0x47] sm:$0xff]
        %v2764 = vld [vmem:[#allocation2 + $0x4f] sm:$0xff]
        %v2765 = vld [vmem:[#allocation2 + $0x67] sm:$0xff]
        %v2766 = vld [vmem:[#allocation2 + $0x6f] sm:$0xff]
        %v2767 = vld [vmem:[#allocation2 + $0x87] sm:$0xff]
        %v2768 = vld [vmem:[#allocation2 + $0x8f] sm:$0xff]
        %v2769 = vld [vmem:[#allocation2 + $0xa7] sm:$0xff]
        %v2770 = vld [vmem:[#allocation2 + $0xaf] sm:$0xff]
        %v2771 = vld [vmem:[#allocation2 + $0xc7] sm:$0xff]
        %v2772 = vld [vmem:[#allocation2 + $0xcf] sm:$0xff]
        %v2773 = vld [vmem:[#allocation2 + $0xe7] sm:$0xff]
        %v2774 = vld [vmem:[#allocation2 + $0xef] sm:$0xff]
        %v2775 = vld [vmem:[#allocation2 + $0x107] sm:$0xff]
        %v2776 = vld [vmem:[#allocation2 + $0x10f] sm:$0xff]
        %v2777 = vld [vmem:[#allocation2 + $0x127] sm:$0xff]
        %v2778 = vld [vmem:[#allocation2 + $0x12f] sm:$0xff]
        %v2779 = vld [vmem:[#allocation2 + $0x147] sm:$0xff]
        %v2780 = vld [vmem:[#allocation2 + $0x14f] sm:$0xff]
        %v2781 = vld [vmem:[#allocation2 + $0x167] sm:$0xff]
        %v2782 = vld [vmem:[#allocation2 + $0x16f] sm:$0xff]
        %v2783 = vld [vmem:[#allocation2 + $0x187] sm:$0xff]
        %v2784 = vld [vmem:[#allocation2 + $0x18f] sm:$0xff]
        %v2785 = vld [vmem:[#allocation2 + $0x1a7] sm:$0xff]
        %v2786 = vld [vmem:[#allocation2 + $0x1af] sm:$0xff]
        %v2787 = vld [vmem:[#allocation2 + $0x1c7] sm:$0xff]
        %v2788 = vld [vmem:[#allocation2 + $0x1cf] sm:$0xff]
        %v2789 = vld [vmem:[#allocation2 + $0x1e7] sm:$0xff]
        %v2790 = vld [vmem:[#allocation2 + $0x1ef] sm:$0xff]
        %v2791 = vld [vmem:[#allocation2 + $0x207] sm:$0xff]
        %v2792 = vld [vmem:[#allocation2 + $0x20f] sm:$0xff]
        %v2793 = vld [vmem:[#allocation2 + $0x227] sm:$0xff]
        %v2794 = vld [vmem:[#allocation2 + $0x22f] sm:$0xff]
        %v2795 = vld [vmem:[#allocation2 + $0x247] sm:$0xff]
        %v2796 = vld [vmem:[#allocation2 + $0x24f] sm:$0xff]
        %v2797 = vld [vmem:[#allocation2 + $0x267] sm:$0xff]
        %v2798 = vld [vmem:[#allocation2 + $0x26f] sm:$0xff]
        %v2799 = vmax.f32 %v2719, %v2759
        %v2800 = vmax.f32 %v2720, %v2760
        %v2801 = vmax.f32 %v2721, %v2761
        %v2802 = vmax.f32 %v2722, %v2762
        %v2803 = vmax.f32 %v2723, %v2763
        %v2804 = vmax.f32 %v2724, %v2764
        %v2805 = vmax.f32 %v2725, %v2765
        %v2806 = vmax.f32 %v2726, %v2766
        %v2807 = vmax.f32 %v2727, %v2767
        %v2808 = vmax.f32 %v2728, %v2768
        %v2809 = vmax.f32 %v2729, %v2769
        %v2810 = vmax.f32 %v2730, %v2770
        %v2811 = vmax.f32 %v2731, %v2771
        %v2812 = vmax.f32 %v2732, %v2772
        %v2813 = vmax.f32 %v2733, %v2773
        %v2814 = vmax.f32 %v2734, %v2774
        %v2815 = vmax.f32 %v2735, %v2775
        %v2816 = vmax.f32 %v2736, %v2776
        %v2817 = vmax.f32 %v2737, %v2777
        %v2818 = vmax.f32 %v2738, %v2778
        %v2819 = vmax.f32 %v2739, %v2779
        %v2820 = vmax.f32 %v2740, %v2780
        %v2821 = vmax.f32 %v2741, %v2781
        %v2822 = vmax.f32 %v2742, %v2782
        %v2823 = vmax.f32 %v2743, %v2783
        %v2824 = vmax.f32 %v2744, %v2784
        %v2825 = vmax.f32 %v2745, %v2785
        %v2826 = vmax.f32 %v2746, %v2786
        %v2827 = vmax.f32 %v2747, %v2787
        %v2828 = vmax.f32 %v2748, %v2788
        %v2829 = vmax.f32 %v2749, %v2789
        %v2830 = vmax.f32 %v2750, %v2790
        %v2831 = vmax.f32 %v2751, %v2791
        %v2832 = vmax.f32 %v2752, %v2792
        %v2833 = vmax.f32 %v2753, %v2793
        %v2834 = vmax.f32 %v2754, %v2794
        %v2835 = vmax.f32 %v2755, %v2795
        %v2836 = vmax.f32 %v2756, %v2796
        %v2837 = vmax.f32 %v2757, %v2797
        %v2838 = vmax.f32 %v2758, %v2798
        %v2839 = vld [vmem:[#allocation2 + $0x8] sm:$0xff]
        %v2840 = vld [vmem:[#allocation2 + $0x10] sm:$0xff]
        %v2841 = vld [vmem:[#allocation2 + $0x28] sm:$0xff]
        %v2842 = vld [vmem:[#allocation2 + $0x30] sm:$0xff]
        %v2843 = vld [vmem:[#allocation2 + $0x48] sm:$0xff]
        %v2844 = vld [vmem:[#allocation2 + $0x50] sm:$0xff]
        %v2845 = vld [vmem:[#allocation2 + $0x68] sm:$0xff]
        %v2846 = vld [vmem:[#allocation2 + $0x70] sm:$0xff]
        %v2847 = vld [vmem:[#allocation2 + $0x88] sm:$0xff]
        %v2848 = vld [vmem:[#allocation2 + $0x90] sm:$0xff]
        %v2849 = vld [vmem:[#allocation2 + $0xa8] sm:$0xff]
        %v2850 = vld [vmem:[#allocation2 + $0xb0] sm:$0xff]
        %v2851 = vld [vmem:[#allocation2 + $0xc8] sm:$0xff]
        %v2852 = vld [vmem:[#allocation2 + $0xd0] sm:$0xff]
        %v2853 = vld [vmem:[#allocation2 + $0xe8] sm:$0xff]
        %v2854 = vld [vmem:[#allocation2 + $0xf0] sm:$0xff]
        %v2855 = vld [vmem:[#allocation2 + $0x108] sm:$0xff]
        %v2856 = vld [vmem:[#allocation2 + $0x110] sm:$0xff]
        %v2857 = vld [vmem:[#allocation2 + $0x128] sm:$0xff]
        %v2858 = vld [vmem:[#allocation2 + $0x130] sm:$0xff]
        %v2859 = vld [vmem:[#allocation2 + $0x148] sm:$0xff]
        %v2860 = vld [vmem:[#allocation2 + $0x150] sm:$0xff]
        %v2861 = vld [vmem:[#allocation2 + $0x168] sm:$0xff]
        %v2862 = vld [vmem:[#allocation2 + $0x170] sm:$0xff]
        %v2863 = vld [vmem:[#allocation2 + $0x188] sm:$0xff]
        %v2864 = vld [vmem:[#allocation2 + $0x190] sm:$0xff]
        %v2865 = vld [vmem:[#allocation2 + $0x1a8] sm:$0xff]
        %v2866 = vld [vmem:[#allocation2 + $0x1b0] sm:$0xff]
        %v2867 = vld [vmem:[#allocation2 + $0x1c8] sm:$0xff]
        %v2868 = vld [vmem:[#allocation2 + $0x1d0] sm:$0xff]
        %v2869 = vld [vmem:[#allocation2 + $0x1e8] sm:$0xff]
        %v2870 = vld [vmem:[#allocation2 + $0x1f0] sm:$0xff]
        %v2871 = vld [vmem:[#allocation2 + $0x208] sm:$0xff]
        %v2872 = vld [vmem:[#allocation2 + $0x210] sm:$0xff]
        %v2873 = vld [vmem:[#allocation2 + $0x228] sm:$0xff]
        %v2874 = vld [vmem:[#allocation2 + $0x230] sm:$0xff]
        %v2875 = vld [vmem:[#allocation2 + $0x248] sm:$0xff]
        %v2876 = vld [vmem:[#allocation2 + $0x250] sm:$0xff]
        %v2877 = vld [vmem:[#allocation2 + $0x268] sm:$0xff]
        %v2878 = vld [vmem:[#allocation2 + $0x270] sm:$0xff]
        %v2879 = vmax.f32 %v2799, %v2839
        %v2880 = vmax.f32 %v2800, %v2840
        %v2881 = vmax.f32 %v2801, %v2841
        %v2882 = vmax.f32 %v2802, %v2842
        %v2883 = vmax.f32 %v2803, %v2843
        %v2884 = vmax.f32 %v2804, %v2844
        %v2885 = vmax.f32 %v2805, %v2845
        %v2886 = vmax.f32 %v2806, %v2846
        %v2887 = vmax.f32 %v2807, %v2847
        %v2888 = vmax.f32 %v2808, %v2848
        %v2889 = vmax.f32 %v2809, %v2849
        %v2890 = vmax.f32 %v2810, %v2850
        %v2891 = vmax.f32 %v2811, %v2851
        %v2892 = vmax.f32 %v2812, %v2852
        %v2893 = vmax.f32 %v2813, %v2853
        %v2894 = vmax.f32 %v2814, %v2854
        %v2895 = vmax.f32 %v2815, %v2855
        %v2896 = vmax.f32 %v2816, %v2856
        %v2897 = vmax.f32 %v2817, %v2857
        %v2898 = vmax.f32 %v2818, %v2858
        %v2899 = vmax.f32 %v2819, %v2859
        %v2900 = vmax.f32 %v2820, %v2860
        %v2901 = vmax.f32 %v2821, %v2861
        %v2902 = vmax.f32 %v2822, %v2862
        %v2903 = vmax.f32 %v2823, %v2863
        %v2904 = vmax.f32 %v2824, %v2864
        %v2905 = vmax.f32 %v2825, %v2865
        %v2906 = vmax.f32 %v2826, %v2866
        %v2907 = vmax.f32 %v2827, %v2867
        %v2908 = vmax.f32 %v2828, %v2868
        %v2909 = vmax.f32 %v2829, %v2869
        %v2910 = vmax.f32 %v2830, %v2870
        %v2911 = vmax.f32 %v2831, %v2871
        %v2912 = vmax.f32 %v2832, %v2872
        %v2913 = vmax.f32 %v2833, %v2873
        %v2914 = vmax.f32 %v2834, %v2874
        %v2915 = vmax.f32 %v2835, %v2875
        %v2916 = vmax.f32 %v2836, %v2876
        %v2917 = vmax.f32 %v2837, %v2877
        %v2918 = vmax.f32 %v2838, %v2878
        %v2919 = vld [vmem:[#allocation2 + $0x9] sm:$0xff]
        %v2920 = vld [vmem:[#allocation2 + $0x11] sm:$0xff]
        %v2921 = vld [vmem:[#allocation2 + $0x29] sm:$0xff]
        %v2922 = vld [vmem:[#allocation2 + $0x31] sm:$0xff]
        %v2923 = vld [vmem:[#allocation2 + $0x49] sm:$0xff]
        %v2924 = vld [vmem:[#allocation2 + $0x51] sm:$0xff]
        %v2925 = vld [vmem:[#allocation2 + $0x69] sm:$0xff]
        %v2926 = vld [vmem:[#allocation2 + $0x71] sm:$0xff]
        %v2927 = vld [vmem:[#allocation2 + $0x89] sm:$0xff]
        %v2928 = vld [vmem:[#allocation2 + $0x91] sm:$0xff]
        %v2929 = vld [vmem:[#allocation2 + $0xa9] sm:$0xff]
        %v2930 = vld [vmem:[#allocation2 + $0xb1] sm:$0xff]
        %v2931 = vld [vmem:[#allocation2 + $0xc9] sm:$0xff]
        %v2932 = vld [vmem:[#allocation2 + $0xd1] sm:$0xff]
        %v2933 = vld [vmem:[#allocation2 + $0xe9] sm:$0xff]
        %v2934 = vld [vmem:[#allocation2 + $0xf1] sm:$0xff]
        %v2935 = vld [vmem:[#allocation2 + $0x109] sm:$0xff]
        %v2936 = vld [vmem:[#allocation2 + $0x111] sm:$0xff]
        %v2937 = vld [vmem:[#allocation2 + $0x129] sm:$0xff]
        %v2938 = vld [vmem:[#allocation2 + $0x131] sm:$0xff]
        %v2939 = vld [vmem:[#allocation2 + $0x149] sm:$0xff]
        %v2940 = vld [vmem:[#allocation2 + $0x151] sm:$0xff]
        %v2941 = vld [vmem:[#allocation2 + $0x169] sm:$0xff]
        %v2942 = vld [vmem:[#allocation2 + $0x171] sm:$0xff]
        %v2943 = vld [vmem:[#allocation2 + $0x189] sm:$0xff]
        %v2944 = vld [vmem:[#allocation2 + $0x191] sm:$0xff]
        %v2945 = vld [vmem:[#allocation2 + $0x1a9] sm:$0xff]
        %v2946 = vld [vmem:[#allocation2 + $0x1b1] sm:$0xff]
        %v2947 = vld [vmem:[#allocation2 + $0x1c9] sm:$0xff]
        %v2948 = vld [vmem:[#allocation2 + $0x1d1] sm:$0xff]
        %v2949 = vld [vmem:[#allocation2 + $0x1e9] sm:$0xff]
        %v2950 = vld [vmem:[#allocation2 + $0x1f1] sm:$0xff]
        %v2951 = vld [vmem:[#allocation2 + $0x209] sm:$0xff]
        %v2952 = vld [vmem:[#allocation2 + $0x211] sm:$0xff]
        %v2953 = vld [vmem:[#allocation2 + $0x229] sm:$0xff]
        %v2954 = vld [vmem:[#allocation2 + $0x231] sm:$0xff]
        %v2955 = vld [vmem:[#allocation2 + $0x249] sm:$0xff]
        %v2956 = vld [vmem:[#allocation2 + $0x251] sm:$0xff]
        %v2957 = vld [vmem:[#allocation2 + $0x269] sm:$0xff]
        %v2958 = vld [vmem:[#allocation2 + $0x271] sm:$0xff]
        %v2959 = vmax.f32 %v2879, %v2919
        %v2960 = vmax.f32 %v2880, %v2920
        %v2961 = vmax.f32 %v2881, %v2921
        %v2962 = vmax.f32 %v2882, %v2922
        %v2963 = vmax.f32 %v2883, %v2923
        %v2964 = vmax.f32 %v2884, %v2924
        %v2965 = vmax.f32 %v2885, %v2925
        %v2966 = vmax.f32 %v2886, %v2926
        %v2967 = vmax.f32 %v2887, %v2927
        %v2968 = vmax.f32 %v2888, %v2928
        %v2969 = vmax.f32 %v2889, %v2929
        %v2970 = vmax.f32 %v2890, %v2930
        %v2971 = vmax.f32 %v2891, %v2931
        %v2972 = vmax.f32 %v2892, %v2932
        %v2973 = vmax.f32 %v2893, %v2933
        %v2974 = vmax.f32 %v2894, %v2934
        %v2975 = vmax.f32 %v2895, %v2935
        %v2976 = vmax.f32 %v2896, %v2936
        %v2977 = vmax.f32 %v2897, %v2937
        %v2978 = vmax.f32 %v2898, %v2938
        %v2979 = vmax.f32 %v2899, %v2939
        %v2980 = vmax.f32 %v2900, %v2940
        %v2981 = vmax.f32 %v2901, %v2941
        %v2982 = vmax.f32 %v2902, %v2942
        %v2983 = vmax.f32 %v2903, %v2943
        %v2984 = vmax.f32 %v2904, %v2944
        %v2985 = vmax.f32 %v2905, %v2945
        %v2986 = vmax.f32 %v2906, %v2946
        %v2987 = vmax.f32 %v2907, %v2947
        %v2988 = vmax.f32 %v2908, %v2948
        %v2989 = vmax.f32 %v2909, %v2949
        %v2990 = vmax.f32 %v2910, %v2950
        %v2991 = vmax.f32 %v2911, %v2951
        %v2992 = vmax.f32 %v2912, %v2952
        %v2993 = vmax.f32 %v2913, %v2953
        %v2994 = vmax.f32 %v2914, %v2954
        %v2995 = vmax.f32 %v2915, %v2955
        %v2996 = vmax.f32 %v2916, %v2956
        %v2997 = vmax.f32 %v2917, %v2957
        %v2998 = vmax.f32 %v2918, %v2958
        %v2999 = vld [vmem:[#allocation2 + $0xa] sm:$0xff]
        %v3000 = vld [vmem:[#allocation2 + $0x12] sm:$0xff]
        %v3001 = vld [vmem:[#allocation2 + $0x2a] sm:$0xff]
        %v3002 = vld [vmem:[#allocation2 + $0x32] sm:$0xff]
        %v3003 = vld [vmem:[#allocation2 + $0x4a] sm:$0xff]
        %v3004 = vld [vmem:[#allocation2 + $0x52] sm:$0xff]
        %v3005 = vld [vmem:[#allocation2 + $0x6a] sm:$0xff]
        %v3006 = vld [vmem:[#allocation2 + $0x72] sm:$0xff]
        %v3007 = vld [vmem:[#allocation2 + $0x8a] sm:$0xff]
        %v3008 = vld [vmem:[#allocation2 + $0x92] sm:$0xff]
        %v3009 = vld [vmem:[#allocation2 + $0xaa] sm:$0xff]
        %v3010 = vld [vmem:[#allocation2 + $0xb2] sm:$0xff]
        %v3011 = vld [vmem:[#allocation2 + $0xca] sm:$0xff]
        %v3012 = vld [vmem:[#allocation2 + $0xd2] sm:$0xff]
        %v3013 = vld [vmem:[#allocation2 + $0xea] sm:$0xff]
        %v3014 = vld [vmem:[#allocation2 + $0xf2] sm:$0xff]
        %v3015 = vld [vmem:[#allocation2 + $0x10a] sm:$0xff]
        %v3016 = vld [vmem:[#allocation2 + $0x112] sm:$0xff]
        %v3017 = vld [vmem:[#allocation2 + $0x12a] sm:$0xff]
        %v3018 = vld [vmem:[#allocation2 + $0x132] sm:$0xff]
        %v3019 = vld [vmem:[#allocation2 + $0x14a] sm:$0xff]
        %v3020 = vld [vmem:[#allocation2 + $0x152] sm:$0xff]
        %v3021 = vld [vmem:[#allocation2 + $0x16a] sm:$0xff]
        %v3022 = vld [vmem:[#allocation2 + $0x172] sm:$0xff]
        %v3023 = vld [vmem:[#allocation2 + $0x18a] sm:$0xff]
        %v3024 = vld [vmem:[#allocation2 + $0x192] sm:$0xff]
        %v3025 = vld [vmem:[#allocation2 + $0x1aa] sm:$0xff]
        %v3026 = vld [vmem:[#allocation2 + $0x1b2] sm:$0xff]
        %v3027 = vld [vmem:[#allocation2 + $0x1ca] sm:$0xff]
        %v3028 = vld [vmem:[#allocation2 + $0x1d2] sm:$0xff]
        %v3029 = vld [vmem:[#allocation2 + $0x1ea] sm:$0xff]
        %v3030 = vld [vmem:[#allocation2 + $0x1f2] sm:$0xff]
        %v3031 = vld [vmem:[#allocation2 + $0x20a] sm:$0xff]
        %v3032 = vld [vmem:[#allocation2 + $0x212] sm:$0xff]
        %v3033 = vld [vmem:[#allocation2 + $0x22a] sm:$0xff]
        %v3034 = vld [vmem:[#allocation2 + $0x232] sm:$0xff]
        %v3035 = vld [vmem:[#allocation2 + $0x24a] sm:$0xff]
        %v3036 = vld [vmem:[#allocation2 + $0x252] sm:$0xff]
        %v3037 = vld [vmem:[#allocation2 + $0x26a] sm:$0xff]
        %v3038 = vld [vmem:[#allocation2 + $0x272] sm:$0xff]
        %v3039 = vmax.f32 %v2959, %v2999
        %v3040 = vmax.f32 %v2960, %v3000
        %v3041 = vmax.f32 %v2961, %v3001
        %v3042 = vmax.f32 %v2962, %v3002
        %v3043 = vmax.f32 %v2963, %v3003
        %v3044 = vmax.f32 %v2964, %v3004
        %v3045 = vmax.f32 %v2965, %v3005
        %v3046 = vmax.f32 %v2966, %v3006
        %v3047 = vmax.f32 %v2967, %v3007
        %v3048 = vmax.f32 %v2968, %v3008
        %v3049 = vmax.f32 %v2969, %v3009
        %v3050 = vmax.f32 %v2970, %v3010
        %v3051 = vmax.f32 %v2971, %v3011
        %v3052 = vmax.f32 %v2972, %v3012
        %v3053 = vmax.f32 %v2973, %v3013
        %v3054 = vmax.f32 %v2974, %v3014
        %v3055 = vmax.f32 %v2975, %v3015
        %v3056 = vmax.f32 %v2976, %v3016
        %v3057 = vmax.f32 %v2977, %v3017
        %v3058 = vmax.f32 %v2978, %v3018
        %v3059 = vmax.f32 %v2979, %v3019
        %v3060 = vmax.f32 %v2980, %v3020
        %v3061 = vmax.f32 %v2981, %v3021
        %v3062 = vmax.f32 %v2982, %v3022
        %v3063 = vmax.f32 %v2983, %v3023
        %v3064 = vmax.f32 %v2984, %v3024
        %v3065 = vmax.f32 %v2985, %v3025
        %v3066 = vmax.f32 %v2986, %v3026
        %v3067 = vmax.f32 %v2987, %v3027
        %v3068 = vmax.f32 %v2988, %v3028
        %v3069 = vmax.f32 %v2989, %v3029
        %v3070 = vmax.f32 %v2990, %v3030
        %v3071 = vmax.f32 %v2991, %v3031
        %v3072 = vmax.f32 %v2992, %v3032
        %v3073 = vmax.f32 %v2993, %v3033
        %v3074 = vmax.f32 %v2994, %v3034
        %v3075 = vmax.f32 %v2995, %v3035
        %v3076 = vmax.f32 %v2996, %v3036
        %v3077 = vmax.f32 %v2997, %v3037
        %v3078 = vmax.f32 %v2998, %v3038
        %v3079 = vmax.f32 %v3039, %v3041
        %v3080 = vmax.f32 %v3040, %v3042
        %v3081 = vmax.f32 %v3041, %v3043
        %v3082 = vmax.f32 %v3042, %v3044
        %v3083 = vmax.f32 %v3043, %v3045
        %v3084 = vmax.f32 %v3044, %v3046
        %v3085 = vmax.f32 %v3045, %v3047
        %v3086 = vmax.f32 %v3046, %v3048
        %v3087 = vmax.f32 %v3047, %v3049
        %v3088 = vmax.f32 %v3048, %v3050
        %v3089 = vmax.f32 %v3049, %v3051
        %v3090 = vmax.f32 %v3050, %v3052
        %v3091 = vmax.f32 %v3051, %v3053
        %v3092 = vmax.f32 %v3052, %v3054
        %v3093 = vmax.f32 %v3053, %v3055
        %v3094 = vmax.f32 %v3054, %v3056
        %v3095 = vmax.f32 %v3055, %v3057
        %v3096 = vmax.f32 %v3056, %v3058
        %v3097 = vmax.f32 %v3057, %v3059
        %v3098 = vmax.f32 %v3058, %v3060
        %v3099 = vmax.f32 %v3059, %v3061
        %v3100 = vmax.f32 %v3060, %v3062
        %v3101 = vmax.f32 %v3061, %v3063
        %v3102 = vmax.f32 %v3062, %v3064
        %v3103 = vmax.f32 %v3063, %v3065
        %v3104 = vmax.f32 %v3064, %v3066
        %v3105 = vmax.f32 %v3065, %v3067
        %v3106 = vmax.f32 %v3066, %v3068
        %v3107 = vmax.f32 %v3067, %v3069
        %v3108 = vmax.f32 %v3068, %v3070
        %v3109 = vmax.f32 %v3069, %v3071
        %v3110 = vmax.f32 %v3070, %v3072
        %v3111 = vmax.f32 %v3079, %v3043
        %v3112 = vmax.f32 %v3080, %v3044
        %v3113 = vmax.f32 %v3081, %v3045
        %v3114 = vmax.f32 %v3082, %v3046
        %v3115 = vmax.f32 %v3083, %v3047
        %v3116 = vmax.f32 %v3084, %v3048
        %v3117 = vmax.f32 %v3085, %v3049
        %v3118 = vmax.f32 %v3086, %v3050
        %v3119 = vmax.f32 %v3087, %v3051
        %v3120 = vmax.f32 %v3088, %v3052
        %v3121 = vmax.f32 %v3089, %v3053
        %v3122 = vmax.f32 %v3090, %v3054
        %v3123 = vmax.f32 %v3091, %v3055
        %v3124 = vmax.f32 %v3092, %v3056
        %v3125 = vmax.f32 %v3093, %v3057
        %v3126 = vmax.f32 %v3094, %v3058
        %v3127 = vmax.f32 %v3095, %v3059
        %v3128 = vmax.f32 %v3096, %v3060
        %v3129 = vmax.f32 %v3097, %v3061
        %v3130 = vmax.f32 %v3098, %v3062
        %v3131 = vmax.f32 %v3099, %v3063
        %v3132 = vmax.f32 %v3100, %v3064
        %v3133 = vmax.f32 %v3101, %v3065
        %v3134 = vmax.f32 %v3102, %v3066
        %v3135 = vmax.f32 %v3103, %v3067
        %v3136 = vmax.f32 %v3104, %v3068
        %v3137 = vmax.f32 %v3105, %v3069
        %v3138 = vmax.f32 %v3106, %v3070
        %v3139 = vmax.f32 %v3107, %v3071
        %v3140 = vmax.f32 %v3108, %v3072
        %v3141 = vmax.f32 %v3109, %v3073
        %v3142 = vmax.f32 %v3110, %v3074
        %v3143 = vmax.f32 %v3111, %v3045
        %v3144 = vmax.f32 %v3112, %v3046
        %v3145 = vmax.f32 %v3113, %v3047
        %v3146 = vmax.f32 %v3114, %v3048
        %v3147 = vmax.f32 %v3115, %v3049
        %v3148 = vmax.f32 %v3116, %v3050
        %v3149 = vmax.f32 %v3117, %v3051
        %v3150 = vmax.f32 %v3118, %v3052
        %v3151 = vmax.f32 %v3119, %v3053
        %v3152 = vmax.f32 %v3120, %v3054
        %v3153 = vmax.f32 %v3121, %v3055
        %v3154 = vmax.f32 %v3122, %v3056
        %v3155 = vmax.f32 %v3123, %v3057
        %v3156 = vmax.f32 %v3124, %v3058
        %v3157 = vmax.f32 %v3125, %v3059
        %v3158 = vmax.f32 %v3126, %v3060
        %v3159 = vmax.f32 %v3127, %v3061
        %v3160 = vmax.f32 %v3128, %v3062
        %v3161 = vmax.f32 %v3129, %v3063
        %v3162 = vmax.f32 %v3130, %v3064
        %v3163 = vmax.f32 %v3131, %v3065
        %v3164 = vmax.f32 %v3132, %v3066
        %v3165 = vmax.f32 %v3133, %v3067
        %v3166 = vmax.f32 %v3134, %v3068
        %v3167 = vmax.f32 %v3135, %v3069
        %v3168 = vmax.f32 %v3136, %v3070
        %v3169 = vmax.f32 %v3137, %v3071
        %v3170 = vmax.f32 %v3138, %v3072
        %v3171 = vmax.f32 %v3139, %v3073
        %v3172 = vmax.f32 %v3140, %v3074
        %v3173 = vmax.f32 %v3141, %v3075
        %v3174 = vmax.f32 %v3142, %v3076
        %v3175 = vmax.f32 %v3143, %v3047
        %v3176 = vmax.f32 %v3144, %v3048
        %v3177 = vmax.f32 %v3145, %v3049
        %v3178 = vmax.f32 %v3146, %v3050
        %v3179 = vmax.f32 %v3147, %v3051
        %v3180 = vmax.f32 %v3148, %v3052
        %v3181 = vmax.f32 %v3149, %v3053
        %v3182 = vmax.f32 %v3150, %v3054
        %v3183 = vmax.f32 %v3151, %v3055
        %v3184 = vmax.f32 %v3152, %v3056
        %v3185 = vmax.f32 %v3153, %v3057
        %v3186 = vmax.f32 %v3154, %v3058
        %v3187 = vmax.f32 %v3155, %v3059
        %v3188 = vmax.f32 %v3156, %v3060
        %v3189 = vmax.f32 %v3157, %v3061
        %v3190 = vmax.f32 %v3158, %v3062
        %v3191 = vmax.f32 %v3159, %v3063
        %v3192 = vmax.f32 %v3160, %v3064
        %v3193 = vmax.f32 %v3161, %v3065
        %v3194 = vmax.f32 %v3162, %v3066
        %v3195 = vmax.f32 %v3163, %v3067
        %v3196 = vmax.f32 %v3164, %v3068
        %v3197 = vmax.f32 %v3165, %v3069
        %v3198 = vmax.f32 %v3166, %v3070
        %v3199 = vmax.f32 %v3167, %v3071
        %v3200 = vmax.f32 %v3168, %v3072
        %v3201 = vmax.f32 %v3169, %v3073
        %v3202 = vmax.f32 %v3170, %v3074
        %v3203 = vmax.f32 %v3171, %v3075
        %v3204 = vmax.f32 %v3172, %v3076
        %v3205 = vmax.f32 %v3173, %v3077
        %v3206 = vmax.f32 %v3174, %v3078
        %v3207 = vpack.c.bf16 %v3176, %v3175
        %v3208 = vpack.c.bf16 %v3178, %v3177
        %v3209 = vpack.c.bf16 %v3180, %v3179
        %v3210 = vpack.c.bf16 %v3182, %v3181
        %v3211 = vpack.c.bf16 %v3184, %v3183
        %v3212 = vpack.c.bf16 %v3186, %v3185
        %v3213 = vpack.c.bf16 %v3188, %v3187
        %v3214 = vpack.c.bf16 %v3190, %v3189
        %v3215 = vpack.c.bf16 %v3192, %v3191
        %v3216 = vpack.c.bf16 %v3194, %v3193
        %v3217 = vpack.c.bf16 %v3196, %v3195
        %v3218 = vpack.c.bf16 %v3198, %v3197
        %v3219 = vpack.c.bf16 %v3200, %v3199
        %v3220 = vpack.c.bf16 %v3202, %v3201
        %v3221 = vpack.c.bf16 %v3204, %v3203
        %v3222 = vpack.c.bf16 %v3206, %v3205
        %s3223 = scalar_lea.vmem %s4, 12
        %v3224 = vld [vmem:[%s3223] sm:$0xf]
        %v3226 = vsel %vm298, %v3207, 0
        %v3229 = vsel %vm298, %v3208, 0
        %v3232 = vsel %vm298, %v3209, 0
        %v3235 = vsel %vm298, %v3210, 0
        %v3238 = vsel %vm298, %v3211, 0
        %v3241 = vsel %vm298, %v3212, 0
        %v3244 = vsel %vm298, %v3213, 0
        %v3247 = vsel %vm298, %v3214, 0
        %v3250 = vsel %vm298, %v3215, 0
        %v3253 = vsel %vm298, %v3216, 0
        %v3256 = vsel %vm298, %v3217, 0
        %v3259 = vsel %vm298, %v3218, 0
        %v3262 = vsel %vm298, %v3219, 0
        %v3265 = vsel %vm298, %v3220, 0
        %v3268 = vsel %vm298, %v3221, 0
        %v3271 = vsel %vm298, %v3222, 0
        %v3274 = vsel %vm1528, %v3224, 0
        %3276 = vmatprep.subr.bf16.mxu0 0
        %3277 = vmatpush1.bf16.msra.mxu0 %v3274
        %3278 = vmatprep.subr.bf16.mxu0 0
        %3279 = vmatpush1.bf16.msra.mxu0 0
        %3280 = vmatprep.subr.bf16.mxu0 0
        %3281 = vmatpush1.bf16.msra.mxu0 0
        %3282 = vmatprep.subr.bf16.mxu0 0
        %3283 = vmatpush1.bf16.msra.mxu0 0
        %3284 = vmatprep.subr.bf16.mxu0 0
        %3285 = vmatpush1.bf16.msra.mxu0 0
        %3286 = vmatprep.subr.bf16.mxu0 0
        %3287 = vmatpush1.bf16.msra.mxu0 0
        %3288 = vmatprep.subr.bf16.mxu0 0
        %3289 = vmatpush1.bf16.msra.mxu0 0
        %3290 = vmatprep.subr.bf16.mxu0 0
        %3291 = vmatpush1.bf16.msra.mxu0 0
        %3292 = vmatprep.subr.bf16.mxu0 0
        %3293 = vmatpush1.bf16.msra.mxu0 0
        %3294 = vmatprep.subr.bf16.mxu0 0
        %3295 = vmatpush1.bf16.msra.mxu0 0
        %3296 = vmatprep.subr.bf16.mxu0 0
        %3297 = vmatpush1.bf16.msra.mxu0 0
        %3298 = vmatprep.subr.bf16.mxu0 0
        %3299 = vmatpush1.bf16.msra.mxu0 0
        %3300 = vmatprep.subr.bf16.mxu0 0
        %3301 = vmatpush1.bf16.msra.mxu0 0
        %3302 = vmatprep.subr.bf16.mxu0 0
        %3303 = vmatpush1.bf16.msra.mxu0 0
        %3304 = vmatprep.subr.bf16.mxu0 0
        %3305 = vmatpush1.bf16.msra.mxu0 0
        %3306 = vmatprep.subr.bf16.mxu0 0
        %3307 = vmatpush1.bf16.msra.mxu0 0
        %3308 = vmatprep.mubr.bf16.mxu0 0
        %3309 = vmatmul.mubr.bf16.gmra.mrb[0].mxu0 %v3226
        %v3310 = vpop.f32.mrb[0].mxu0
        %v3311 = vadd.f32 0.0, %v3310
        %v3312 = vpop.f32.mrb[0].mxu0
        %v3313 = vpop.f32.mrb[0].mxu0
        %v3314 = vadd.f32 0.0, %v3313
        %v3315 = vpop.f32.mrb[0].mxu0
        %3316 = vmatprep.mubr.bf16.mxu0 0
        %3317 = vmatmul.mubr.bf16.gmra.mrb[0].mxu0 %v3229
        %v3318 = vpop.f32.mrb[0].mxu0
        %v3319 = vadd.f32 0.0, %v3318
        %v3320 = vpop.f32.mrb[0].mxu0
        %v3321 = vpop.f32.mrb[0].mxu0
        %v3322 = vadd.f32 0.0, %v3321
        %v3323 = vpop.f32.mrb[0].mxu0
        %3324 = vmatprep.mubr.bf16.mxu0 0
        %3325 = vmatmul.mubr.bf16.gmra.mrb[0].mxu0 %v3232
        %v3326 = vpop.f32.mrb[0].mxu0
        %v3327 = vadd.f32 0.0, %v3326
        %v3328 = vpop.f32.mrb[0].mxu0
        %v3329 = vpop.f32.mrb[0].mxu0
        %v3330 = vadd.f32 0.0, %v3329
        %v3331 = vpop.f32.mrb[0].mxu0
        %3332 = vmatprep.mubr.bf16.mxu0 0
        %3333 = vmatmul.mubr.bf16.gmra.mrb[0].mxu0 %v3235
        %v3334 = vpop.f32.mrb[0].mxu0
        %v3335 = vadd.f32 0.0, %v3334
        %v3336 = vpop.f32.mrb[0].mxu0
        %v3337 = vpop.f32.mrb[0].mxu0
        %v3338 = vadd.f32 0.0, %v3337
        %v3339 = vpop.f32.mrb[0].mxu0
        %3340 = vmatprep.mubr.bf16.mxu0 0
        %3341 = vmatmul.mubr.bf16.gmra.mrb[0].mxu0 %v3238
        %v3342 = vpop.f32.mrb[0].mxu0
        %v3343 = vadd.f32 0.0, %v3342
        %v3344 = vpop.f32.mrb[0].mxu0
        %v3345 = vpop.f32.mrb[0].mxu0
        %v3346 = vadd.f32 0.0, %v3345
        %v3347 = vpop.f32.mrb[0].mxu0
        %3348 = vmatprep.mubr.bf16.mxu0 0
        %3349 = vmatmul.mubr.bf16.gmra.mrb[0].mxu0 %v3241
        %v3350 = vpop.f32.mrb[0].mxu0
        %v3351 = vadd.f32 0.0, %v3350
        %v3352 = vpop.f32.mrb[0].mxu0
        %v3353 = vpop.f32.mrb[0].mxu0
        %v3354 = vadd.f32 0.0, %v3353
        %v3355 = vpop.f32.mrb[0].mxu0
        %3356 = vmatprep.mubr.bf16.mxu0 0
        %3357 = vmatmul.mubr.bf16.gmra.mrb[0].mxu0 %v3244
        %v3358 = vpop.f32.mrb[0].mxu0
        %v3359 = vadd.f32 0.0, %v3358
        %v3360 = vpop.f32.mrb[0].mxu0
        %v3361 = vpop.f32.mrb[0].mxu0
        %v3362 = vadd.f32 0.0, %v3361
        %v3363 = vpop.f32.mrb[0].mxu0
        %3364 = vmatprep.mubr.bf16.mxu0 0
        %3365 = vmatmul.mubr.bf16.gmra.mrb[0].mxu0 %v3247
        %v3366 = vpop.f32.mrb[0].mxu0
        %v3367 = vadd.f32 0.0, %v3366
        %v3368 = vpop.f32.mrb[0].mxu0
        %v3369 = vpop.f32.mrb[0].mxu0
        %v3370 = vadd.f32 0.0, %v3369
        %v3371 = vpop.f32.mrb[0].mxu0
        %3372 = vmatprep.mubr.bf16.mxu0 0
        %3373 = vmatmul.mubr.bf16.gmra.mrb[0].mxu0 %v3250
        %v3374 = vpop.f32.mrb[0].mxu0
        %v3375 = vadd.f32 0.0, %v3374
        %v3376 = vpop.f32.mrb[0].mxu0
        %v3377 = vpop.f32.mrb[0].mxu0
        %v3378 = vadd.f32 0.0, %v3377
        %v3379 = vpop.f32.mrb[0].mxu0
        %3380 = vmatprep.mubr.bf16.mxu0 0
        %3381 = vmatmul.mubr.bf16.gmra.mrb[0].mxu0 %v3253
        %v3382 = vpop.f32.mrb[0].mxu0
        %v3383 = vadd.f32 0.0, %v3382
        %v3384 = vpop.f32.mrb[0].mxu0
        %v3385 = vpop.f32.mrb[0].mxu0
        %v3386 = vadd.f32 0.0, %v3385
        %v3387 = vpop.f32.mrb[0].mxu0
        %3388 = vmatprep.mubr.bf16.mxu0 0
        %3389 = vmatmul.mubr.bf16.gmra.mrb[0].mxu0 %v3256
        %v3390 = vpop.f32.mrb[0].mxu0
        %v3391 = vadd.f32 0.0, %v3390
        %v3392 = vpop.f32.mrb[0].mxu0
        %v3393 = vpop.f32.mrb[0].mxu0
        %v3394 = vadd.f32 0.0, %v3393
        %v3395 = vpop.f32.mrb[0].mxu0
        %3396 = vmatprep.mubr.bf16.mxu0 0
        %3397 = vmatmul.mubr.bf16.gmra.mrb[0].mxu0 %v3259
        %v3398 = vpop.f32.mrb[0].mxu0
        %v3399 = vadd.f32 0.0, %v3398
        %v3400 = vpop.f32.mrb[0].mxu0
        %v3401 = vpop.f32.mrb[0].mxu0
        %v3402 = vadd.f32 0.0, %v3401
        %v3403 = vpop.f32.mrb[0].mxu0
        %3404 = vmatprep.mubr.bf16.mxu0 0
        %3405 = vmatmul.mubr.bf16.gmra.mrb[0].mxu0 %v3262
        %v3406 = vpop.f32.mrb[0].mxu0
        %v3407 = vadd.f32 0.0, %v3406
        %v3408 = vpop.f32.mrb[0].mxu0
        %v3409 = vpop.f32.mrb[0].mxu0
        %v3410 = vadd.f32 0.0, %v3409
        %v3411 = vpop.f32.mrb[0].mxu0
        %3412 = vmatprep.mubr.bf16.mxu0 0
        %3413 = vmatmul.mubr.bf16.gmra.mrb[0].mxu0 %v3265
        %v3414 = vpop.f32.mrb[0].mxu0
        %v3415 = vadd.f32 0.0, %v3414
        %v3416 = vpop.f32.mrb[0].mxu0
        %v3417 = vpop.f32.mrb[0].mxu0
        %v3418 = vadd.f32 0.0, %v3417
        %v3419 = vpop.f32.mrb[0].mxu0
        %3420 = vmatprep.mubr.bf16.mxu0 0
        %3421 = vmatmul.mubr.bf16.gmra.mrb[0].mxu0 %v3268
        %v3422 = vpop.f32.mrb[0].mxu0
        %v3423 = vadd.f32 0.0, %v3422
        %v3424 = vpop.f32.mrb[0].mxu0
        %v3425 = vpop.f32.mrb[0].mxu0
        %v3426 = vadd.f32 0.0, %v3425
        %v3427 = vpop.f32.mrb[0].mxu0
        %3428 = vmatprep.mubr.bf16.mxu0 0
        %3429 = vmatmul.mubr.bf16.gmra.mrb[0].mxu0 %v3271
        %v3430 = vpop.f32.mrb[0].mxu0
        %v3431 = vadd.f32 0.0, %v3430
        %v3432 = vpop.f32.mrb[0].mxu0
        %v3433 = vpop.f32.mrb[0].mxu0
        %v3434 = vadd.f32 0.0, %v3433
        %v3435 = vpop.f32.mrb[0].mxu0
        %3436 = vdwg.mxu0
        %v3437 = vadd.f32 %v2655, %v3311
        %v3438 = vadd.f32 %v2656, %v3314
        %v3439 = vadd.f32 %v2657, %v3319
        %v3440 = vadd.f32 %v2658, %v3322
        %v3441 = vadd.f32 %v2659, %v3327
        %v3442 = vadd.f32 %v2660, %v3330
        %v3443 = vadd.f32 %v2661, %v3335
        %v3444 = vadd.f32 %v2662, %v3338
        %v3445 = vadd.f32 %v2663, %v3343
        %v3446 = vadd.f32 %v2664, %v3346
        %v3447 = vadd.f32 %v2665, %v3351
        %v3448 = vadd.f32 %v2666, %v3354
        %v3449 = vadd.f32 %v2667, %v3359
        %v3450 = vadd.f32 %v2668, %v3362
        %v3451 = vadd.f32 %v2669, %v3367
        %v3452 = vadd.f32 %v2670, %v3370
        %v3453 = vadd.f32 %v2671, %v3375
        %v3454 = vadd.f32 %v2672, %v3378
        %v3455 = vadd.f32 %v2673, %v3383
        %v3456 = vadd.f32 %v2674, %v3386
        %v3457 = vadd.f32 %v2675, %v3391
        %v3458 = vadd.f32 %v2676, %v3394
        %v3459 = vadd.f32 %v2677, %v3399
        %v3460 = vadd.f32 %v2678, %v3402
        %v3461 = vadd.f32 %v2679, %v3407
        %v3462 = vadd.f32 %v2680, %v3410
        %v3463 = vadd.f32 %v2681, %v3415
        %v3464 = vadd.f32 %v2682, %v3418
        %v3465 = vadd.f32 %v2683, %v3423
        %v3466 = vadd.f32 %v2684, %v3426
        %v3467 = vadd.f32 %v2685, %v3431
        %v3468 = vadd.f32 %v2686, %v3434
        %v3469 = vld [vmem:[%s5] sm:$0x1]
        %v3471 = vlaneseq
        %v3472 = vshrl.u32 %v3471, 7
        %v3473 = vsub.s32 0, %v3472
        %v3474 = vrot.slane %v3469, %v3473
        %v3476 = vmul.f32 %v3437, %v3474
        %v3477 = vmul.f32 %v3438, %v3474
        %v3478 = vmul.f32 %v3439, %v3474
        %v3479 = vmul.f32 %v3440, %v3474
        %v3480 = vmul.f32 %v3441, %v3474
        %v3481 = vmul.f32 %v3442, %v3474
        %v3482 = vmul.f32 %v3443, %v3474
        %v3483 = vmul.f32 %v3444, %v3474
        %v3484 = vmul.f32 %v3445, %v3474
        %v3485 = vmul.f32 %v3446, %v3474
        %v3486 = vmul.f32 %v3447, %v3474
        %v3487 = vmul.f32 %v3448, %v3474
        %v3488 = vmul.f32 %v3449, %v3474
        %v3489 = vmul.f32 %v3450, %v3474
        %v3490 = vmul.f32 %v3451, %v3474
        %v3491 = vmul.f32 %v3452, %v3474
        %v3492 = vmul.f32 %v3453, %v3474
        %v3493 = vmul.f32 %v3454, %v3474
        %v3494 = vmul.f32 %v3455, %v3474
        %v3495 = vmul.f32 %v3456, %v3474
        %v3496 = vmul.f32 %v3457, %v3474
        %v3497 = vmul.f32 %v3458, %v3474
        %v3498 = vmul.f32 %v3459, %v3474
        %v3499 = vmul.f32 %v3460, %v3474
        %v3500 = vmul.f32 %v3461, %v3474
        %v3501 = vmul.f32 %v3462, %v3474
        %v3502 = vmul.f32 %v3463, %v3474
        %v3503 = vmul.f32 %v3464, %v3474
        %v3504 = vmul.f32 %v3465, %v3474
        %v3505 = vmul.f32 %v3466, %v3474
        %v3506 = vmul.f32 %v3467, %v3474
        %v3507 = vmul.f32 %v3468, %v3474
        %v3508 = vld [vmem:[%s6] sm:$0x1]
        %v3510 = vlaneseq
        %v3511 = vshrl.u32 %v3510, 7
        %v3512 = vsub.s32 0, %v3511
        %v3513 = vrot.slane %v3508, %v3512
        %v3515 = vadd.f32 %v3476, %v3513
        %v3516 = vadd.f32 %v3477, %v3513
        %v3517 = vadd.f32 %v3478, %v3513
        %v3518 = vadd.f32 %v3479, %v3513
        %v3519 = vadd.f32 %v3480, %v3513
        %v3520 = vadd.f32 %v3481, %v3513
        %v3521 = vadd.f32 %v3482, %v3513
        %v3522 = vadd.f32 %v3483, %v3513
        %v3523 = vadd.f32 %v3484, %v3513
        %v3524 = vadd.f32 %v3485, %v3513
        %v3525 = vadd.f32 %v3486, %v3513
        %v3526 = vadd.f32 %v3487, %v3513
        %v3527 = vadd.f32 %v3488, %v3513
        %v3528 = vadd.f32 %v3489, %v3513
        %v3529 = vadd.f32 %v3490, %v3513
        %v3530 = vadd.f32 %v3491, %v3513
        %v3531 = vadd.f32 %v3492, %v3513
        %v3532 = vadd.f32 %v3493, %v3513
        %v3533 = vadd.f32 %v3494, %v3513
        %v3534 = vadd.f32 %v3495, %v3513
        %v3535 = vadd.f32 %v3496, %v3513
        %v3536 = vadd.f32 %v3497, %v3513
        %v3537 = vadd.f32 %v3498, %v3513
        %v3538 = vadd.f32 %v3499, %v3513
        %v3539 = vadd.f32 %v3500, %v3513
        %v3540 = vadd.f32 %v3501, %v3513
        %v3541 = vadd.f32 %v3502, %v3513
        %v3542 = vadd.f32 %v3503, %v3513
        %v3543 = vadd.f32 %v3504, %v3513
        %v3544 = vadd.f32 %v3505, %v3513
        %v3545 = vadd.f32 %v3506, %v3513
        %v3546 = vadd.f32 %v3507, %v3513
        %v3547 = vxor.u32 %v3515, 2147483648
        %v3548 = vxor.u32 %v3516, 2147483648
        %v3549 = vxor.u32 %v3517, 2147483648
        %v3550 = vxor.u32 %v3518, 2147483648
        %v3551 = vxor.u32 %v3519, 2147483648
        %v3552 = vxor.u32 %v3520, 2147483648
        %v3553 = vxor.u32 %v3521, 2147483648
        %v3554 = vxor.u32 %v3522, 2147483648
        %v3555 = vxor.u32 %v3523, 2147483648
        %v3556 = vxor.u32 %v3524, 2147483648
        %v3557 = vxor.u32 %v3525, 2147483648
        %v3558 = vxor.u32 %v3526, 2147483648
        %v3559 = vxor.u32 %v3527, 2147483648
        %v3560 = vxor.u32 %v3528, 2147483648
        %v3561 = vxor.u32 %v3529, 2147483648
        %v3562 = vxor.u32 %v3530, 2147483648
        %v3563 = vxor.u32 %v3531, 2147483648
        %v3564 = vxor.u32 %v3532, 2147483648
        %v3565 = vxor.u32 %v3533, 2147483648
        %v3566 = vxor.u32 %v3534, 2147483648
        %v3567 = vxor.u32 %v3535, 2147483648
        %v3568 = vxor.u32 %v3536, 2147483648
        %v3569 = vxor.u32 %v3537, 2147483648
        %v3570 = vxor.u32 %v3538, 2147483648
        %v3571 = vxor.u32 %v3539, 2147483648
        %v3572 = vxor.u32 %v3540, 2147483648
        %v3573 = vxor.u32 %v3541, 2147483648
        %v3574 = vxor.u32 %v3542, 2147483648
        %v3575 = vxor.u32 %v3543, 2147483648
        %v3576 = vxor.u32 %v3544, 2147483648
        %v3577 = vxor.u32 %v3545, 2147483648
        %v3578 = vxor.u32 %v3546, 2147483648
        %v3579 = vmul.f32 %v3547, 1.442695
        %v3580 = vpow.pop %v3579
        %v3581 = vmul.f32 %v3548, 1.442695
        %v3582 = vpow.pop %v3581
        %v3583 = vmul.f32 %v3549, 1.442695
        %v3584 = vpow.pop %v3583
        %v3585 = vmul.f32 %v3550, 1.442695
        %v3586 = vpow.pop %v3585
        %v3587 = vmul.f32 %v3551, 1.442695
        %v3588 = vpow.pop %v3587
        %v3589 = vmul.f32 %v3552, 1.442695
        %v3590 = vpow.pop %v3589
        %v3591 = vmul.f32 %v3553, 1.442695
        %v3592 = vpow.pop %v3591
        %v3593 = vmul.f32 %v3554, 1.442695
        %v3594 = vpow.pop %v3593
        %v3595 = vmul.f32 %v3555, 1.442695
        %v3596 = vpow.pop %v3595
        %v3597 = vmul.f32 %v3556, 1.442695
        %v3598 = vpow.pop %v3597
        %v3599 = vmul.f32 %v3557, 1.442695
        %v3600 = vpow.pop %v3599
        %v3601 = vmul.f32 %v3558, 1.442695
        %v3602 = vpow.pop %v3601
        %v3603 = vmul.f32 %v3559, 1.442695
        %v3604 = vpow.pop %v3603
        %v3605 = vmul.f32 %v3560, 1.442695
        %v3606 = vpow.pop %v3605
        %v3607 = vmul.f32 %v3561, 1.442695
        %v3608 = vpow.pop %v3607
        %v3609 = vmul.f32 %v3562, 1.442695
        %v3610 = vpow.pop %v3609
        %v3611 = vmul.f32 %v3563, 1.442695
        %v3612 = vpow.pop %v3611
        %v3613 = vmul.f32 %v3564, 1.442695
        %v3614 = vpow.pop %v3613
        %v3615 = vmul.f32 %v3565, 1.442695
        %v3616 = vpow.pop %v3615
        %v3617 = vmul.f32 %v3566, 1.442695
        %v3618 = vpow.pop %v3617
        %v3619 = vmul.f32 %v3567, 1.442695
        %v3620 = vpow.pop %v3619
        %v3621 = vmul.f32 %v3568, 1.442695
        %v3622 = vpow.pop %v3621
        %v3623 = vmul.f32 %v3569, 1.442695
        %v3624 = vpow.pop %v3623
        %v3625 = vmul.f32 %v3570, 1.442695
        %v3626 = vpow.pop %v3625
        %v3627 = vmul.f32 %v3571, 1.442695
        %v3628 = vpow.pop %v3627
        %v3629 = vmul.f32 %v3572, 1.442695
        %v3630 = vpow.pop %v3629
        %v3631 = vmul.f32 %v3573, 1.442695
        %v3632 = vpow.pop %v3631
        %v3633 = vmul.f32 %v3574, 1.442695
        %v3634 = vpow.pop %v3633
        %v3635 = vmul.f32 %v3575, 1.442695
        %v3636 = vpow.pop %v3635
        %v3637 = vmul.f32 %v3576, 1.442695
        %v3638 = vpow.pop %v3637
        %v3639 = vmul.f32 %v3577, 1.442695
        %v3640 = vpow.pop %v3639
        %v3641 = vmul.f32 %v3578, 1.442695
        %v3642 = vpow.pop %v3641
        %v3643 = vadd.f32 %v3580, 1.0
        %v3644 = vadd.f32 %v3582, 1.0
        %v3645 = vadd.f32 %v3584, 1.0
        %v3646 = vadd.f32 %v3586, 1.0
        %v3647 = vadd.f32 %v3588, 1.0
        %v3648 = vadd.f32 %v3590, 1.0
        %v3649 = vadd.f32 %v3592, 1.0
        %v3650 = vadd.f32 %v3594, 1.0
        %v3651 = vadd.f32 %v3596, 1.0
        %v3652 = vadd.f32 %v3598, 1.0
        %v3653 = vadd.f32 %v3600, 1.0
        %v3654 = vadd.f32 %v3602, 1.0
        %v3655 = vadd.f32 %v3604, 1.0
        %v3656 = vadd.f32 %v3606, 1.0
        %v3657 = vadd.f32 %v3608, 1.0
        %v3658 = vadd.f32 %v3610, 1.0
        %v3659 = vadd.f32 %v3612, 1.0
        %v3660 = vadd.f32 %v3614, 1.0
        %v3661 = vadd.f32 %v3616, 1.0
        %v3662 = vadd.f32 %v3618, 1.0
        %v3663 = vadd.f32 %v3620, 1.0
        %v3664 = vadd.f32 %v3622, 1.0
        %v3665 = vadd.f32 %v3624, 1.0
        %v3666 = vadd.f32 %v3626, 1.0
        %v3667 = vadd.f32 %v3628, 1.0
        %v3668 = vadd.f32 %v3630, 1.0
        %v3669 = vadd.f32 %v3632, 1.0
        %v3670 = vadd.f32 %v3634, 1.0
        %v3671 = vadd.f32 %v3636, 1.0
        %v3672 = vadd.f32 %v3638, 1.0
        %v3673 = vadd.f32 %v3640, 1.0
        %v3674 = vadd.f32 %v3642, 1.0
        %v3675 = vrcp.pop %v3643
        %v3676 = vmul.f32 1.0, %v3675
        %v3677 = vrcp.pop %v3644
        %v3678 = vmul.f32 1.0, %v3677
        %v3679 = vrcp.pop %v3645
        %v3680 = vmul.f32 1.0, %v3679
        %v3681 = vrcp.pop %v3646
        %v3682 = vmul.f32 1.0, %v3681
        %v3683 = vrcp.pop %v3647
        %v3684 = vmul.f32 1.0, %v3683
        %v3685 = vrcp.pop %v3648
        %v3686 = vmul.f32 1.0, %v3685
        %v3687 = vrcp.pop %v3649
        %v3688 = vmul.f32 1.0, %v3687
        %v3689 = vrcp.pop %v3650
        %v3690 = vmul.f32 1.0, %v3689
        %v3691 = vrcp.pop %v3651
        %v3692 = vmul.f32 1.0, %v3691
        %v3693 = vrcp.pop %v3652
        %v3694 = vmul.f32 1.0, %v3693
        %v3695 = vrcp.pop %v3653
        %v3696 = vmul.f32 1.0, %v3695
        %v3697 = vrcp.pop %v3654
        %v3698 = vmul.f32 1.0, %v3697
        %v3699 = vrcp.pop %v3655
        %v3700 = vmul.f32 1.0, %v3699
        %v3701 = vrcp.pop %v3656
        %v3702 = vmul.f32 1.0, %v3701
        %v3703 = vrcp.pop %v3657
        %v3704 = vmul.f32 1.0, %v3703
        %v3705 = vrcp.pop %v3658
        %v3706 = vmul.f32 1.0, %v3705
        %v3707 = vrcp.pop %v3659
        %v3708 = vmul.f32 1.0, %v3707
        %v3709 = vrcp.pop %v3660
        %v3710 = vmul.f32 1.0, %v3709
        %v3711 = vrcp.pop %v3661
        %v3712 = vmul.f32 1.0, %v3711
        %v3713 = vrcp.pop %v3662
        %v3714 = vmul.f32 1.0, %v3713
        %v3715 = vrcp.pop %v3663
        %v3716 = vmul.f32 1.0, %v3715
        %v3717 = vrcp.pop %v3664
        %v3718 = vmul.f32 1.0, %v3717
        %v3719 = vrcp.pop %v3665
        %v3720 = vmul.f32 1.0, %v3719
        %v3721 = vrcp.pop %v3666
        %v3722 = vmul.f32 1.0, %v3721
        %v3723 = vrcp.pop %v3667
        %v3724 = vmul.f32 1.0, %v3723
        %v3725 = vrcp.pop %v3668
        %v3726 = vmul.f32 1.0, %v3725
        %v3727 = vrcp.pop %v3669
        %v3728 = vmul.f32 1.0, %v3727
        %v3729 = vrcp.pop %v3670
        %v3730 = vmul.f32 1.0, %v3729
        %v3731 = vrcp.pop %v3671
        %v3732 = vmul.f32 1.0, %v3731
        %v3733 = vrcp.pop %v3672
        %v3734 = vmul.f32 1.0, %v3733
        %v3735 = vrcp.pop %v3673
        %v3736 = vmul.f32 1.0, %v3735
        %v3737 = vrcp.pop %v3674
        %v3738 = vmul.f32 1.0, %v3737
        %v3739 = vmul.f32 %v3515, %v3676
        %v3740 = vmul.f32 %v3516, %v3678
        %v3741 = vmul.f32 %v3517, %v3680
        %v3742 = vmul.f32 %v3518, %v3682
        %v3743 = vmul.f32 %v3519, %v3684
        %v3744 = vmul.f32 %v3520, %v3686
        %v3745 = vmul.f32 %v3521, %v3688
        %v3746 = vmul.f32 %v3522, %v3690
        %v3747 = vmul.f32 %v3523, %v3692
        %v3748 = vmul.f32 %v3524, %v3694
        %v3749 = vmul.f32 %v3525, %v3696
        %v3750 = vmul.f32 %v3526, %v3698
        %v3751 = vmul.f32 %v3527, %v3700
        %v3752 = vmul.f32 %v3528, %v3702
        %v3753 = vmul.f32 %v3529, %v3704
        %v3754 = vmul.f32 %v3530, %v3706
        %v3755 = vmul.f32 %v3531, %v3708
        %v3756 = vmul.f32 %v3532, %v3710
        %v3757 = vmul.f32 %v3533, %v3712
        %v3758 = vmul.f32 %v3534, %v3714
        %v3759 = vmul.f32 %v3535, %v3716
        %v3760 = vmul.f32 %v3536, %v3718
        %v3761 = vmul.f32 %v3537, %v3720
        %v3762 = vmul.f32 %v3538, %v3722
        %v3763 = vmul.f32 %v3539, %v3724
        %v3764 = vmul.f32 %v3540, %v3726
        %v3765 = vmul.f32 %v3541, %v3728
        %v3766 = vmul.f32 %v3542, %v3730
        %v3767 = vmul.f32 %v3543, %v3732
        %v3768 = vmul.f32 %v3544, %v3734
        %v3769 = vmul.f32 %v3545, %v3736
        %v3770 = vmul.f32 %v3546, %v3738
        %3771 = vst.msk [vmem:[%s296] sm:$0xff] %vm412, %v3739
        %3772 = vst.msk [vmem:[%s296 + $0x8] sm:$0xff] %vm412, %v3740
        %3773 = vst.msk [vmem:[%s296 + $0x10] sm:$0xff] %vm412, %v3741
        %3774 = vst.msk [vmem:[%s296 + $0x18] sm:$0xff] %vm412, %v3742
        %3775 = vst.msk [vmem:[%s296 + $0x20] sm:$0xff] %vm412, %v3743
        %3776 = vst.msk [vmem:[%s296 + $0x28] sm:$0xff] %vm412, %v3744
        %3777 = vst.msk [vmem:[%s296 + $0x30] sm:$0xff] %vm412, %v3745
        %3778 = vst.msk [vmem:[%s296 + $0x38] sm:$0xff] %vm412, %v3746
        %3779 = vst.msk [vmem:[%s296 + $0x40] sm:$0xff] %vm412, %v3747
        %3780 = vst.msk [vmem:[%s296 + $0x48] sm:$0xff] %vm412, %v3748
        %3781 = vst.msk [vmem:[%s296 + $0x50] sm:$0xff] %vm412, %v3749
        %3782 = vst.msk [vmem:[%s296 + $0x58] sm:$0xff] %vm412, %v3750
        %3783 = vst.msk [vmem:[%s296 + $0x60] sm:$0xff] %vm412, %v3751
        %3784 = vst.msk [vmem:[%s296 + $0x68] sm:$0xff] %vm412, %v3752
        %3785 = vst.msk [vmem:[%s296 + $0x70] sm:$0xff] %vm412, %v3753
        %3786 = vst.msk [vmem:[%s296 + $0x78] sm:$0xff] %vm412, %v3754
        %3787 = vst.msk [vmem:[%s296 + $0x80] sm:$0xff] %vm412, %v3755
        %3788 = vst.msk [vmem:[%s296 + $0x88] sm:$0xff] %vm412, %v3756
        %3789 = vst.msk [vmem:[%s296 + $0x90] sm:$0xff] %vm412, %v3757
        %3790 = vst.msk [vmem:[%s296 + $0x98] sm:$0xff] %vm412, %v3758
        %3791 = vst.msk [vmem:[%s296 + $0xa0] sm:$0xff] %vm412, %v3759
        %3792 = vst.msk [vmem:[%s296 + $0xa8] sm:$0xff] %vm412, %v3760
        %3793 = vst.msk [vmem:[%s296 + $0xb0] sm:$0xff] %vm412, %v3761
        %3794 = vst.msk [vmem:[%s296 + $0xb8] sm:$0xff] %vm412, %v3762
        %3795 = vst.msk [vmem:[%s296 + $0xc0] sm:$0xff] %vm412, %v3763
        %3796 = vst.msk [vmem:[%s296 + $0xc8] sm:$0xff] %vm412, %v3764
        %3797 = vst.msk [vmem:[%s296 + $0xd0] sm:$0xff] %vm412, %v3765
        %3798 = vst.msk [vmem:[%s296 + $0xd8] sm:$0xff] %vm412, %v3766
        %3799 = vst.msk [vmem:[%s296 + $0xe0] sm:$0xff] %vm412, %v3767
        %3800 = vst.msk [vmem:[%s296 + $0xe8] sm:$0xff] %vm412, %v3768
        %3801 = vst.msk [vmem:[%s296 + $0xf0] sm:$0xff] %vm412, %v3769
        %3802 = vst.msk [vmem:[%s296 + $0xf8] sm:$0xff] %vm412, %v3770
        %s3803 = sand.u32 %s184, 1
        %s3804 = scalar_lea.sflag [#allocation5], %s3803
        %s3805 = sand.u32 %s184, 1
        %s3806 = smul.addr %s3805, 256
        %s3807 = scalar_lea.vmem [#allocation6], %s3806
        // Predicated region
        $region53: #{tpu_custom_call.1} parent=47 // pred_check
          %p3808 = pneg %p194
        $region54: #{tpu_custom_call.1} parent=47 // pred_check_branch
          %3810 = sbr.rel (%p3808) target = $region56
        $region55: #{tpu_custom_call.1} parent=47 // pred_region
          %s3812 = ssub.s32 4096, 4096
          %3813 = vsyncadd %s3804, %s3812
          %s3814 = smul.addr %s24, 32
          %s3815 = smul.addr %s3814, 128
          %s3816 = scalar_lea.hbm %s7, %s3815
          %s3817 = sshll.u32 %s3807, 4
          %s3818 = int_to_ptr.vmem [resolvable:$true] %s3817
          %3823 = dma.vmem_to_hbm [thread:$0]  %s3818, 4096, %s3816, %s3804, 128, 128, 8
        $region56: #{tpu_custom_call.1} parent=47 // pred_fallthru
          _
      $region48: #{tpu_custom_call.1} parent=5 // pred_fallthru
        _
      %p3824 = scmp.le.s32.totalorder 2, %s19
      // Predicated region
      $region57: #{tpu_custom_call.1} parent=5 // pred_check
        %p3825 = pneg %p3824
      $region58: #{tpu_custom_call.1} parent=5 // pred_check_branch
        %3827 = sbr.rel (%p3825) target = $region60
      $region59: #{tpu_custom_call.1} parent=5 // pred_region
        %s3828 = ssub.s32 %s19, 2
        // Predicated region
        $region61: #{tpu_custom_call.1} parent=59 // pred_check
          %p3829 = pneg %p200
        $region62: #{tpu_custom_call.1} parent=59 // pred_check_branch
          %3831 = sbr.rel (%p3829) target = $region64
        $region63: #{tpu_custom_call.1} parent=59 // pred_region
          %s3832 = sand.u32 %s185, 1
          %s3833 = scalar_lea.sflag [#allocation5], %s3832
          %s3834 = sand.u32 %s185, 1
          %s3835 = smul.addr %s3834, 256
          %s3836 = scalar_lea.vmem [#allocation6], %s3835
          %3837 = dma.done %s3833, 4096
        $region64: #{tpu_custom_call.1} parent=59 // pred_fallthru
          _
      $region60: #{tpu_custom_call.1} parent=5 // pred_fallthru
        _
    $region6: #{tpu_custom_call.1} parent=1 // loop_footer
      %s23 = sadd.s32 1, %s19
    $region7: #{tpu_custom_call.1} parent=1 // loop_footer_branch
      %18 = sbr.rel target = $region3
    $region8: #{tpu_custom_call.1} parent=1 // loop_exit
      _
    %3838 = vsyncpa [#allocation4], 1
    %s3839 = scalar_lea.sflag [#allocation4], 1
    %3840 = vsyncpa %s3839, 1
    %3841 = vsyncpa [#allocation5], 1
    %s3842 = scalar_lea.sflag [#allocation5], 1
    %3843 = vsyncpa %s3842, 1

</llo_original>
